<compile_context>
chip_gen: v6e
topology: v6e:2x2x1
jax: 0.10.0
libtpu: 0.0.40
codegen_flags: <defaults>
</compile_context>

<pallas_src>
import jax
import jax.numpy as jnp
from jax.experimental import pallas as pl
from jax.experimental.pallas import tpu as pltpu

H = 768   # GRU input/hidden size
C = 8     # number of output classes (Linear(768, 8))

VMEM_LIMIT_BYTES = 48 * 1024 * 1024   # <= 64 MiB physical VMEM on v7x


# ---------------------------------------------------------------------------
# Stage 1: hoisted input-gate projection  GI = X @ W_ih^T + b_ih   (big-M matmul)
# ---------------------------------------------------------------------------
def input_proj_kernel(x_ref, w_ref, b_ref, gi_ref):
    # x_ref: (tm, H) f32, w_ref: (H, 3H) bf16, b_ref: (1, 3H) f32, gi_ref: (tm, 3H) f32
    gi_ref[...] = (
        jnp.dot(x_ref[...].astype(jnp.bfloat16), w_ref[...],
                preferred_element_type=jnp.float32)
        + b_ref[...]
    )


# ---------------------------------------------------------------------------
# Stage 2: sequential GRU recurrence; Tc timesteps per grid step
# ---------------------------------------------------------------------------
def gru_chunk_kernel(gi_ref, whh_ref, bhh_ref, h_ref, h_carry):
    """One grid step == Tc timesteps of the GRU recurrence.

    gi_ref : (Tc, B, 3H)  precomputed input-gate pre-activations (gate order r,z,n)
    whh_ref: (H, 3H)      bf16 transposed torch weight_hh_l0
    bhh_ref: (1, 3H)      torch bias_hh_l0 (f32)
    h_ref  : (Tc, B, H)   output hidden states h_t
    h_carry: (B, H)       carried GRU hidden state (VMEM scratch, persists across grid)
    """
    tc = gi_ref.shape[0]

    @pl.when(pl.program_id(0) == 0)
    def _():
        h_carry[...] = jnp.zeros_like(h_carry)

    whh = whh_ref[...]   # hoisted out of the unrolled loop
    bhh = bhh_ref[...]

    def step(i, h_prev):
        gi = gi_ref[i]                                       # (B, 3H) f32
        gh = jnp.dot(h_prev.astype(jnp.bfloat16), whh,        # MXU: bf16 in, f32 acc
                     preferred_element_type=jnp.float32) + bhh
        # PyTorch GRU cell semantics (gate order r, z, n); elementwise math in f32.
        r = jax.nn.sigmoid(gi[:, :H] + gh[:, :H])
        z = jax.nn.sigmoid(gi[:, H:2 * H] + gh[:, H:2 * H])
        n = jnp.tanh(gi[:, 2 * H:] + r * gh[:, 2 * H:])
        h_new = (1.0 - z) * n + z * h_prev
        h_ref[i] = h_new
        return h_new

    h_final = jax.lax.fori_loop(0, tc, step, h_carry[...], unroll=True)
    h_carry[...] = h_final


# ---------------------------------------------------------------------------
# Stage 3: Linear(768 -> 8) + softmax over all T*B rows at once
# ---------------------------------------------------------------------------
def fc_softmax_kernel(h_ref, w_ref, b_ref, out_ref):
    # h_ref: (tm, H) f32, w_ref: (H, C) bf16, b_ref: (1, C) f32, out_ref: (tm, C) f32
    logits = (
        jnp.dot(h_ref[...].astype(jnp.bfloat16), w_ref[...],
                preferred_element_type=jnp.float32)
        + b_ref[...]
    )
    m = jnp.max(logits, axis=-1, keepdims=True)
    e = jnp.exp(logits - m)
    inv = pl.reciprocal(jnp.sum(e, axis=-1, keepdims=True), approx=True)
    out_ref[...] = e * inv


# ---------------------------------------------------------------------------
# Wrapper
# ---------------------------------------------------------------------------
def _row_tile(m):
    """Largest convenient row tile (multiple of 8) that divides m; else one block."""
    for cand in (512, 256, 128, 64, 32, 16, 8):
        if m % cand == 0:
            return cand
    return m   # small / odd m: single full-extent block


def _time_chunk(t):
    for cand in (32, 16, 8, 4, 2, 1):
        if t % cand == 0:
            return cand
    return 1


def model_forward(hidden_states, params):
    """hidden_states: (B, T, H) float32 (the frozen BERT last_hidden_state)."""
    B, T, h = hidden_states.shape
    assert h == H

    # bf16 weights for the MXU (cast once); biases stay f32.
    w_ih = params["w_ih_t"].astype(jnp.bfloat16)
    w_hh = params["w_hh_t"].astype(jnp.bfloat16)
    w_fc = params["w_fc_t"].astype(jnp.bfloat16)

    M = T * B
    tm = _row_tile(M)
    tc = _time_chunk(T)

    x_tm = jnp.transpose(hidden_states, (1, 0, 2))        # (T, B, H) time-major
    x2d = x_tm.reshape(M, H)

    # --- Stage 1: GI = X @ W_ih^T + b_ih ------------------------------------
    gi2d = pl.pallas_call(
        input_proj_kernel,
        out_shape=jax.ShapeDtypeStruct((M, 3 * H), jnp.float32),
        grid_spec=pltpu.PrefetchScalarGridSpec(
            num_scalar_prefetch=0,
            grid=(M // tm,),
            in_specs=[
                pl.BlockSpec((tm, H), lambda i: (i, 0)),
                pl.BlockSpec((H, 3 * H), lambda i: (0, 0)),
                pl.BlockSpec((1, 3 * H), lambda i: (0, 0)),
            ],
            out_specs=pl.BlockSpec((tm, 3 * H), lambda i: (i, 0)),
        ),
        compiler_params=pltpu.CompilerParams(
            dimension_semantics=("parallel",),
            vmem_limit_bytes=VMEM_LIMIT_BYTES,
        ),
    )(x2d, w_ih, params["b_ih"])
    gi = gi2d.reshape(T, B, 3 * H)

    # --- Stage 2: GRU recurrence (time axis is sequential) ------------------
    h_all = pl.pallas_call(
        gru_chunk_kernel,
        out_shape=jax.ShapeDtypeStruct((T, B, H), jnp.float32),
        grid_spec=pltpu.PrefetchScalarGridSpec(
            num_scalar_prefetch=0,
            grid=(T // tc,),
            in_specs=[
                pl.BlockSpec((tc, B, 3 * H), lambda t: (t, 0, 0)),   # GI chunk
                pl.BlockSpec((H, 3 * H), lambda t: (0, 0)),          # W_hh^T (bf16)
                pl.BlockSpec((1, 3 * H), lambda t: (0, 0)),          # b_hh
            ],
            out_specs=pl.BlockSpec((tc, B, H), lambda t: (t, 0, 0)),
            scratch_shapes=[pltpu.VMEM((B, H), jnp.float32)],        # carried hidden state
        ),
        compiler_params=pltpu.CompilerParams(
            dimension_semantics=("arbitrary",),   # sequential recurrence over time
            vmem_limit_bytes=VMEM_LIMIT_BYTES,
        ),
    )(gi, w_hh, params["b_hh"])

    # --- Stage 3: Linear + softmax over all rows ----------------------------
    probs2d = pl.pallas_call(
        fc_softmax_kernel,
        out_shape=jax.ShapeDtypeStruct((M, C), jnp.float32),
        grid_spec=pltpu.PrefetchScalarGridSpec(
            num_scalar_prefetch=0,
            grid=(M // tm,),
            in_specs=[
                pl.BlockSpec((tm, H), lambda i: (i, 0)),
                pl.BlockSpec((H, C), lambda i: (0, 0)),
                pl.BlockSpec((1, C), lambda i: (0, 0)),
            ],
            out_specs=pl.BlockSpec((tm, C), lambda i: (i, 0)),
        ),
        compiler_params=pltpu.CompilerParams(
            dimension_semantics=("parallel",),
            vmem_limit_bytes=VMEM_LIMIT_BYTES,
        ),
    )(h_all.reshape(M, H), w_fc, params["b_fc"])

    return jnp.transpose(probs2d.reshape(T, B, C), (1, 0, 2))   # batch-first (B, T, C)


# ---------------------------------------------------------------------------
# Pure-JAX reference (PyTorch GRU/Linear/softmax semantics)
# ---------------------------------------------------------------------------
def reference_forward(hidden_states, params, matmul_dtype=jnp.float32):
    B, T, _ = hidden_states.shape
    w_ih = params["w_ih_t"].astype(matmul_dtype)
    w_hh = params["w_hh_t"].astype(matmul_dtype)
    w_fc = params["w_fc_t"].astype(matmul_dtype)

    def dot(a, b):
        return jnp.dot(a.astype(matmul_dtype), b, preferred_element_type=jnp.float32)

    def step(h, x_t):
        gi = dot(x_t, w_ih) + params["b_ih"]
        gh = dot(h, w_hh) + params["b_hh"]
        i_r, i_z, i_n = jnp.split(gi, 3, axis=-1)
        h_r, h_z, h_n = jnp.split(gh, 3, axis=-1)
        r = jax.nn.sigmoid(i_r + h_r)
        z = jax.nn.sigmoid(i_z + h_z)
        n = jnp.tanh(i_n + r * h_n)
        h_new = (1.0 - z) * n + z * h
        return h_new, h_new

    h0 = jnp.zeros((B, H), jnp.float32)
    _, hs = jax.lax.scan(step, h0, jnp.transpose(hidden_states, (1, 0, 2)))
    hs = jnp.transpose(hs, (1, 0, 2))                       # (B, T, H)
    logits = dot(hs, w_fc) + params["b_fc"]                 # (B, T, C)
    return jax.nn.softmax(logits, axis=2)


def init_params(key):
    """Deterministic PyTorch-style init: U(-1/sqrt(H), 1/sqrt(H)), stored transposed."""
    ks = jax.random.split(key, 6)
    k = 1.0 / jnp.sqrt(jnp.float32(H))
    return {
        # torch weight_ih_l0 is (3H, H); we store the transpose, gate order [r, z, n].
        "w_ih_t": jax.random.uniform(ks[0], (H, 3 * H), jnp.float32, -k, k),
        "w_hh_t": jax.random.uniform(ks[1], (H, 3 * H), jnp.float32, -k, k),
        "b_ih":   jax.random.uniform(ks[2], (1, 3 * H), jnp.float32, -k, k),
        "b_hh":   jax.random.uniform(ks[3], (1, 3 * H), jnp.float32, -k, k),
        # torch fc.weight is (8, 768); we store the transpose.
        "w_fc_t": jax.random.uniform(ks[4], (H, C), jnp.float32, -k, k),
        "b_fc":   jax.random.uniform(ks[5], (1, C), jnp.float32, -k, k),
    }


if __name__ == "__main__":
    key = jax.random.PRNGKey(0)
    k_params, k_x = jax.random.split(key)

    B, T = 2, 8   # small batch / sequence length; hidden dim fixed at 768 by the module
    params = init_params(k_params)
    # Stand-in for the frozen BERT last_hidden_state (see TODO(synk) above).
    hidden_states = jax.random.normal(k_x, (B, T, H), jnp.float32)

    out = jax.block_until_ready(model_forward(hidden_states, params))

    ref_bf16 = reference_forward(hidden_states, params, jnp.bfloat16)  # same-precision ref
    ref_f32 = reference_forward(hidden_states, params, jnp.float32)    # full-precision ref

    assert out.shape == (B, T, C), out.shape
    assert jnp.allclose(jnp.sum(out, axis=2), 1.0, atol=5e-3)
    assert jnp.allclose(out, ref_bf16, atol=3e-3), float(jnp.max(jnp.abs(out - ref_bf16)))
    assert jnp.allclose(out, ref_f32, atol=3e-2), float(jnp.max(jnp.abs(out - ref_f32)))

    print("KERNEL_OK")
</pallas_src>

<mosaic_0001>
module attributes {stable_mosaic.version = 11 : i64} {
  func.func @input_proj_kernel(%arg0: i32, %arg1: memref<16x768xf32, #tpu.memory_space<vmem>>, %arg2: memref<768x2304xbf16, #tpu.memory_space<vmem>>, %arg3: memref<1x2304xf32, #tpu.memory_space<vmem>>, %arg4: memref<16x2304xf32, #tpu.memory_space<vmem>>) attributes {dimension_semantics = [#tpu.dimension_semantics<parallel>], iteration_bounds = array<i64: 1>, scalar_prefetch = 0 : i64, scratch_operands = 0 : i64, tpu.core_type = #tpu.core_type<tc>, window_params = [{transform_indices = @transform_0, window_bounds = array<i64: 16, 768>}, {pipeline_mode = #tpu.pipeline_mode<synchronous>, transform_indices = @transform_1, window_bounds = array<i64: 768, 2304>}, {pipeline_mode = #tpu.pipeline_mode<synchronous>, transform_indices = @transform_2, window_bounds = array<i64: 1, 2304>}, {transform_indices = @transform_3, window_bounds = array<i64: 16, 2304>}]} {
    %c0 = arith.constant 0 : index
    %c0_0 = arith.constant 0 : index
    %0 = vector.load %arg1[%c0, %c0_0] : memref<16x768xf32, #tpu.memory_space<vmem>>, vector<16x768xf32>
    %1 = arith.truncf %0 : vector<16x768xf32> to vector<16x768xbf16>
    %c0_1 = arith.constant 0 : index
    %c0_2 = arith.constant 0 : index
    %2 = vector.load %arg2[%c0_1, %c0_2] : memref<768x2304xbf16, #tpu.memory_space<vmem>>, vector<768x2304xbf16>
    %cst = arith.constant dense<0.000000e+00> : vector<16x2304xf32>
    %3 = tpu.matmul %1, %2, %cst {dimension_numbers = #tpu.dot_dimension_numbers<[1], [0], [0], [1], [0, 0, 1, 1], [], []>} : vector<16x768xbf16>, vector<768x2304xbf16>, vector<16x2304xf32> -> vector<16x2304xf32>
    %c0_3 = arith.constant 0 : index
    %c0_4 = arith.constant 0 : index
    %4 = vector.load %arg3[%c0_3, %c0_4] : memref<1x2304xf32, #tpu.memory_space<vmem>>, vector<1x2304xf32>
    %5 = vector.broadcast %4 : vector<1x2304xf32> to vector<16x2304xf32>
    %6 = arith.addf %3, %5 : vector<16x2304xf32>
    %c0_5 = arith.constant 0 : index
    %c0_6 = arith.constant 0 : index
    %7 = vector.load %arg4[%c0_5, %c0_6] : memref<16x2304xf32, #tpu.memory_space<vmem>>, vector<16x2304xf32>
    tpu.vector_store %arg4[%c0_5, %c0_6], %6 {strides = array<i32>} : memref<16x2304xf32, #tpu.memory_space<vmem>>, vector<16x2304xf32>,
    return
  }
  func.func @transform_0(%arg0: i32) -> (i32, i32) {
    %c0_i32 = arith.constant 0 : i32
    %c0_i32_0 = arith.constant 0 : i32
    return %arg0, %c0_i32 : i32, i32
  }
  func.func @transform_1(%arg0: i32) -> (i32, i32) {
    %c0_i32 = arith.constant 0 : i32
    %c0_i32_0 = arith.constant 0 : i32
    %c0_i32_1 = arith.constant 0 : i32
    return %c0_i32, %c0_i32_0 : i32, i32
  }
  func.func @transform_2(%arg0: i32) -> (i32, i32) {
    %c0_i32 = arith.constant 0 : i32
    %c0_i32_0 = arith.constant 0 : i32
    %c0_i32_1 = arith.constant 0 : i32
    return %c0_i32, %c0_i32_0 : i32, i32
  }
  func.func @transform_3(%arg0: i32) -> (i32, i32) {
    %c0_i32 = arith.constant 0 : i32
    %c0_i32_0 = arith.constant 0 : i32
    return %arg0, %c0_i32 : i32, i32
  }
}

</mosaic_0001>

<llo_original>
// kernel: tpu_custom_call.1
$region0: #{tpu_custom_call.1}
  #allocation0 [shape = 'u32[]', space=smem, size = 0x4, offset = 0x4, fixed_abs, tag = 'smem constant byte address 0x4 - core index']
  #allocation1 [shape = 'u32[144,128]{1,0:T(1,128)}', space=vmem, size = 0x12000, scoped, tag = 'internal scratch']
  %s0 = inlined_call_operand.hbm [shape: f32[16,768], index: 0, kind: input, shape index: {}]
  %s1 = inlined_call_operand.hbm [shape: bf16[768,2304], index: 1, kind: input, shape index: {}]
  %s2 = inlined_call_operand.hbm [shape: f32[1,2304], index: 2, kind: input, shape index: {}]
  %s3 = inlined_call_operand.hbm [shape: f32[16,2304], index: 3, kind: output, shape index: {}]
  %s4 = sld [smem:[#allocation0]]
  $region34: #{tpu_custom_call.1} parent=0
    _
  %s6 = ssub.s32 1, %s4
  %s7 = scalar_select 0, %s6, %s4
  $region1: #{tpu_custom_call.1} parent=0
    #allocation2 [shape = 'u8[49152]{0}', space=vmem, size = 0xc000, scoped, tag = 'input window, operand 0, single buffered']
    #allocation3 [shape = 's32[1]{0}', space=sflag, size = 0x4, scoped, tag = 'scoped memory for tpu_custom_call.1']
    #allocation4 [shape = 's32[1]{0}', space=sflag, size = 0x4, scoped, tag = 'scoped memory for tpu_custom_call.1']
    #allocation5 [shape = 'u8[3538944]{0}', space=vmem, size = 0x360000, scoped, tag = 'input window, operand 1, single buffered']
    #allocation6 [shape = 's32[1]{0}', space=sflag, size = 0x4, scoped, tag = 'scoped memory for tpu_custom_call.1']
    #allocation7 [shape = 'u8[9216]{0}', space=vmem, size = 0x2400, scoped, tag = 'input window, operand 2, single buffered']
    #allocation8 [shape = 'u8[147456]{0}', space=vmem, size = 0x24000, scoped, tag = 'output window, operand 0, single buffered']
    %8 = vsyncpa [#allocation3], 0
    %9 = vsyncpa [#allocation6], 0
    %10 = vsyncpa [#allocation4], 0
    // Predicated region
    $region2: #{tpu_custom_call.1} parent=1 // pred_check
      _
    $region3: #{tpu_custom_call.1} parent=1 // pred_check_branch
      %12 = sbr.rel (0) target = $region5
    $region4: #{tpu_custom_call.1} parent=1 // pred_region
      %s14 = ssub.s32 1536, 1536
      %15 = vsyncadd [#allocation3], %s14
      %s16 = sshll.u32 [#allocation2], 4
      %s17 = int_to_ptr.vmem [resolvable:$true] %s16
      %22 = dma.hbm_to_vmem [thread:$0]  %s0, 1536, %s17, [#allocation3], 768, 768, 48
    $region5: #{tpu_custom_call.1} parent=1 // pred_fallthru
      _
    // Predicated region
    $region6: #{tpu_custom_call.1} parent=1 // pred_check
      _
    $region7: #{tpu_custom_call.1} parent=1 // pred_check_branch
      %24 = sbr.rel (0) target = $region9
    $region8: #{tpu_custom_call.1} parent=1 // pred_region
      %s26 = ssub.s32 110592, 110592
      %27 = vsyncadd [#allocation6], %s26
      %s28 = sshll.u32 [#allocation5], 4
      %s29 = int_to_ptr.vmem [resolvable:$true] %s28
      %34 = dma.hbm_to_vmem [thread:$0]  %s1, 110592, %s29, [#allocation6], 1152, 1152, 72
    $region9: #{tpu_custom_call.1} parent=1 // pred_fallthru
      _
    // Predicated region
    $region10: #{tpu_custom_call.1} parent=1 // pred_check
      _
    $region11: #{tpu_custom_call.1} parent=1 // pred_check_branch
      %36 = sbr.rel (0) target = $region13
    $region12: #{tpu_custom_call.1} parent=1 // pred_region
      %s38 = ssub.s32 288, 288
      %39 = vsyncadd [#allocation6], %s38
      %s41 = sshll.u32 [#allocation7], 4
      %s42 = int_to_ptr.vmem [resolvable:$true] %s41
      %44 = dma.hbm_to_vmem [thread:$0]  %s2, 288, %s42, [#allocation6]
    $region13: #{tpu_custom_call.1} parent=1 // pred_fallthru
      _
    // Predicated region
    $region14: #{tpu_custom_call.1} parent=1 // pred_check
      _
    $region15: #{tpu_custom_call.1} parent=1 // pred_check_branch
      %46 = sbr.rel (0) target = $region17
    $region16: #{tpu_custom_call.1} parent=1 // pred_region
      %47 = dma.done [#allocation3], 1536
    $region17: #{tpu_custom_call.1} parent=1 // pred_fallthru
      _
    // Predicated region
    $region18: #{tpu_custom_call.1} parent=1 // pred_check
      _
    $region19: #{tpu_custom_call.1} parent=1 // pred_check_branch
      %49 = sbr.rel (0) target = $region21
    $region20: #{tpu_custom_call.1} parent=1 // pred_region
      %50 = dma.done [#allocation6], 110592
    $region21: #{tpu_custom_call.1} parent=1 // pred_fallthru
      _
    // Predicated region
    $region22: #{tpu_custom_call.1} parent=1 // pred_check
      _
    $region23: #{tpu_custom_call.1} parent=1 // pred_check_branch
      %52 = sbr.rel (0) target = $region25
    $region24: #{tpu_custom_call.1} parent=1 // pred_region
      %53 = dma.done [#allocation6], 288
    $region25: #{tpu_custom_call.1} parent=1 // pred_fallthru
      _
    %v54 = vld [vmem:[#allocation2] sm:$0xff]
    %v55 = vld [vmem:[#allocation2 + $0x8] sm:$0xff]
    %v56 = vld [vmem:[#allocation2 + $0x10] sm:$0xff]
    %v57 = vld [vmem:[#allocation2 + $0x18] sm:$0xff]
    %v58 = vld [vmem:[#allocation2 + $0x20] sm:$0xff]
    %v59 = vld [vmem:[#allocation2 + $0x28] sm:$0xff]
    %v60 = vld [vmem:[#allocation2 + $0x30] sm:$0xff]
    %v61 = vld [vmem:[#allocation2 + $0x38] sm:$0xff]
    %v62 = vld [vmem:[#allocation2 + $0x40] sm:$0xff]
    %v63 = vld [vmem:[#allocation2 + $0x48] sm:$0xff]
    %v64 = vld [vmem:[#allocation2 + $0x50] sm:$0xff]
    %v65 = vld [vmem:[#allocation2 + $0x58] sm:$0xff]
    %v66 = vpack.c.bf16 %v60, %v54
    %v67 = vpack.c.bf16 %v61, %v55
    %v68 = vpack.c.bf16 %v62, %v56
    %v69 = vpack.c.bf16 %v63, %v57
    %v70 = vpack.c.bf16 %v64, %v58
    %v71 = vpack.c.bf16 %v65, %v59
    %v72 = vld [vmem:[#allocation5] sm:$0xff]
    %v73 = vld [vmem:[#allocation5 + $0x8] sm:$0xff]
    %v74 = vld [vmem:[#allocation5 + $0x10] sm:$0xff]
    %v75 = vld [vmem:[#allocation5 + $0x18] sm:$0xff]
    %v76 = vld [vmem:[#allocation5 + $0x20] sm:$0xff]
    %v77 = vld [vmem:[#allocation5 + $0x28] sm:$0xff]
    %v78 = vld [vmem:[#allocation5 + $0x30] sm:$0xff]
    %v79 = vld [vmem:[#allocation5 + $0x38] sm:$0xff]
    %v80 = vld [vmem:[#allocation5 + $0x40] sm:$0xff]
    %v81 = vld [vmem:[#allocation5 + $0x48] sm:$0xff]
    %v82 = vld [vmem:[#allocation5 + $0x50] sm:$0xff]
    %v83 = vld [vmem:[#allocation5 + $0x58] sm:$0xff]
    %v84 = vld [vmem:[#allocation5 + $0x60] sm:$0xff]
    %v85 = vld [vmem:[#allocation5 + $0x68] sm:$0xff]
    %v86 = vld [vmem:[#allocation5 + $0x70] sm:$0xff]
    %v87 = vld [vmem:[#allocation5 + $0x78] sm:$0xff]
    %v88 = vld [vmem:[#allocation5 + $0x80] sm:$0xff]
    %v89 = vld [vmem:[#allocation5 + $0x88] sm:$0xff]
    %v90 = vld [vmem:[#allocation5 + $0x90] sm:$0xff]
    %v91 = vld [vmem:[#allocation5 + $0x98] sm:$0xff]
    %v92 = vld [vmem:[#allocation5 + $0xa0] sm:$0xff]
    %v93 = vld [vmem:[#allocation5 + $0xa8] sm:$0xff]
    %v94 = vld [vmem:[#allocation5 + $0xb0] sm:$0xff]
    %v95 = vld [vmem:[#allocation5 + $0xb8] sm:$0xff]
    %v96 = vld [vmem:[#allocation5 + $0xc0] sm:$0xff]
    %v97 = vld [vmem:[#allocation5 + $0xc8] sm:$0xff]
    %v98 = vld [vmem:[#allocation5 + $0xd0] sm:$0xff]
    %v99 = vld [vmem:[#allocation5 + $0xd8] sm:$0xff]
    %v100 = vld [vmem:[#allocation5 + $0xe0] sm:$0xff]
    %v101 = vld [vmem:[#allocation5 + $0xe8] sm:$0xff]
    %v102 = vld [vmem:[#allocation5 + $0xf0] sm:$0xff]
    %v103 = vld [vmem:[#allocation5 + $0xf8] sm:$0xff]
    %v104 = vld [vmem:[#allocation5 + $0x100] sm:$0xff]
    %v105 = vld [vmem:[#allocation5 + $0x108] sm:$0xff]
    %v106 = vld [vmem:[#allocation5 + $0x110] sm:$0xff]
    %v107 = vld [vmem:[#allocation5 + $0x118] sm:$0xff]
    %v108 = vld [vmem:[#allocation5 + $0x120] sm:$0xff]
    %v109 = vld [vmem:[#allocation5 + $0x128] sm:$0xff]
    %v110 = vld [vmem:[#allocation5 + $0x130] sm:$0xff]
    %v111 = vld [vmem:[#allocation5 + $0x138] sm:$0xff]
    %v112 = vld [vmem:[#allocation5 + $0x140] sm:$0xff]
    %v113 = vld [vmem:[#allocation5 + $0x148] sm:$0xff]
    %v114 = vld [vmem:[#allocation5 + $0x150] sm:$0xff]
    %v115 = vld [vmem:[#allocation5 + $0x158] sm:$0xff]
    %v116 = vld [vmem:[#allocation5 + $0x160] sm:$0xff]
    %v117 = vld [vmem:[#allocation5 + $0x168] sm:$0xff]
    %v118 = vld [vmem:[#allocation5 + $0x170] sm:$0xff]
    %v119 = vld [vmem:[#allocation5 + $0x178] sm:$0xff]
    %v120 = vld [vmem:[#allocation5 + $0x180] sm:$0xff]
    %v121 = vld [vmem:[#allocation5 + $0x188] sm:$0xff]
    %v122 = vld [vmem:[#allocation5 + $0x190] sm:$0xff]
    %v123 = vld [vmem:[#allocation5 + $0x198] sm:$0xff]
    %v124 = vld [vmem:[#allocation5 + $0x1a0] sm:$0xff]
    %v125 = vld [vmem:[#allocation5 + $0x1a8] sm:$0xff]
    %v126 = vld [vmem:[#allocation5 + $0x1b0] sm:$0xff]
    %v127 = vld [vmem:[#allocation5 + $0x1b8] sm:$0xff]
    %v128 = vld [vmem:[#allocation5 + $0x1c0] sm:$0xff]
    %v129 = vld [vmem:[#allocation5 + $0x1c8] sm:$0xff]
    %v130 = vld [vmem:[#allocation5 + $0x1d0] sm:$0xff]
    %v131 = vld [vmem:[#allocation5 + $0x1d8] sm:$0xff]
    %v132 = vld [vmem:[#allocation5 + $0x1e0] sm:$0xff]
    %v133 = vld [vmem:[#allocation5 + $0x1e8] sm:$0xff]
    %v134 = vld [vmem:[#allocation5 + $0x1f0] sm:$0xff]
    %v135 = vld [vmem:[#allocation5 + $0x1f8] sm:$0xff]
    %v136 = vld [vmem:[#allocation5 + $0x200] sm:$0xff]
    %v137 = vld [vmem:[#allocation5 + $0x208] sm:$0xff]
    %v138 = vld [vmem:[#allocation5 + $0x210] sm:$0xff]
    %v139 = vld [vmem:[#allocation5 + $0x218] sm:$0xff]
    %v140 = vld [vmem:[#allocation5 + $0x220] sm:$0xff]
    %v141 = vld [vmem:[#allocation5 + $0x228] sm:$0xff]
    %v142 = vld [vmem:[#allocation5 + $0x230] sm:$0xff]
    %v143 = vld [vmem:[#allocation5 + $0x238] sm:$0xff]
    %v144 = vld [vmem:[#allocation5 + $0x240] sm:$0xff]
    %v145 = vld [vmem:[#allocation5 + $0x248] sm:$0xff]
    %v146 = vld [vmem:[#allocation5 + $0x250] sm:$0xff]
    %v147 = vld [vmem:[#allocation5 + $0x258] sm:$0xff]
    %v148 = vld [vmem:[#allocation5 + $0x260] sm:$0xff]
    %v149 = vld [vmem:[#allocation5 + $0x268] sm:$0xff]
    %v150 = vld [vmem:[#allocation5 + $0x270] sm:$0xff]
    %v151 = vld [vmem:[#allocation5 + $0x278] sm:$0xff]
    %v152 = vld [vmem:[#allocation5 + $0x280] sm:$0xff]
    %v153 = vld [vmem:[#allocation5 + $0x288] sm:$0xff]
    %v154 = vld [vmem:[#allocation5 + $0x290] sm:$0xff]
    %v155 = vld [vmem:[#allocation5 + $0x298] sm:$0xff]
    %v156 = vld [vmem:[#allocation5 + $0x2a0] sm:$0xff]
    %v157 = vld [vmem:[#allocation5 + $0x2a8] sm:$0xff]
    %v158 = vld [vmem:[#allocation5 + $0x2b0] sm:$0xff]
    %v159 = vld [vmem:[#allocation5 + $0x2b8] sm:$0xff]
    %v160 = vld [vmem:[#allocation5 + $0x2c0] sm:$0xff]
    %v161 = vld [vmem:[#allocation5 + $0x2c8] sm:$0xff]
    %v162 = vld [vmem:[#allocation5 + $0x2d0] sm:$0xff]
    %v163 = vld [vmem:[#allocation5 + $0x2d8] sm:$0xff]
    %v164 = vld [vmem:[#allocation5 + $0x2e0] sm:$0xff]
    %v165 = vld [vmem:[#allocation5 + $0x2e8] sm:$0xff]
    %v166 = vld [vmem:[#allocation5 + $0x2f0] sm:$0xff]
    %v167 = vld [vmem:[#allocation5 + $0x2f8] sm:$0xff]
    %v168 = vld [vmem:[#allocation5 + $0x300] sm:$0xff]
    %v169 = vld [vmem:[#allocation5 + $0x308] sm:$0xff]
    %v170 = vld [vmem:[#allocation5 + $0x310] sm:$0xff]
    %v171 = vld [vmem:[#allocation5 + $0x318] sm:$0xff]
    %v172 = vld [vmem:[#allocation5 + $0x320] sm:$0xff]
    %v173 = vld [vmem:[#allocation5 + $0x328] sm:$0xff]
    %v174 = vld [vmem:[#allocation5 + $0x330] sm:$0xff]
    %v175 = vld [vmem:[#allocation5 + $0x338] sm:$0xff]
    %v176 = vld [vmem:[#allocation5 + $0x340] sm:$0xff]
    %v177 = vld [vmem:[#allocation5 + $0x348] sm:$0xff]
    %v178 = vld [vmem:[#allocation5 + $0x350] sm:$0xff]
    %v179 = vld [vmem:[#allocation5 + $0x358] sm:$0xff]
    %v180 = vld [vmem:[#allocation5 + $0x360] sm:$0xff]
    %v181 = vld [vmem:[#allocation5 + $0x368] sm:$0xff]
    %v182 = vld [vmem:[#allocation5 + $0x370] sm:$0xff]
    %v183 = vld [vmem:[#allocation5 + $0x378] sm:$0xff]
    %v184 = vld [vmem:[#allocation5 + $0x380] sm:$0xff]
    %v185 = vld [vmem:[#allocation5 + $0x388] sm:$0xff]
    %v186 = vld [vmem:[#allocation5 + $0x390] sm:$0xff]
    %v187 = vld [vmem:[#allocation5 + $0x398] sm:$0xff]
    %v188 = vld [vmem:[#allocation5 + $0x3a0] sm:$0xff]
    %v189 = vld [vmem:[#allocation5 + $0x3a8] sm:$0xff]
    %v190 = vld [vmem:[#allocation5 + $0x3b0] sm:$0xff]
    %v191 = vld [vmem:[#allocation5 + $0x3b8] sm:$0xff]
    %v192 = vld [vmem:[#allocation5 + $0x3c0] sm:$0xff]
    %v193 = vld [vmem:[#allocation5 + $0x3c8] sm:$0xff]
    %v194 = vld [vmem:[#allocation5 + $0x3d0] sm:$0xff]
    %v195 = vld [vmem:[#allocation5 + $0x3d8] sm:$0xff]
    %v196 = vld [vmem:[#allocation5 + $0x3e0] sm:$0xff]
    %v197 = vld [vmem:[#allocation5 + $0x3e8] sm:$0xff]
    %v198 = vld [vmem:[#allocation5 + $0x3f0] sm:$0xff]
    %v199 = vld [vmem:[#allocation5 + $0x3f8] sm:$0xff]
    %v200 = vld [vmem:[#allocation5 + $0x400] sm:$0xff]
    %v201 = vld [vmem:[#allocation5 + $0x408] sm:$0xff]
    %v202 = vld [vmem:[#allocation5 + $0x410] sm:$0xff]
    %v203 = vld [vmem:[#allocation5 + $0x418] sm:$0xff]
    %v204 = vld [vmem:[#allocation5 + $0x420] sm:$0xff]
    %v205 = vld [vmem:[#allocation5 + $0x428] sm:$0xff]
    %v206 = vld [vmem:[#allocation5 + $0x430] sm:$0xff]
    %v207 = vld [vmem:[#allocation5 + $0x438] sm:$0xff]
    %v208 = vld [vmem:[#allocation5 + $0x440] sm:$0xff]
    %v209 = vld [vmem:[#allocation5 + $0x448] sm:$0xff]
    %v210 = vld [vmem:[#allocation5 + $0x450] sm:$0xff]
    %v211 = vld [vmem:[#allocation5 + $0x458] sm:$0xff]
    %v212 = vld [vmem:[#allocation5 + $0x460] sm:$0xff]
    %v213 = vld [vmem:[#allocation5 + $0x468] sm:$0xff]
    %v214 = vld [vmem:[#allocation5 + $0x470] sm:$0xff]
    %v215 = vld [vmem:[#allocation5 + $0x478] sm:$0xff]
    %v216 = vld [vmem:[#allocation5 + $0x480] sm:$0xff]
    %v217 = vld [vmem:[#allocation5 + $0x488] sm:$0xff]
    %v218 = vld [vmem:[#allocation5 + $0x490] sm:$0xff]
    %v219 = vld [vmem:[#allocation5 + $0x498] sm:$0xff]
    %v220 = vld [vmem:[#allocation5 + $0x4a0] sm:$0xff]
    %v221 = vld [vmem:[#allocation5 + $0x4a8] sm:$0xff]
    %v222 = vld [vmem:[#allocation5 + $0x4b0] sm:$0xff]
    %v223 = vld [vmem:[#allocation5 + $0x4b8] sm:$0xff]
    %v224 = vld [vmem:[#allocation5 + $0x4c0] sm:$0xff]
    %v225 = vld [vmem:[#allocation5 + $0x4c8] sm:$0xff]
    %v226 = vld [vmem:[#allocation5 + $0x4d0] sm:$0xff]
    %v227 = vld [vmem:[#allocation5 + $0x4d8] sm:$0xff]
    %v228 = vld [vmem:[#allocation5 + $0x4e0] sm:$0xff]
    %v229 = vld [vmem:[#allocation5 + $0x4e8] sm:$0xff]
    %v230 = vld [vmem:[#allocation5 + $0x4f0] sm:$0xff]
    %v231 = vld [vmem:[#allocation5 + $0x4f8] sm:$0xff]
    %v232 = vld [vmem:[#allocation5 + $0x500] sm:$0xff]
    %v233 = vld [vmem:[#allocation5 + $0x508] sm:$0xff]
    %v234 = vld [vmem:[#allocation5 + $0x510] sm:$0xff]
    %v235 = vld [vmem:[#allocation5 + $0x518] sm:$0xff]
    %v236 = vld [vmem:[#allocation5 + $0x520] sm:$0xff]
    %v237 = vld [vmem:[#allocation5 + $0x528] sm:$0xff]
    %v238 = vld [vmem:[#allocation5 + $0x530] sm:$0xff]
    %v239 = vld [vmem:[#allocation5 + $0x538] sm:$0xff]
    %v240 = vld [vmem:[#allocation5 + $0x540] sm:$0xff]
    %v241 = vld [vmem:[#allocation5 + $0x548] sm:$0xff]
    %v242 = vld [vmem:[#allocation5 + $0x550] sm:$0xff]
    %v243 = vld [vmem:[#allocation5 + $0x558] sm:$0xff]
    %v244 = vld [vmem:[#allocation5 + $0x560] sm:$0xff]
    %v245 = vld [vmem:[#allocation5 + $0x568] sm:$0xff]
    %v246 = vld [vmem:[#allocation5 + $0x570] sm:$0xff]
    %v247 = vld [vmem:[#allocation5 + $0x578] sm:$0xff]
    %v248 = vld [vmem:[#allocation5 + $0x580] sm:$0xff]
    %v249 = vld [vmem:[#allocation5 + $0x588] sm:$0xff]
    %v250 = vld [vmem:[#allocation5 + $0x590] sm:$0xff]
    %v251 = vld [vmem:[#allocation5 + $0x598] sm:$0xff]
    %v252 = vld [vmem:[#allocation5 + $0x5a0] sm:$0xff]
    %v253 = vld [vmem:[#allocation5 + $0x5a8] sm:$0xff]
    %v254 = vld [vmem:[#allocation5 + $0x5b0] sm:$0xff]
    %v255 = vld [vmem:[#allocation5 + $0x5b8] sm:$0xff]
    %v256 = vld [vmem:[#allocation5 + $0x5c0] sm:$0xff]
    %v257 = vld [vmem:[#allocation5 + $0x5c8] sm:$0xff]
    %v258 = vld [vmem:[#allocation5 + $0x5d0] sm:$0xff]
    %v259 = vld [vmem:[#allocation5 + $0x5d8] sm:$0xff]
    %v260 = vld [vmem:[#allocation5 + $0x5e0] sm:$0xff]
    %v261 = vld [vmem:[#allocation5 + $0x5e8] sm:$0xff]
    %v262 = vld [vmem:[#allocation5 + $0x5f0] sm:$0xff]
    %v263 = vld [vmem:[#allocation5 + $0x5f8] sm:$0xff]
    %v264 = vld [vmem:[#allocation5 + $0x600] sm:$0xff]
    %v265 = vld [vmem:[#allocation5 + $0x608] sm:$0xff]
    %v266 = vld [vmem:[#allocation5 + $0x610] sm:$0xff]
    %v267 = vld [vmem:[#allocation5 + $0x618] sm:$0xff]
    %v268 = vld [vmem:[#allocation5 + $0x620] sm:$0xff]
    %v269 = vld [vmem:[#allocation5 + $0x628] sm:$0xff]
    %v270 = vld [vmem:[#allocation5 + $0x630] sm:$0xff]
    %v271 = vld [vmem:[#allocation5 + $0x638] sm:$0xff]
    %v272 = vld [vmem:[#allocation5 + $0x640] sm:$0xff]
    %v273 = vld [vmem:[#allocation5 + $0x648] sm:$0xff]
    %v274 = vld [vmem:[#allocation5 + $0x650] sm:$0xff]
    %v275 = vld [vmem:[#allocation5 + $0x658] sm:$0xff]
    %v276 = vld [vmem:[#allocation5 + $0x660] sm:$0xff]
    %v277 = vld [vmem:[#allocation5 + $0x668] sm:$0xff]
    %v278 = vld [vmem:[#allocation5 + $0x670] sm:$0xff]
    %v279 = vld [vmem:[#allocation5 + $0x678] sm:$0xff]
    %v280 = vld [vmem:[#allocation5 + $0x680] sm:$0xff]
    %v281 = vld [vmem:[#allocation5 + $0x688] sm:$0xff]
    %v282 = vld [vmem:[#allocation5 + $0x690] sm:$0xff]
    %v283 = vld [vmem:[#allocation5 + $0x698] sm:$0xff]
    %v284 = vld [vmem:[#allocation5 + $0x6a0] sm:$0xff]
    %v285 = vld [vmem:[#allocation5 + $0x6a8] sm:$0xff]
    %v286 = vld [vmem:[#allocation5 + $0x6b0] sm:$0xff]
    %v287 = vld [vmem:[#allocation5 + $0x6b8] sm:$0xff]
    %v288 = vld [vmem:[#allocation5 + $0x6c0] sm:$0xff]
    %v289 = vld [vmem:[#allocation5 + $0x6c8] sm:$0xff]
    %v290 = vld [vmem:[#allocation5 + $0x6d0] sm:$0xff]
    %v291 = vld [vmem:[#allocation5 + $0x6d8] sm:$0xff]
    %v292 = vld [vmem:[#allocation5 + $0x6e0] sm:$0xff]
    %v293 = vld [vmem:[#allocation5 + $0x6e8] sm:$0xff]
    %v294 = vld [vmem:[#allocation5 + $0x6f0] sm:$0xff]
    %v295 = vld [vmem:[#allocation5 + $0x6f8] sm:$0xff]
    %v296 = vld [vmem:[#allocation5 + $0x700] sm:$0xff]
    %v297 = vld [vmem:[#allocation5 + $0x708] sm:$0xff]
    %v298 = vld [vmem:[#allocation5 + $0x710] sm:$0xff]
    %v299 = vld [vmem:[#allocation5 + $0x718] sm:$0xff]
    %v300 = vld [vmem:[#allocation5 + $0x720] sm:$0xff]
    %v301 = vld [vmem:[#allocation5 + $0x728] sm:$0xff]
    %v302 = vld [vmem:[#allocation5 + $0x730] sm:$0xff]
    %v303 = vld [vmem:[#allocation5 + $0x738] sm:$0xff]
    %v304 = vld [vmem:[#allocation5 + $0x740] sm:$0xff]
    %v305 = vld [vmem:[#allocation5 + $0x748] sm:$0xff]
    %v306 = vld [vmem:[#allocation5 + $0x750] sm:$0xff]
    %v307 = vld [vmem:[#allocation5 + $0x758] sm:$0xff]
    %v308 = vld [vmem:[#allocation5 + $0x760] sm:$0xff]
    %v309 = vld [vmem:[#allocation5 + $0x768] sm:$0xff]
    %v310 = vld [vmem:[#allocation5 + $0x770] sm:$0xff]
    %v311 = vld [vmem:[#allocation5 + $0x778] sm:$0xff]
    %v312 = vld [vmem:[#allocation5 + $0x780] sm:$0xff]
    %v313 = vld [vmem:[#allocation5 + $0x788] sm:$0xff]
    %v314 = vld [vmem:[#allocation5 + $0x790] sm:$0xff]
    %v315 = vld [vmem:[#allocation5 + $0x798] sm:$0xff]
    %v316 = vld [vmem:[#allocation5 + $0x7a0] sm:$0xff]
    %v317 = vld [vmem:[#allocation5 + $0x7a8] sm:$0xff]
    %v318 = vld [vmem:[#allocation5 + $0x7b0] sm:$0xff]
    %v319 = vld [vmem:[#allocation5 + $0x7b8] sm:$0xff]
    %v320 = vld [vmem:[#allocation5 + $0x7c0] sm:$0xff]
    %v321 = vld [vmem:[#allocation5 + $0x7c8] sm:$0xff]
    %v322 = vld [vmem:[#allocation5 + $0x7d0] sm:$0xff]
    %v323 = vld [vmem:[#allocation5 + $0x7d8] sm:$0xff]
    %v324 = vld [vmem:[#allocation5 + $0x7e0] sm:$0xff]
    %v325 = vld [vmem:[#allocation5 + $0x7e8] sm:$0xff]
    %v326 = vld [vmem:[#allocation5 + $0x7f0] sm:$0xff]
    %v327 = vld [vmem:[#allocation5 + $0x7f8] sm:$0xff]
    %v328 = vld [vmem:[#allocation5 + $0x800] sm:$0xff]
    %v329 = vld [vmem:[#allocation5 + $0x808] sm:$0xff]
    %v330 = vld [vmem:[#allocation5 + $0x810] sm:$0xff]
    %v331 = vld [vmem:[#allocation5 + $0x818] sm:$0xff]
    %v332 = vld [vmem:[#allocation5 + $0x820] sm:$0xff]
    %v333 = vld [vmem:[#allocation5 + $0x828] sm:$0xff]
    %v334 = vld [vmem:[#allocation5 + $0x830] sm:$0xff]
    %v335 = vld [vmem:[#allocation5 + $0x838] sm:$0xff]
    %v336 = vld [vmem:[#allocation5 + $0x840] sm:$0xff]
    %v337 = vld [vmem:[#allocation5 + $0x848] sm:$0xff]
    %v338 = vld [vmem:[#allocation5 + $0x850] sm:$0xff]
    %v339 = vld [vmem:[#allocation5 + $0x858] sm:$0xff]
    %v340 = vld [vmem:[#allocation5 + $0x860] sm:$0xff]
    %v341 = vld [vmem:[#allocation5 + $0x868] sm:$0xff]
    %v342 = vld [vmem:[#allocation5 + $0x870] sm:$0xff]
    %v343 = vld [vmem:[#allocation5 + $0x878] sm:$0xff]
    %v344 = vld [vmem:[#allocation5 + $0x880] sm:$0xff]
    %v345 = vld [vmem:[#allocation5 + $0x888] sm:$0xff]
    %v346 = vld [vmem:[#allocation5 + $0x890] sm:$0xff]
    %v347 = vld [vmem:[#allocation5 + $0x898] sm:$0xff]
    %v348 = vld [vmem:[#allocation5 + $0x8a0] sm:$0xff]
    %v349 = vld [vmem:[#allocation5 + $0x8a8] sm:$0xff]
    %v350 = vld [vmem:[#allocation5 + $0x8b0] sm:$0xff]
    %v351 = vld [vmem:[#allocation5 + $0x8b8] sm:$0xff]
    %v352 = vld [vmem:[#allocation5 + $0x8c0] sm:$0xff]
    %v353 = vld [vmem:[#allocation5 + $0x8c8] sm:$0xff]
    %v354 = vld [vmem:[#allocation5 + $0x8d0] sm:$0xff]
    %v355 = vld [vmem:[#allocation5 + $0x8d8] sm:$0xff]
    %v356 = vld [vmem:[#allocation5 + $0x8e0] sm:$0xff]
    %v357 = vld [vmem:[#allocation5 + $0x8e8] sm:$0xff]
    %v358 = vld [vmem:[#allocation5 + $0x8f0] sm:$0xff]
    %v359 = vld [vmem:[#allocation5 + $0x8f8] sm:$0xff]
    %v360 = vld [vmem:[#allocation5 + $0x900] sm:$0xff]
    %v361 = vld [vmem:[#allocation5 + $0x908] sm:$0xff]
    %v362 = vld [vmem:[#allocation5 + $0x910] sm:$0xff]
    %v363 = vld [vmem:[#allocation5 + $0x918] sm:$0xff]
    %v364 = vld [vmem:[#allocation5 + $0x920] sm:$0xff]
    %v365 = vld [vmem:[#allocation5 + $0x928] sm:$0xff]
    %v366 = vld [vmem:[#allocation5 + $0x930] sm:$0xff]
    %v367 = vld [vmem:[#allocation5 + $0x938] sm:$0xff]
    %v368 = vld [vmem:[#allocation5 + $0x940] sm:$0xff]
    %v369 = vld [vmem:[#allocation5 + $0x948] sm:$0xff]
    %v370 = vld [vmem:[#allocation5 + $0x950] sm:$0xff]
    %v371 = vld [vmem:[#allocation5 + $0x958] sm:$0xff]
    %v372 = vld [vmem:[#allocation5 + $0x960] sm:$0xff]
    %v373 = vld [vmem:[#allocation5 + $0x968] sm:$0xff]
    %v374 = vld [vmem:[#allocation5 + $0x970] sm:$0xff]
    %v375 = vld [vmem:[#allocation5 + $0x978] sm:$0xff]
    %v376 = vld [vmem:[#allocation5 + $0x980] sm:$0xff]
    %v377 = vld [vmem:[#allocation5 + $0x988] sm:$0xff]
    %v378 = vld [vmem:[#allocation5 + $0x990] sm:$0xff]
    %v379 = vld [vmem:[#allocation5 + $0x998] sm:$0xff]
    %v380 = vld [vmem:[#allocation5 + $0x9a0] sm:$0xff]
    %v381 = vld [vmem:[#allocation5 + $0x9a8] sm:$0xff]
    %v382 = vld [vmem:[#allocation5 + $0x9b0] sm:$0xff]
    %v383 = vld [vmem:[#allocation5 + $0x9b8] sm:$0xff]
    %v384 = vld [vmem:[#allocation5 + $0x9c0] sm:$0xff]
    %v385 = vld [vmem:[#allocation5 + $0x9c8] sm:$0xff]
    %v386 = vld [vmem:[#allocation5 + $0x9d0] sm:$0xff]
    %v387 = vld [vmem:[#allocation5 + $0x9d8] sm:$0xff]
    %v388 = vld [vmem:[#allocation5 + $0x9e0] sm:$0xff]
    %v389 = vld [vmem:[#allocation5 + $0x9e8] sm:$0xff]
    %v390 = vld [vmem:[#allocation5 + $0x9f0] sm:$0xff]
    %v391 = vld [vmem:[#allocation5 + $0x9f8] sm:$0xff]
    %v392 = vld [vmem:[#allocation5 + $0xa00] sm:$0xff]
    %v393 = vld [vmem:[#allocation5 + $0xa08] sm:$0xff]
    %v394 = vld [vmem:[#allocation5 + $0xa10] sm:$0xff]
    %v395 = vld [vmem:[#allocation5 + $0xa18] sm:$0xff]
    %v396 = vld [vmem:[#allocation5 + $0xa20] sm:$0xff]
    %v397 = vld [vmem:[#allocation5 + $0xa28] sm:$0xff]
    %v398 = vld [vmem:[#allocation5 + $0xa30] sm:$0xff]
    %v399 = vld [vmem:[#allocation5 + $0xa38] sm:$0xff]
    %v400 = vld [vmem:[#allocation5 + $0xa40] sm:$0xff]
    %v401 = vld [vmem:[#allocation5 + $0xa48] sm:$0xff]
    %v402 = vld [vmem:[#allocation5 + $0xa50] sm:$0xff]
    %v403 = vld [vmem:[#allocation5 + $0xa58] sm:$0xff]
    %v404 = vld [vmem:[#allocation5 + $0xa60] sm:$0xff]
    %v405 = vld [vmem:[#allocation5 + $0xa68] sm:$0xff]
    %v406 = vld [vmem:[#allocation5 + $0xa70] sm:$0xff]
    %v407 = vld [vmem:[#allocation5 + $0xa78] sm:$0xff]
    %v408 = vld [vmem:[#allocation5 + $0xa80] sm:$0xff]
    %v409 = vld [vmem:[#allocation5 + $0xa88] sm:$0xff]
    %v410 = vld [vmem:[#allocation5 + $0xa90] sm:$0xff]
    %v411 = vld [vmem:[#allocation5 + $0xa98] sm:$0xff]
    %v412 = vld [vmem:[#allocation5 + $0xaa0] sm:$0xff]
    %v413 = vld [vmem:[#allocation5 + $0xaa8] sm:$0xff]
    %v414 = vld [vmem:[#allocation5 + $0xab0] sm:$0xff]
    %v415 = vld [vmem:[#allocation5 + $0xab8] sm:$0xff]
    %v416 = vld [vmem:[#allocation5 + $0xac0] sm:$0xff]
    %v417 = vld [vmem:[#allocation5 + $0xac8] sm:$0xff]
    %v418 = vld [vmem:[#allocation5 + $0xad0] sm:$0xff]
    %v419 = vld [vmem:[#allocation5 + $0xad8] sm:$0xff]
    %v420 = vld [vmem:[#allocation5 + $0xae0] sm:$0xff]
    %v421 = vld [vmem:[#allocation5 + $0xae8] sm:$0xff]
    %v422 = vld [vmem:[#allocation5 + $0xaf0] sm:$0xff]
    %v423 = vld [vmem:[#allocation5 + $0xaf8] sm:$0xff]
    %v424 = vld [vmem:[#allocation5 + $0xb00] sm:$0xff]
    %v425 = vld [vmem:[#allocation5 + $0xb08] sm:$0xff]
    %v426 = vld [vmem:[#allocation5 + $0xb10] sm:$0xff]
    %v427 = vld [vmem:[#allocation5 + $0xb18] sm:$0xff]
    %v428 = vld [vmem:[#allocation5 + $0xb20] sm:$0xff]
    %v429 = vld [vmem:[#allocation5 + $0xb28] sm:$0xff]
    %v430 = vld [vmem:[#allocation5 + $0xb30] sm:$0xff]
    %v431 = vld [vmem:[#allocation5 + $0xb38] sm:$0xff]
    %v432 = vld [vmem:[#allocation5 + $0xb40] sm:$0xff]
    %v433 = vld [vmem:[#allocation5 + $0xb48] sm:$0xff]
    %v434 = vld [vmem:[#allocation5 + $0xb50] sm:$0xff]
    %v435 = vld [vmem:[#allocation5 + $0xb58] sm:$0xff]
    %v436 = vld [vmem:[#allocation5 + $0xb60] sm:$0xff]
    %v437 = vld [vmem:[#allocation5 + $0xb68] sm:$0xff]
    %v438 = vld [vmem:[#allocation5 + $0xb70] sm:$0xff]
    %v439 = vld [vmem:[#allocation5 + $0xb78] sm:$0xff]
    %v440 = vld [vmem:[#allocation5 + $0xb80] sm:$0xff]
    %v441 = vld [vmem:[#allocation5 + $0xb88] sm:$0xff]
    %v442 = vld [vmem:[#allocation5 + $0xb90] sm:$0xff]
    %v443 = vld [vmem:[#allocation5 + $0xb98] sm:$0xff]
    %v444 = vld [vmem:[#allocation5 + $0xba0] sm:$0xff]
    %v445 = vld [vmem:[#allocation5 + $0xba8] sm:$0xff]
    %v446 = vld [vmem:[#allocation5 + $0xbb0] sm:$0xff]
    %v447 = vld [vmem:[#allocation5 + $0xbb8] sm:$0xff]
    %v448 = vld [vmem:[#allocation5 + $0xbc0] sm:$0xff]
    %v449 = vld [vmem:[#allocation5 + $0xbc8] sm:$0xff]
    %v450 = vld [vmem:[#allocation5 + $0xbd0] sm:$0xff]
    %v451 = vld [vmem:[#allocation5 + $0xbd8] sm:$0xff]
    %v452 = vld [vmem:[#allocation5 + $0xbe0] sm:$0xff]
    %v453 = vld [vmem:[#allocation5 + $0xbe8] sm:$0xff]
    %v454 = vld [vmem:[#allocation5 + $0xbf0] sm:$0xff]
    %v455 = vld [vmem:[#allocation5 + $0xbf8] sm:$0xff]
    %v456 = vld [vmem:[#allocation5 + $0xc00] sm:$0xff]
    %v457 = vld [vmem:[#allocation5 + $0xc08] sm:$0xff]
    %v458 = vld [vmem:[#allocation5 + $0xc10] sm:$0xff]
    %v459 = vld [vmem:[#allocation5 + $0xc18] sm:$0xff]
    %v460 = vld [vmem:[#allocation5 + $0xc20] sm:$0xff]
    %v461 = vld [vmem:[#allocation5 + $0xc28] sm:$0xff]
    %v462 = vld [vmem:[#allocation5 + $0xc30] sm:$0xff]
    %v463 = vld [vmem:[#allocation5 + $0xc38] sm:$0xff]
    %v464 = vld [vmem:[#allocation5 + $0xc40] sm:$0xff]
    %v465 = vld [vmem:[#allocation5 + $0xc48] sm:$0xff]
    %v466 = vld [vmem:[#allocation5 + $0xc50] sm:$0xff]
    %v467 = vld [vmem:[#allocation5 + $0xc58] sm:$0xff]
    %v468 = vld [vmem:[#allocation5 + $0xc60] sm:$0xff]
    %v469 = vld [vmem:[#allocation5 + $0xc68] sm:$0xff]
    %v470 = vld [vmem:[#allocation5 + $0xc70] sm:$0xff]
    %v471 = vld [vmem:[#allocation5 + $0xc78] sm:$0xff]
    %v472 = vld [vmem:[#allocation5 + $0xc80] sm:$0xff]
    %v473 = vld [vmem:[#allocation5 + $0xc88] sm:$0xff]
    %v474 = vld [vmem:[#allocation5 + $0xc90] sm:$0xff]
    %v475 = vld [vmem:[#allocation5 + $0xc98] sm:$0xff]
    %v476 = vld [vmem:[#allocation5 + $0xca0] sm:$0xff]
    %v477 = vld [vmem:[#allocation5 + $0xca8] sm:$0xff]
    %v478 = vld [vmem:[#allocation5 + $0xcb0] sm:$0xff]
    %v479 = vld [vmem:[#allocation5 + $0xcb8] sm:$0xff]
    %v480 = vld [vmem:[#allocation5 + $0xcc0] sm:$0xff]
    %v481 = vld [vmem:[#allocation5 + $0xcc8] sm:$0xff]
    %v482 = vld [vmem:[#allocation5 + $0xcd0] sm:$0xff]
    %v483 = vld [vmem:[#allocation5 + $0xcd8] sm:$0xff]
    %v484 = vld [vmem:[#allocation5 + $0xce0] sm:$0xff]
    %v485 = vld [vmem:[#allocation5 + $0xce8] sm:$0xff]
    %v486 = vld [vmem:[#allocation5 + $0xcf0] sm:$0xff]
    %v487 = vld [vmem:[#allocation5 + $0xcf8] sm:$0xff]
    %v488 = vld [vmem:[#allocation5 + $0xd00] sm:$0xff]
    %v489 = vld [vmem:[#allocation5 + $0xd08] sm:$0xff]
    %v490 = vld [vmem:[#allocation5 + $0xd10] sm:$0xff]
    %v491 = vld [vmem:[#allocation5 + $0xd18] sm:$0xff]
    %v492 = vld [vmem:[#allocation5 + $0xd20] sm:$0xff]
    %v493 = vld [vmem:[#allocation5 + $0xd28] sm:$0xff]
    %v494 = vld [vmem:[#allocation5 + $0xd30] sm:$0xff]
    %v495 = vld [vmem:[#allocation5 + $0xd38] sm:$0xff]
    %v496 = vld [vmem:[#allocation5 + $0xd40] sm:$0xff]
    %v497 = vld [vmem:[#allocation5 + $0xd48] sm:$0xff]
    %v498 = vld [vmem:[#allocation5 + $0xd50] sm:$0xff]
    %v499 = vld [vmem:[#allocation5 + $0xd58] sm:$0xff]
    %v500 = vld [vmem:[#allocation5 + $0xd60] sm:$0xff]
    %v501 = vld [vmem:[#allocation5 + $0xd68] sm:$0xff]
    %v502 = vld [vmem:[#allocation5 + $0xd70] sm:$0xff]
    %v503 = vld [vmem:[#allocation5 + $0xd78] sm:$0xff]
    %v504 = vld [vmem:[#allocation5 + $0xd80] sm:$0xff]
    %v505 = vld [vmem:[#allocation5 + $0xd88] sm:$0xff]
    %v506 = vld [vmem:[#allocation5 + $0xd90] sm:$0xff]
    %v507 = vld [vmem:[#allocation5 + $0xd98] sm:$0xff]
    %v508 = vld [vmem:[#allocation5 + $0xda0] sm:$0xff]
    %v509 = vld [vmem:[#allocation5 + $0xda8] sm:$0xff]
    %v510 = vld [vmem:[#allocation5 + $0xdb0] sm:$0xff]
    %v511 = vld [vmem:[#allocation5 + $0xdb8] sm:$0xff]
    %v512 = vld [vmem:[#allocation5 + $0xdc0] sm:$0xff]
    %v513 = vld [vmem:[#allocation5 + $0xdc8] sm:$0xff]
    %v514 = vld [vmem:[#allocation5 + $0xdd0] sm:$0xff]
    %v515 = vld [vmem:[#allocation5 + $0xdd8] sm:$0xff]
    %v516 = vld [vmem:[#allocation5 + $0xde0] sm:$0xff]
    %v517 = vld [vmem:[#allocation5 + $0xde8] sm:$0xff]
    %v518 = vld [vmem:[#allocation5 + $0xdf0] sm:$0xff]
    %v519 = vld [vmem:[#allocation5 + $0xdf8] sm:$0xff]
    %v520 = vld [vmem:[#allocation5 + $0xe00] sm:$0xff]
    %v521 = vld [vmem:[#allocation5 + $0xe08] sm:$0xff]
    %v522 = vld [vmem:[#allocation5 + $0xe10] sm:$0xff]
    %v523 = vld [vmem:[#allocation5 + $0xe18] sm:$0xff]
    %v524 = vld [vmem:[#allocation5 + $0xe20] sm:$0xff]
    %v525 = vld [vmem:[#allocation5 + $0xe28] sm:$0xff]
    %v526 = vld [vmem:[#allocation5 + $0xe30] sm:$0xff]
    %v527 = vld [vmem:[#allocation5 + $0xe38] sm:$0xff]
    %v528 = vld [vmem:[#allocation5 + $0xe40] sm:$0xff]
    %v529 = vld [vmem:[#allocation5 + $0xe48] sm:$0xff]
    %v530 = vld [vmem:[#allocation5 + $0xe50] sm:$0xff]
    %v531 = vld [vmem:[#allocation5 + $0xe58] sm:$0xff]
    %v532 = vld [vmem:[#allocation5 + $0xe60] sm:$0xff]
    %v533 = vld [vmem:[#allocation5 + $0xe68] sm:$0xff]
    %v534 = vld [vmem:[#allocation5 + $0xe70] sm:$0xff]
    %v535 = vld [vmem:[#allocation5 + $0xe78] sm:$0xff]
    %v536 = vld [vmem:[#allocation5 + $0xe80] sm:$0xff]
    %v537 = vld [vmem:[#allocation5 + $0xe88] sm:$0xff]
    %v538 = vld [vmem:[#allocation5 + $0xe90] sm:$0xff]
    %v539 = vld [vmem:[#allocation5 + $0xe98] sm:$0xff]
    %v540 = vld [vmem:[#allocation5 + $0xea0] sm:$0xff]
    %v541 = vld [vmem:[#allocation5 + $0xea8] sm:$0xff]
    %v542 = vld [vmem:[#allocation5 + $0xeb0] sm:$0xff]
    %v543 = vld [vmem:[#allocation5 + $0xeb8] sm:$0xff]
    %v544 = vld [vmem:[#allocation5 + $0xec0] sm:$0xff]
    %v545 = vld [vmem:[#allocation5 + $0xec8] sm:$0xff]
    %v546 = vld [vmem:[#allocation5 + $0xed0] sm:$0xff]
    %v547 = vld [vmem:[#allocation5 + $0xed8] sm:$0xff]
    %v548 = vld [vmem:[#allocation5 + $0xee0] sm:$0xff]
    %v549 = vld [vmem:[#allocation5 + $0xee8] sm:$0xff]
    %v550 = vld [vmem:[#allocation5 + $0xef0] sm:$0xff]
    %v551 = vld [vmem:[#allocation5 + $0xef8] sm:$0xff]
    %v552 = vld [vmem:[#allocation5 + $0xf00] sm:$0xff]
    %v553 = vld [vmem:[#allocation5 + $0xf08] sm:$0xff]
    %v554 = vld [vmem:[#allocation5 + $0xf10] sm:$0xff]
    %v555 = vld [vmem:[#allocation5 + $0xf18] sm:$0xff]
    %v556 = vld [vmem:[#allocation5 + $0xf20] sm:$0xff]
    %v557 = vld [vmem:[#allocation5 + $0xf28] sm:$0xff]
    %v558 = vld [vmem:[#allocation5 + $0xf30] sm:$0xff]
    %v559 = vld [vmem:[#allocation5 + $0xf38] sm:$0xff]
    %v560 = vld [vmem:[#allocation5 + $0xf40] sm:$0xff]
    %v561 = vld [vmem:[#allocation5 + $0xf48] sm:$0xff]
    %v562 = vld [vmem:[#allocation5 + $0xf50] sm:$0xff]
    %v563 = vld [vmem:[#allocation5 + $0xf58] sm:$0xff]
    %v564 = vld [vmem:[#allocation5 + $0xf60] sm:$0xff]
    %v565 = vld [vmem:[#allocation5 + $0xf68] sm:$0xff]
    %v566 = vld [vmem:[#allocation5 + $0xf70] sm:$0xff]
    %v567 = vld [vmem:[#allocation5 + $0xf78] sm:$0xff]
    %v568 = vld [vmem:[#allocation5 + $0xf80] sm:$0xff]
    %v569 = vld [vmem:[#allocation5 + $0xf88] sm:$0xff]
    %v570 = vld [vmem:[#allocation5 + $0xf90] sm:$0xff]
    %v571 = vld [vmem:[#allocation5 + $0xf98] sm:$0xff]
    %v572 = vld [vmem:[#allocation5 + $0xfa0] sm:$0xff]
    %v573 = vld [vmem:[#allocation5 + $0xfa8] sm:$0xff]
    %v574 = vld [vmem:[#allocation5 + $0xfb0] sm:$0xff]
    %v575 = vld [vmem:[#allocation5 + $0xfb8] sm:$0xff]
    %v576 = vld [vmem:[#allocation5 + $0xfc0] sm:$0xff]
    %v577 = vld [vmem:[#allocation5 + $0xfc8] sm:$0xff]
    %v578 = vld [vmem:[#allocation5 + $0xfd0] sm:$0xff]
    %v579 = vld [vmem:[#allocation5 + $0xfd8] sm:$0xff]
    %v580 = vld [vmem:[#allocation5 + $0xfe0] sm:$0xff]
    %v581 = vld [vmem:[#allocation5 + $0xfe8] sm:$0xff]
    %v582 = vld [vmem:[#allocation5 + $0xff0] sm:$0xff]
    %v583 = vld [vmem:[#allocation5 + $0xff8] sm:$0xff]
    %v584 = vld [vmem:[#allocation5 + $0x1000] sm:$0xff]
    %v585 = vld [vmem:[#allocation5 + $0x1008] sm:$0xff]
    %v586 = vld [vmem:[#allocation5 + $0x1010] sm:$0xff]
    %v587 = vld [vmem:[#allocation5 + $0x1018] sm:$0xff]
    %v588 = vld [vmem:[#allocation5 + $0x1020] sm:$0xff]
    %v589 = vld [vmem:[#allocation5 + $0x1028] sm:$0xff]
    %v590 = vld [vmem:[#allocation5 + $0x1030] sm:$0xff]
    %v591 = vld [vmem:[#allocation5 + $0x1038] sm:$0xff]
    %v592 = vld [vmem:[#allocation5 + $0x1040] sm:$0xff]
    %v593 = vld [vmem:[#allocation5 + $0x1048] sm:$0xff]
    %v594 = vld [vmem:[#allocation5 + $0x1050] sm:$0xff]
    %v595 = vld [vmem:[#allocation5 + $0x1058] sm:$0xff]
    %v596 = vld [vmem:[#allocation5 + $0x1060] sm:$0xff]
    %v597 = vld [vmem:[#allocation5 + $0x1068] sm:$0xff]
    %v598 = vld [vmem:[#allocation5 + $0x1070] sm:$0xff]
    %v599 = vld [vmem:[#allocation5 + $0x1078] sm:$0xff]
    %v600 = vld [vmem:[#allocation5 + $0x1080] sm:$0xff]
    %v601 = vld [vmem:[#allocation5 + $0x1088] sm:$0xff]
    %v602 = vld [vmem:[#allocation5 + $0x1090] sm:$0xff]
    %v603 = vld [vmem:[#allocation5 + $0x1098] sm:$0xff]
    %v604 = vld [vmem:[#allocation5 + $0x10a0] sm:$0xff]
    %v605 = vld [vmem:[#allocation5 + $0x10a8] sm:$0xff]
    %v606 = vld [vmem:[#allocation5 + $0x10b0] sm:$0xff]
    %v607 = vld [vmem:[#allocation5 + $0x10b8] sm:$0xff]
    %v608 = vld [vmem:[#allocation5 + $0x10c0] sm:$0xff]
    %v609 = vld [vmem:[#allocation5 + $0x10c8] sm:$0xff]
    %v610 = vld [vmem:[#allocation5 + $0x10d0] sm:$0xff]
    %v611 = vld [vmem:[#allocation5 + $0x10d8] sm:$0xff]
    %v612 = vld [vmem:[#allocation5 + $0x10e0] sm:$0xff]
    %v613 = vld [vmem:[#allocation5 + $0x10e8] sm:$0xff]
    %v614 = vld [vmem:[#allocation5 + $0x10f0] sm:$0xff]
    %v615 = vld [vmem:[#allocation5 + $0x10f8] sm:$0xff]
    %v616 = vld [vmem:[#allocation5 + $0x1100] sm:$0xff]
    %v617 = vld [vmem:[#allocation5 + $0x1108] sm:$0xff]
    %v618 = vld [vmem:[#allocation5 + $0x1110] sm:$0xff]
    %v619 = vld [vmem:[#allocation5 + $0x1118] sm:$0xff]
    %v620 = vld [vmem:[#allocation5 + $0x1120] sm:$0xff]
    %v621 = vld [vmem:[#allocation5 + $0x1128] sm:$0xff]
    %v622 = vld [vmem:[#allocation5 + $0x1130] sm:$0xff]
    %v623 = vld [vmem:[#allocation5 + $0x1138] sm:$0xff]
    %v624 = vld [vmem:[#allocation5 + $0x1140] sm:$0xff]
    %v625 = vld [vmem:[#allocation5 + $0x1148] sm:$0xff]
    %v626 = vld [vmem:[#allocation5 + $0x1150] sm:$0xff]
    %v627 = vld [vmem:[#allocation5 + $0x1158] sm:$0xff]
    %v628 = vld [vmem:[#allocation5 + $0x1160] sm:$0xff]
    %v629 = vld [vmem:[#allocation5 + $0x1168] sm:$0xff]
    %v630 = vld [vmem:[#allocation5 + $0x1170] sm:$0xff]
    %v631 = vld [vmem:[#allocation5 + $0x1178] sm:$0xff]
    %v632 = vld [vmem:[#allocation5 + $0x1180] sm:$0xff]
    %v633 = vld [vmem:[#allocation5 + $0x1188] sm:$0xff]
    %v634 = vld [vmem:[#allocation5 + $0x1190] sm:$0xff]
    %v635 = vld [vmem:[#allocation5 + $0x1198] sm:$0xff]
    %v636 = vld [vmem:[#allocation5 + $0x11a0] sm:$0xff]
    %v637 = vld [vmem:[#allocation5 + $0x11a8] sm:$0xff]
    %v638 = vld [vmem:[#allocation5 + $0x11b0] sm:$0xff]
    %v639 = vld [vmem:[#allocation5 + $0x11b8] sm:$0xff]
    %v640 = vld [vmem:[#allocation5 + $0x11c0] sm:$0xff]
    %v641 = vld [vmem:[#allocation5 + $0x11c8] sm:$0xff]
    %v642 = vld [vmem:[#allocation5 + $0x11d0] sm:$0xff]
    %v643 = vld [vmem:[#allocation5 + $0x11d8] sm:$0xff]
    %v644 = vld [vmem:[#allocation5 + $0x11e0] sm:$0xff]
    %v645 = vld [vmem:[#allocation5 + $0x11e8] sm:$0xff]
    %v646 = vld [vmem:[#allocation5 + $0x11f0] sm:$0xff]
    %v647 = vld [vmem:[#allocation5 + $0x11f8] sm:$0xff]
    %v648 = vld [vmem:[#allocation5 + $0x1200] sm:$0xff]
    %v649 = vld [vmem:[#allocation5 + $0x1208] sm:$0xff]
    %v650 = vld [vmem:[#allocation5 + $0x1210] sm:$0xff]
    %v651 = vld [vmem:[#allocation5 + $0x1218] sm:$0xff]
    %v652 = vld [vmem:[#allocation5 + $0x1220] sm:$0xff]
    %v653 = vld [vmem:[#allocation5 + $0x1228] sm:$0xff]
    %v654 = vld [vmem:[#allocation5 + $0x1230] sm:$0xff]
    %v655 = vld [vmem:[#allocation5 + $0x1238] sm:$0xff]
    %v656 = vld [vmem:[#allocation5 + $0x1240] sm:$0xff]
    %v657 = vld [vmem:[#allocation5 + $0x1248] sm:$0xff]
    %v658 = vld [vmem:[#allocation5 + $0x1250] sm:$0xff]
    %v659 = vld [vmem:[#allocation5 + $0x1258] sm:$0xff]
    %v660 = vld [vmem:[#allocation5 + $0x1260] sm:$0xff]
    %v661 = vld [vmem:[#allocation5 + $0x1268] sm:$0xff]
    %v662 = vld [vmem:[#allocation5 + $0x1270] sm:$0xff]
    %v663 = vld [vmem:[#allocation5 + $0x1278] sm:$0xff]
    %v664 = vld [vmem:[#allocation5 + $0x1280] sm:$0xff]
    %v665 = vld [vmem:[#allocation5 + $0x1288] sm:$0xff]
    %v666 = vld [vmem:[#allocation5 + $0x1290] sm:$0xff]
    %v667 = vld [vmem:[#allocation5 + $0x1298] sm:$0xff]
    %v668 = vld [vmem:[#allocation5 + $0x12a0] sm:$0xff]
    %v669 = vld [vmem:[#allocation5 + $0x12a8] sm:$0xff]
    %v670 = vld [vmem:[#allocation5 + $0x12b0] sm:$0xff]
    %v671 = vld [vmem:[#allocation5 + $0x12b8] sm:$0xff]
    %v672 = vld [vmem:[#allocation5 + $0x12c0] sm:$0xff]
    %v673 = vld [vmem:[#allocation5 + $0x12c8] sm:$0xff]
    %v674 = vld [vmem:[#allocation5 + $0x12d0] sm:$0xff]
    %v675 = vld [vmem:[#allocation5 + $0x12d8] sm:$0xff]
    %v676 = vld [vmem:[#allocation5 + $0x12e0] sm:$0xff]
    %v677 = vld [vmem:[#allocation5 + $0x12e8] sm:$0xff]
    %v678 = vld [vmem:[#allocation5 + $0x12f0] sm:$0xff]
    %v679 = vld [vmem:[#allocation5 + $0x12f8] sm:$0xff]
    %v680 = vld [vmem:[#allocation5 + $0x1300] sm:$0xff]
    %v681 = vld [vmem:[#allocation5 + $0x1308] sm:$0xff]
    %v682 = vld [vmem:[#allocation5 + $0x1310] sm:$0xff]
    %v683 = vld [vmem:[#allocation5 + $0x1318] sm:$0xff]
    %v684 = vld [vmem:[#allocation5 + $0x1320] sm:$0xff]
    %v685 = vld [vmem:[#allocation5 + $0x1328] sm:$0xff]
    %v686 = vld [vmem:[#allocation5 + $0x1330] sm:$0xff]
    %v687 = vld [vmem:[#allocation5 + $0x1338] sm:$0xff]
    %v688 = vld [vmem:[#allocation5 + $0x1340] sm:$0xff]
    %v689 = vld [vmem:[#allocation5 + $0x1348] sm:$0xff]
    %v690 = vld [vmem:[#allocation5 + $0x1350] sm:$0xff]
    %v691 = vld [vmem:[#allocation5 + $0x1358] sm:$0xff]
    %v692 = vld [vmem:[#allocation5 + $0x1360] sm:$0xff]
    %v693 = vld [vmem:[#allocation5 + $0x1368] sm:$0xff]
    %v694 = vld [vmem:[#allocation5 + $0x1370] sm:$0xff]
    %v695 = vld [vmem:[#allocation5 + $0x1378] sm:$0xff]
    %v696 = vld [vmem:[#allocation5 + $0x1380] sm:$0xff]
    %v697 = vld [vmem:[#allocation5 + $0x1388] sm:$0xff]
    %v698 = vld [vmem:[#allocation5 + $0x1390] sm:$0xff]
    %v699 = vld [vmem:[#allocation5 + $0x1398] sm:$0xff]
    %v700 = vld [vmem:[#allocation5 + $0x13a0] sm:$0xff]
    %v701 = vld [vmem:[#allocation5 + $0x13a8] sm:$0xff]
    %v702 = vld [vmem:[#allocation5 + $0x13b0] sm:$0xff]
    %v703 = vld [vmem:[#allocation5 + $0x13b8] sm:$0xff]
    %v704 = vld [vmem:[#allocation5 + $0x13c0] sm:$0xff]
    %v705 = vld [vmem:[#allocation5 + $0x13c8] sm:$0xff]
    %v706 = vld [vmem:[#allocation5 + $0x13d0] sm:$0xff]
    %v707 = vld [vmem:[#allocation5 + $0x13d8] sm:$0xff]
    %v708 = vld [vmem:[#allocation5 + $0x13e0] sm:$0xff]
    %v709 = vld [vmem:[#allocation5 + $0x13e8] sm:$0xff]
    %v710 = vld [vmem:[#allocation5 + $0x13f0] sm:$0xff]
    %v711 = vld [vmem:[#allocation5 + $0x13f8] sm:$0xff]
    %v712 = vld [vmem:[#allocation5 + $0x1400] sm:$0xff]
    %v713 = vld [vmem:[#allocation5 + $0x1408] sm:$0xff]
    %v714 = vld [vmem:[#allocation5 + $0x1410] sm:$0xff]
    %v715 = vld [vmem:[#allocation5 + $0x1418] sm:$0xff]
    %v716 = vld [vmem:[#allocation5 + $0x1420] sm:$0xff]
    %v717 = vld [vmem:[#allocation5 + $0x1428] sm:$0xff]
    %v718 = vld [vmem:[#allocation5 + $0x1430] sm:$0xff]
    %v719 = vld [vmem:[#allocation5 + $0x1438] sm:$0xff]
    %v720 = vld [vmem:[#allocation5 + $0x1440] sm:$0xff]
    %v721 = vld [vmem:[#allocation5 + $0x1448] sm:$0xff]
    %v722 = vld [vmem:[#allocation5 + $0x1450] sm:$0xff]
    %v723 = vld [vmem:[#allocation5 + $0x1458] sm:$0xff]
    %v724 = vld [vmem:[#allocation5 + $0x1460] sm:$0xff]
    %v725 = vld [vmem:[#allocation5 + $0x1468] sm:$0xff]
    %v726 = vld [vmem:[#allocation5 + $0x1470] sm:$0xff]
    %v727 = vld [vmem:[#allocation5 + $0x1478] sm:$0xff]
    %v728 = vld [vmem:[#allocation5 + $0x1480] sm:$0xff]
    %v729 = vld [vmem:[#allocation5 + $0x1488] sm:$0xff]
    %v730 = vld [vmem:[#allocation5 + $0x1490] sm:$0xff]
    %v731 = vld [vmem:[#allocation5 + $0x1498] sm:$0xff]
    %v732 = vld [vmem:[#allocation5 + $0x14a0] sm:$0xff]
    %v733 = vld [vmem:[#allocation5 + $0x14a8] sm:$0xff]
    %v734 = vld [vmem:[#allocation5 + $0x14b0] sm:$0xff]
    %v735 = vld [vmem:[#allocation5 + $0x14b8] sm:$0xff]
    %v736 = vld [vmem:[#allocation5 + $0x14c0] sm:$0xff]
    %v737 = vld [vmem:[#allocation5 + $0x14c8] sm:$0xff]
    %v738 = vld [vmem:[#allocation5 + $0x14d0] sm:$0xff]
    %v739 = vld [vmem:[#allocation5 + $0x14d8] sm:$0xff]
    %v740 = vld [vmem:[#allocation5 + $0x14e0] sm:$0xff]
    %v741 = vld [vmem:[#allocation5 + $0x14e8] sm:$0xff]
    %v742 = vld [vmem:[#allocation5 + $0x14f0] sm:$0xff]
    %v743 = vld [vmem:[#allocation5 + $0x14f8] sm:$0xff]
    %v744 = vld [vmem:[#allocation5 + $0x1500] sm:$0xff]
    %v745 = vld [vmem:[#allocation5 + $0x1508] sm:$0xff]
    %v746 = vld [vmem:[#allocation5 + $0x1510] sm:$0xff]
    %v747 = vld [vmem:[#allocation5 + $0x1518] sm:$0xff]
    %v748 = vld [vmem:[#allocation5 + $0x1520] sm:$0xff]
    %v749 = vld [vmem:[#allocation5 + $0x1528] sm:$0xff]
    %v750 = vld [vmem:[#allocation5 + $0x1530] sm:$0xff]
    %v751 = vld [vmem:[#allocation5 + $0x1538] sm:$0xff]
    %v752 = vld [vmem:[#allocation5 + $0x1540] sm:$0xff]
    %v753 = vld [vmem:[#allocation5 + $0x1548] sm:$0xff]
    %v754 = vld [vmem:[#allocation5 + $0x1550] sm:$0xff]
    %v755 = vld [vmem:[#allocation5 + $0x1558] sm:$0xff]
    %v756 = vld [vmem:[#allocation5 + $0x1560] sm:$0xff]
    %v757 = vld [vmem:[#allocation5 + $0x1568] sm:$0xff]
    %v758 = vld [vmem:[#allocation5 + $0x1570] sm:$0xff]
    %v759 = vld [vmem:[#allocation5 + $0x1578] sm:$0xff]
    %v760 = vld [vmem:[#allocation5 + $0x1580] sm:$0xff]
    %v761 = vld [vmem:[#allocation5 + $0x1588] sm:$0xff]
    %v762 = vld [vmem:[#allocation5 + $0x1590] sm:$0xff]
    %v763 = vld [vmem:[#allocation5 + $0x1598] sm:$0xff]
    %v764 = vld [vmem:[#allocation5 + $0x15a0] sm:$0xff]
    %v765 = vld [vmem:[#allocation5 + $0x15a8] sm:$0xff]
    %v766 = vld [vmem:[#allocation5 + $0x15b0] sm:$0xff]
    %v767 = vld [vmem:[#allocation5 + $0x15b8] sm:$0xff]
    %v768 = vld [vmem:[#allocation5 + $0x15c0] sm:$0xff]
    %v769 = vld [vmem:[#allocation5 + $0x15c8] sm:$0xff]
    %v770 = vld [vmem:[#allocation5 + $0x15d0] sm:$0xff]
    %v771 = vld [vmem:[#allocation5 + $0x15d8] sm:$0xff]
    %v772 = vld [vmem:[#allocation5 + $0x15e0] sm:$0xff]
    %v773 = vld [vmem:[#allocation5 + $0x15e8] sm:$0xff]
    %v774 = vld [vmem:[#allocation5 + $0x15f0] sm:$0xff]
    %v775 = vld [vmem:[#allocation5 + $0x15f8] sm:$0xff]
    %v776 = vld [vmem:[#allocation5 + $0x1600] sm:$0xff]
    %v777 = vld [vmem:[#allocation5 + $0x1608] sm:$0xff]
    %v778 = vld [vmem:[#allocation5 + $0x1610] sm:$0xff]
    %v779 = vld [vmem:[#allocation5 + $0x1618] sm:$0xff]
    %v780 = vld [vmem:[#allocation5 + $0x1620] sm:$0xff]
    %v781 = vld [vmem:[#allocation5 + $0x1628] sm:$0xff]
    %v782 = vld [vmem:[#allocation5 + $0x1630] sm:$0xff]
    %v783 = vld [vmem:[#allocation5 + $0x1638] sm:$0xff]
    %v784 = vld [vmem:[#allocation5 + $0x1640] sm:$0xff]
    %v785 = vld [vmem:[#allocation5 + $0x1648] sm:$0xff]
    %v786 = vld [vmem:[#allocation5 + $0x1650] sm:$0xff]
    %v787 = vld [vmem:[#allocation5 + $0x1658] sm:$0xff]
    %v788 = vld [vmem:[#allocation5 + $0x1660] sm:$0xff]
    %v789 = vld [vmem:[#allocation5 + $0x1668] sm:$0xff]
    %v790 = vld [vmem:[#allocation5 + $0x1670] sm:$0xff]
    %v791 = vld [vmem:[#allocation5 + $0x1678] sm:$0xff]
    %v792 = vld [vmem:[#allocation5 + $0x1680] sm:$0xff]
    %v793 = vld [vmem:[#allocation5 + $0x1688] sm:$0xff]
    %v794 = vld [vmem:[#allocation5 + $0x1690] sm:$0xff]
    %v795 = vld [vmem:[#allocation5 + $0x1698] sm:$0xff]
    %v796 = vld [vmem:[#allocation5 + $0x16a0] sm:$0xff]
    %v797 = vld [vmem:[#allocation5 + $0x16a8] sm:$0xff]
    %v798 = vld [vmem:[#allocation5 + $0x16b0] sm:$0xff]
    %v799 = vld [vmem:[#allocation5 + $0x16b8] sm:$0xff]
    %v800 = vld [vmem:[#allocation5 + $0x16c0] sm:$0xff]
    %v801 = vld [vmem:[#allocation5 + $0x16c8] sm:$0xff]
    %v802 = vld [vmem:[#allocation5 + $0x16d0] sm:$0xff]
    %v803 = vld [vmem:[#allocation5 + $0x16d8] sm:$0xff]
    %v804 = vld [vmem:[#allocation5 + $0x16e0] sm:$0xff]
    %v805 = vld [vmem:[#allocation5 + $0x16e8] sm:$0xff]
    %v806 = vld [vmem:[#allocation5 + $0x16f0] sm:$0xff]
    %v807 = vld [vmem:[#allocation5 + $0x16f8] sm:$0xff]
    %v808 = vld [vmem:[#allocation5 + $0x1700] sm:$0xff]
    %v809 = vld [vmem:[#allocation5 + $0x1708] sm:$0xff]
    %v810 = vld [vmem:[#allocation5 + $0x1710] sm:$0xff]
    %v811 = vld [vmem:[#allocation5 + $0x1718] sm:$0xff]
    %v812 = vld [vmem:[#allocation5 + $0x1720] sm:$0xff]
    %v813 = vld [vmem:[#allocation5 + $0x1728] sm:$0xff]
    %v814 = vld [vmem:[#allocation5 + $0x1730] sm:$0xff]
    %v815 = vld [vmem:[#allocation5 + $0x1738] sm:$0xff]
    %v816 = vld [vmem:[#allocation5 + $0x1740] sm:$0xff]
    %v817 = vld [vmem:[#allocation5 + $0x1748] sm:$0xff]
    %v818 = vld [vmem:[#allocation5 + $0x1750] sm:$0xff]
    %v819 = vld [vmem:[#allocation5 + $0x1758] sm:$0xff]
    %v820 = vld [vmem:[#allocation5 + $0x1760] sm:$0xff]
    %v821 = vld [vmem:[#allocation5 + $0x1768] sm:$0xff]
    %v822 = vld [vmem:[#allocation5 + $0x1770] sm:$0xff]
    %v823 = vld [vmem:[#allocation5 + $0x1778] sm:$0xff]
    %v824 = vld [vmem:[#allocation5 + $0x1780] sm:$0xff]
    %v825 = vld [vmem:[#allocation5 + $0x1788] sm:$0xff]
    %v826 = vld [vmem:[#allocation5 + $0x1790] sm:$0xff]
    %v827 = vld [vmem:[#allocation5 + $0x1798] sm:$0xff]
    %v828 = vld [vmem:[#allocation5 + $0x17a0] sm:$0xff]
    %v829 = vld [vmem:[#allocation5 + $0x17a8] sm:$0xff]
    %v830 = vld [vmem:[#allocation5 + $0x17b0] sm:$0xff]
    %v831 = vld [vmem:[#allocation5 + $0x17b8] sm:$0xff]
    %v832 = vld [vmem:[#allocation5 + $0x17c0] sm:$0xff]
    %v833 = vld [vmem:[#allocation5 + $0x17c8] sm:$0xff]
    %v834 = vld [vmem:[#allocation5 + $0x17d0] sm:$0xff]
    %v835 = vld [vmem:[#allocation5 + $0x17d8] sm:$0xff]
    %v836 = vld [vmem:[#allocation5 + $0x17e0] sm:$0xff]
    %v837 = vld [vmem:[#allocation5 + $0x17e8] sm:$0xff]
    %v838 = vld [vmem:[#allocation5 + $0x17f0] sm:$0xff]
    %v839 = vld [vmem:[#allocation5 + $0x17f8] sm:$0xff]
    %v840 = vld [vmem:[#allocation5 + $0x1800] sm:$0xff]
    %v841 = vld [vmem:[#allocation5 + $0x1808] sm:$0xff]
    %v842 = vld [vmem:[#allocation5 + $0x1810] sm:$0xff]
    %v843 = vld [vmem:[#allocation5 + $0x1818] sm:$0xff]
    %v844 = vld [vmem:[#allocation5 + $0x1820] sm:$0xff]
    %v845 = vld [vmem:[#allocation5 + $0x1828] sm:$0xff]
    %v846 = vld [vmem:[#allocation5 + $0x1830] sm:$0xff]
    %v847 = vld [vmem:[#allocation5 + $0x1838] sm:$0xff]
    %v848 = vld [vmem:[#allocation5 + $0x1840] sm:$0xff]
    %v849 = vld [vmem:[#allocation5 + $0x1848] sm:$0xff]
    %v850 = vld [vmem:[#allocation5 + $0x1850] sm:$0xff]
    %v851 = vld [vmem:[#allocation5 + $0x1858] sm:$0xff]
    %v852 = vld [vmem:[#allocation5 + $0x1860] sm:$0xff]
    %v853 = vld [vmem:[#allocation5 + $0x1868] sm:$0xff]
    %v854 = vld [vmem:[#allocation5 + $0x1870] sm:$0xff]
    %v855 = vld [vmem:[#allocation5 + $0x1878] sm:$0xff]
    %v856 = vld [vmem:[#allocation5 + $0x1880] sm:$0xff]
    %v857 = vld [vmem:[#allocation5 + $0x1888] sm:$0xff]
    %v858 = vld [vmem:[#allocation5 + $0x1890] sm:$0xff]
    %v859 = vld [vmem:[#allocation5 + $0x1898] sm:$0xff]
    %v860 = vld [vmem:[#allocation5 + $0x18a0] sm:$0xff]
    %v861 = vld [vmem:[#allocation5 + $0x18a8] sm:$0xff]
    %v862 = vld [vmem:[#allocation5 + $0x18b0] sm:$0xff]
    %v863 = vld [vmem:[#allocation5 + $0x18b8] sm:$0xff]
    %v864 = vld [vmem:[#allocation5 + $0x18c0] sm:$0xff]
    %v865 = vld [vmem:[#allocation5 + $0x18c8] sm:$0xff]
    %v866 = vld [vmem:[#allocation5 + $0x18d0] sm:$0xff]
    %v867 = vld [vmem:[#allocation5 + $0x18d8] sm:$0xff]
    %v868 = vld [vmem:[#allocation5 + $0x18e0] sm:$0xff]
    %v869 = vld [vmem:[#allocation5 + $0x18e8] sm:$0xff]
    %v870 = vld [vmem:[#allocation5 + $0x18f0] sm:$0xff]
    %v871 = vld [vmem:[#allocation5 + $0x18f8] sm:$0xff]
    %v872 = vld [vmem:[#allocation5 + $0x1900] sm:$0xff]
    %v873 = vld [vmem:[#allocation5 + $0x1908] sm:$0xff]
    %v874 = vld [vmem:[#allocation5 + $0x1910] sm:$0xff]
    %v875 = vld [vmem:[#allocation5 + $0x1918] sm:$0xff]
    %v876 = vld [vmem:[#allocation5 + $0x1920] sm:$0xff]
    %v877 = vld [vmem:[#allocation5 + $0x1928] sm:$0xff]
    %v878 = vld [vmem:[#allocation5 + $0x1930] sm:$0xff]
    %v879 = vld [vmem:[#allocation5 + $0x1938] sm:$0xff]
    %v880 = vld [vmem:[#allocation5 + $0x1940] sm:$0xff]
    %v881 = vld [vmem:[#allocation5 + $0x1948] sm:$0xff]
    %v882 = vld [vmem:[#allocation5 + $0x1950] sm:$0xff]
    %v883 = vld [vmem:[#allocation5 + $0x1958] sm:$0xff]
    %v884 = vld [vmem:[#allocation5 + $0x1960] sm:$0xff]
    %v885 = vld [vmem:[#allocation5 + $0x1968] sm:$0xff]
    %v886 = vld [vmem:[#allocation5 + $0x1970] sm:$0xff]
    %v887 = vld [vmem:[#allocation5 + $0x1978] sm:$0xff]
    %v888 = vld [vmem:[#allocation5 + $0x1980] sm:$0xff]
    %v889 = vld [vmem:[#allocation5 + $0x1988] sm:$0xff]
    %v890 = vld [vmem:[#allocation5 + $0x1990] sm:$0xff]
    %v891 = vld [vmem:[#allocation5 + $0x1998] sm:$0xff]
    %v892 = vld [vmem:[#allocation5 + $0x19a0] sm:$0xff]
    %v893 = vld [vmem:[#allocation5 + $0x19a8] sm:$0xff]
    %v894 = vld [vmem:[#allocation5 + $0x19b0] sm:$0xff]
    %v895 = vld [vmem:[#allocation5 + $0x19b8] sm:$0xff]
    %v896 = vld [vmem:[#allocation5 + $0x19c0] sm:$0xff]
    %v897 = vld [vmem:[#allocation5 + $0x19c8] sm:$0xff]
    %v898 = vld [vmem:[#allocation5 + $0x19d0] sm:$0xff]
    %v899 = vld [vmem:[#allocation5 + $0x19d8] sm:$0xff]
    %v900 = vld [vmem:[#allocation5 + $0x19e0] sm:$0xff]
    %v901 = vld [vmem:[#allocation5 + $0x19e8] sm:$0xff]
    %v902 = vld [vmem:[#allocation5 + $0x19f0] sm:$0xff]
    %v903 = vld [vmem:[#allocation5 + $0x19f8] sm:$0xff]
    %v904 = vld [vmem:[#allocation5 + $0x1a00] sm:$0xff]
    %v905 = vld [vmem:[#allocation5 + $0x1a08] sm:$0xff]
    %v906 = vld [vmem:[#allocation5 + $0x1a10] sm:$0xff]
    %v907 = vld [vmem:[#allocation5 + $0x1a18] sm:$0xff]
    %v908 = vld [vmem:[#allocation5 + $0x1a20] sm:$0xff]
    %v909 = vld [vmem:[#allocation5 + $0x1a28] sm:$0xff]
    %v910 = vld [vmem:[#allocation5 + $0x1a30] sm:$0xff]
    %v911 = vld [vmem:[#allocation5 + $0x1a38] sm:$0xff]
    %v912 = vld [vmem:[#allocation5 + $0x1a40] sm:$0xff]
    %v913 = vld [vmem:[#allocation5 + $0x1a48] sm:$0xff]
    %v914 = vld [vmem:[#allocation5 + $0x1a50] sm:$0xff]
    %v915 = vld [vmem:[#allocation5 + $0x1a58] sm:$0xff]
    %v916 = vld [vmem:[#allocation5 + $0x1a60] sm:$0xff]
    %v917 = vld [vmem:[#allocation5 + $0x1a68] sm:$0xff]
    %v918 = vld [vmem:[#allocation5 + $0x1a70] sm:$0xff]
    %v919 = vld [vmem:[#allocation5 + $0x1a78] sm:$0xff]
    %v920 = vld [vmem:[#allocation5 + $0x1a80] sm:$0xff]
    %v921 = vld [vmem:[#allocation5 + $0x1a88] sm:$0xff]
    %v922 = vld [vmem:[#allocation5 + $0x1a90] sm:$0xff]
    %v923 = vld [vmem:[#allocation5 + $0x1a98] sm:$0xff]
    %v924 = vld [vmem:[#allocation5 + $0x1aa0] sm:$0xff]
    %v925 = vld [vmem:[#allocation5 + $0x1aa8] sm:$0xff]
    %v926 = vld [vmem:[#allocation5 + $0x1ab0] sm:$0xff]
    %v927 = vld [vmem:[#allocation5 + $0x1ab8] sm:$0xff]
    %v928 = vld [vmem:[#allocation5 + $0x1ac0] sm:$0xff]
    %v929 = vld [vmem:[#allocation5 + $0x1ac8] sm:$0xff]
    %v930 = vld [vmem:[#allocation5 + $0x1ad0] sm:$0xff]
    %v931 = vld [vmem:[#allocation5 + $0x1ad8] sm:$0xff]
    %v932 = vld [vmem:[#allocation5 + $0x1ae0] sm:$0xff]
    %v933 = vld [vmem:[#allocation5 + $0x1ae8] sm:$0xff]
    %v934 = vld [vmem:[#allocation5 + $0x1af0] sm:$0xff]
    %v935 = vld [vmem:[#allocation5 + $0x1af8] sm:$0xff]
    %v936 = vld [vmem:[#allocation7] sm:$0xff]
    %v937 = vld [vmem:[#allocation7 + $0x8] sm:$0xff]
    %v938 = vld [vmem:[#allocation7 + $0x10] sm:$0x3]
    %v942 = vlaneseq
    %v943 = vshrl.u32 %v942, 7
    %v944 = vsub.s32 0, %v943
    %v945 = vrot.slane %v936, %v944
    %v946 = vlaneseq
    %v947 = vshrl.u32 %v946, 7
    %v948 = vsub.s32 1, %v947
    %v949 = vrot.slane %v936, %v948
    %v950 = vlaneseq
    %v951 = vshrl.u32 %v950, 7
    %v952 = vsub.s32 2, %v951
    %v953 = vrot.slane %v936, %v952
    %v954 = vlaneseq
    %v955 = vshrl.u32 %v954, 7
    %v956 = vsub.s32 3, %v955
    %v957 = vrot.slane %v936, %v956
    %v958 = vlaneseq
    %v959 = vshrl.u32 %v958, 7
    %v960 = vsub.s32 4, %v959
    %v961 = vrot.slane %v936, %v960
    %v962 = vlaneseq
    %v963 = vshrl.u32 %v962, 7
    %v964 = vsub.s32 5, %v963
    %v965 = vrot.slane %v936, %v964
    %v966 = vlaneseq
    %v967 = vshrl.u32 %v966, 7
    %v968 = vsub.s32 6, %v967
    %v969 = vrot.slane %v936, %v968
    %v970 = vlaneseq
    %v971 = vshrl.u32 %v970, 7
    %v972 = vsub.s32 7, %v971
    %v973 = vrot.slane %v936, %v972
    %v974 = vlaneseq
    %v975 = vshrl.u32 %v974, 7
    %v976 = vsub.s32 0, %v975
    %v977 = vrot.slane %v937, %v976
    %v978 = vlaneseq
    %v979 = vshrl.u32 %v978, 7
    %v980 = vsub.s32 1, %v979
    %v981 = vrot.slane %v937, %v980
    %v982 = vlaneseq
    %v983 = vshrl.u32 %v982, 7
    %v984 = vsub.s32 2, %v983
    %v985 = vrot.slane %v937, %v984
    %v986 = vlaneseq
    %v987 = vshrl.u32 %v986, 7
    %v988 = vsub.s32 3, %v987
    %v989 = vrot.slane %v937, %v988
    %v990 = vlaneseq
    %v991 = vshrl.u32 %v990, 7
    %v992 = vsub.s32 4, %v991
    %v993 = vrot.slane %v937, %v992
    %v994 = vlaneseq
    %v995 = vshrl.u32 %v994, 7
    %v996 = vsub.s32 5, %v995
    %v997 = vrot.slane %v937, %v996
    %v998 = vlaneseq
    %v999 = vshrl.u32 %v998, 7
    %v1000 = vsub.s32 6, %v999
    %v1001 = vrot.slane %v937, %v1000
    %v1002 = vlaneseq
    %v1003 = vshrl.u32 %v1002, 7
    %v1004 = vsub.s32 7, %v1003
    %v1005 = vrot.slane %v937, %v1004
    %v1006 = vlaneseq
    %v1007 = vshrl.u32 %v1006, 7
    %v1008 = vsub.s32 0, %v1007
    %v1009 = vrot.slane %v938, %v1008
    %v1010 = vlaneseq
    %v1011 = vshrl.u32 %v1010, 7
    %v1012 = vsub.s32 1, %v1011
    %v1013 = vrot.slane %v938, %v1012
    %v1896 = vunpack.c.l.b16 %v72
    %v1897 = vunpack.c.h.b16 %v72
    %v1898 = vunpack.c.l.b16 %v73
    %v1899 = vunpack.c.h.b16 %v73
    %v1900 = vunpack.c.l.b16 %v74
    %v1901 = vunpack.c.h.b16 %v74
    %v1902 = vunpack.c.l.b16 %v75
    %v1903 = vunpack.c.h.b16 %v75
    %v1904 = vunpack.c.l.b16 %v76
    %v1905 = vunpack.c.h.b16 %v76
    %v1906 = vunpack.c.l.b16 %v77
    %v1907 = vunpack.c.h.b16 %v77
    %v1908 = vunpack.c.l.b16 %v78
    %v1909 = vunpack.c.h.b16 %v78
    %v1910 = vunpack.c.l.b16 %v79
    %v1911 = vunpack.c.h.b16 %v79
    %v1912 = vunpack.c.l.b16 %v80
    %v1913 = vunpack.c.h.b16 %v80
    %v1914 = vunpack.c.l.b16 %v81
    %v1915 = vunpack.c.h.b16 %v81
    %v1916 = vunpack.c.l.b16 %v82
    %v1917 = vunpack.c.h.b16 %v82
    %v1918 = vunpack.c.l.b16 %v83
    %v1919 = vunpack.c.h.b16 %v83
    %v1920 = vunpack.c.l.b16 %v84
    %v1921 = vunpack.c.h.b16 %v84
    %v1922 = vunpack.c.l.b16 %v85
    %v1923 = vunpack.c.h.b16 %v85
    %v1924 = vunpack.c.l.b16 %v86
    %v1925 = vunpack.c.h.b16 %v86
    %v1926 = vunpack.c.l.b16 %v87
    %v1927 = vunpack.c.h.b16 %v87
    %v1928 = vunpack.c.l.b16 %v88
    %v1929 = vunpack.c.h.b16 %v88
    %v1930 = vunpack.c.l.b16 %v89
    %v1931 = vunpack.c.h.b16 %v89
    %v1932 = vunpack.c.l.b16 %v90
    %v1933 = vunpack.c.h.b16 %v90
    %v1934 = vunpack.c.l.b16 %v91
    %v1935 = vunpack.c.h.b16 %v91
    %v1936 = vunpack.c.l.b16 %v92
    %v1937 = vunpack.c.h.b16 %v92
    %v1938 = vunpack.c.l.b16 %v93
    %v1939 = vunpack.c.h.b16 %v93
    %v1940 = vunpack.c.l.b16 %v94
    %v1941 = vunpack.c.h.b16 %v94
    %v1942 = vunpack.c.l.b16 %v95
    %v1943 = vunpack.c.h.b16 %v95
    %v1944 = vunpack.c.l.b16 %v96
    %v1945 = vunpack.c.h.b16 %v96
    %v1946 = vunpack.c.l.b16 %v97
    %v1947 = vunpack.c.h.b16 %v97
    %v1948 = vunpack.c.l.b16 %v98
    %v1949 = vunpack.c.h.b16 %v98
    %v1950 = vunpack.c.l.b16 %v99
    %v1951 = vunpack.c.h.b16 %v99
    %v1952 = vunpack.c.l.b16 %v100
    %v1953 = vunpack.c.h.b16 %v100
    %v1954 = vunpack.c.l.b16 %v101
    %v1955 = vunpack.c.h.b16 %v101
    %v1956 = vunpack.c.l.b16 %v102
    %v1957 = vunpack.c.h.b16 %v102
    %v1958 = vunpack.c.l.b16 %v103
    %v1959 = vunpack.c.h.b16 %v103
    %v1960 = vunpack.c.l.b16 %v104
    %v1961 = vunpack.c.h.b16 %v104
    %v1962 = vunpack.c.l.b16 %v105
    %v1963 = vunpack.c.h.b16 %v105
    %v1964 = vunpack.c.l.b16 %v106
    %v1965 = vunpack.c.h.b16 %v106
    %v1966 = vunpack.c.l.b16 %v107
    %v1967 = vunpack.c.h.b16 %v107
    %v1968 = vunpack.c.l.b16 %v108
    %v1969 = vunpack.c.h.b16 %v108
    %v1970 = vunpack.c.l.b16 %v109
    %v1971 = vunpack.c.h.b16 %v109
    %v1972 = vunpack.c.l.b16 %v110
    %v1973 = vunpack.c.h.b16 %v110
    %v1974 = vunpack.c.l.b16 %v111
    %v1975 = vunpack.c.h.b16 %v111
    %v1976 = vunpack.c.l.b16 %v112
    %v1977 = vunpack.c.h.b16 %v112
    %v1978 = vunpack.c.l.b16 %v113
    %v1979 = vunpack.c.h.b16 %v113
    %v1980 = vunpack.c.l.b16 %v114
    %v1981 = vunpack.c.h.b16 %v114
    %v1982 = vunpack.c.l.b16 %v115
    %v1983 = vunpack.c.h.b16 %v115
    %v1984 = vunpack.c.l.b16 %v116
    %v1985 = vunpack.c.h.b16 %v116
    %v1986 = vunpack.c.l.b16 %v117
    %v1987 = vunpack.c.h.b16 %v117
    %v1988 = vunpack.c.l.b16 %v118
    %v1989 = vunpack.c.h.b16 %v118
    %v1990 = vunpack.c.l.b16 %v119
    %v1991 = vunpack.c.h.b16 %v119
    %v1992 = vunpack.c.l.b16 %v120
    %v1993 = vunpack.c.h.b16 %v120
    %v1994 = vunpack.c.l.b16 %v121
    %v1995 = vunpack.c.h.b16 %v121
    %v1996 = vunpack.c.l.b16 %v122
    %v1997 = vunpack.c.h.b16 %v122
    %v1998 = vunpack.c.l.b16 %v123
    %v1999 = vunpack.c.h.b16 %v123
    %v2000 = vunpack.c.l.b16 %v124
    %v2001 = vunpack.c.h.b16 %v124
    %v2002 = vunpack.c.l.b16 %v125
    %v2003 = vunpack.c.h.b16 %v125
    %v2004 = vunpack.c.l.b16 %v126
    %v2005 = vunpack.c.h.b16 %v126
    %v2006 = vunpack.c.l.b16 %v127
    %v2007 = vunpack.c.h.b16 %v127
    %v2008 = vunpack.c.l.b16 %v128
    %v2009 = vunpack.c.h.b16 %v128
    %v2010 = vunpack.c.l.b16 %v129
    %v2011 = vunpack.c.h.b16 %v129
    %v2012 = vunpack.c.l.b16 %v130
    %v2013 = vunpack.c.h.b16 %v130
    %v2014 = vunpack.c.l.b16 %v131
    %v2015 = vunpack.c.h.b16 %v131
    %v2016 = vunpack.c.l.b16 %v132
    %v2017 = vunpack.c.h.b16 %v132
    %v2018 = vunpack.c.l.b16 %v133
    %v2019 = vunpack.c.h.b16 %v133
    %v2020 = vunpack.c.l.b16 %v134
    %v2021 = vunpack.c.h.b16 %v134
    %v2022 = vunpack.c.l.b16 %v135
    %v2023 = vunpack.c.h.b16 %v135
    %v2024 = vunpack.c.l.b16 %v136
    %v2025 = vunpack.c.h.b16 %v136
    %v2026 = vunpack.c.l.b16 %v137
    %v2027 = vunpack.c.h.b16 %v137
    %v2028 = vunpack.c.l.b16 %v138
    %v2029 = vunpack.c.h.b16 %v138
    %v2030 = vunpack.c.l.b16 %v139
    %v2031 = vunpack.c.h.b16 %v139
    %v2032 = vunpack.c.l.b16 %v140
    %v2033 = vunpack.c.h.b16 %v140
    %v2034 = vunpack.c.l.b16 %v141
    %v2035 = vunpack.c.h.b16 %v141
    %v2036 = vunpack.c.l.b16 %v142
    %v2037 = vunpack.c.h.b16 %v142
    %v2038 = vunpack.c.l.b16 %v143
    %v2039 = vunpack.c.h.b16 %v143
    %v2040 = vunpack.c.l.b16 %v144
    %v2041 = vunpack.c.h.b16 %v144
    %v2042 = vunpack.c.l.b16 %v145
    %v2043 = vunpack.c.h.b16 %v145
    %v2044 = vunpack.c.l.b16 %v146
    %v2045 = vunpack.c.h.b16 %v146
    %v2046 = vunpack.c.l.b16 %v147
    %v2047 = vunpack.c.h.b16 %v147
    %v2048 = vunpack.c.l.b16 %v148
    %v2049 = vunpack.c.h.b16 %v148
    %v2050 = vunpack.c.l.b16 %v149
    %v2051 = vunpack.c.h.b16 %v149
    %v2052 = vunpack.c.l.b16 %v150
    %v2053 = vunpack.c.h.b16 %v150
    %v2054 = vunpack.c.l.b16 %v151
    %v2055 = vunpack.c.h.b16 %v151
    %v2056 = vunpack.c.l.b16 %v152
    %v2057 = vunpack.c.h.b16 %v152
    %v2058 = vunpack.c.l.b16 %v153
    %v2059 = vunpack.c.h.b16 %v153
    %v2060 = vunpack.c.l.b16 %v154
    %v2061 = vunpack.c.h.b16 %v154
    %v2062 = vunpack.c.l.b16 %v155
    %v2063 = vunpack.c.h.b16 %v155
    %v2064 = vunpack.c.l.b16 %v156
    %v2065 = vunpack.c.h.b16 %v156
    %v2066 = vunpack.c.l.b16 %v157
    %v2067 = vunpack.c.h.b16 %v157
    %v2068 = vunpack.c.l.b16 %v158
    %v2069 = vunpack.c.h.b16 %v158
    %v2070 = vunpack.c.l.b16 %v159
    %v2071 = vunpack.c.h.b16 %v159
    %v2072 = vunpack.c.l.b16 %v160
    %v2073 = vunpack.c.h.b16 %v160
    %v2074 = vunpack.c.l.b16 %v161
    %v2075 = vunpack.c.h.b16 %v161
    %v2076 = vunpack.c.l.b16 %v162
    %v2077 = vunpack.c.h.b16 %v162
    %v2078 = vunpack.c.l.b16 %v163
    %v2079 = vunpack.c.h.b16 %v163
    %v2080 = vunpack.c.l.b16 %v164
    %v2081 = vunpack.c.h.b16 %v164
    %v2082 = vunpack.c.l.b16 %v165
    %v2083 = vunpack.c.h.b16 %v165
    %v2084 = vunpack.c.l.b16 %v166
    %v2085 = vunpack.c.h.b16 %v166
    %v2086 = vunpack.c.l.b16 %v167
    %v2087 = vunpack.c.h.b16 %v167
    %v2088 = vunpack.c.l.b16 %v168
    %v2089 = vunpack.c.h.b16 %v168
    %v2090 = vunpack.c.l.b16 %v169
    %v2091 = vunpack.c.h.b16 %v169
    %v2092 = vunpack.c.l.b16 %v170
    %v2093 = vunpack.c.h.b16 %v170
    %v2094 = vunpack.c.l.b16 %v171
    %v2095 = vunpack.c.h.b16 %v171
    %v2096 = vunpack.c.l.b16 %v172
    %v2097 = vunpack.c.h.b16 %v172
    %v2098 = vunpack.c.l.b16 %v173
    %v2099 = vunpack.c.h.b16 %v173
    %v2100 = vunpack.c.l.b16 %v174
    %v2101 = vunpack.c.h.b16 %v174
    %v2102 = vunpack.c.l.b16 %v175
    %v2103 = vunpack.c.h.b16 %v175
    %v2104 = vunpack.c.l.b16 %v176
    %v2105 = vunpack.c.h.b16 %v176
    %v2106 = vunpack.c.l.b16 %v177
    %v2107 = vunpack.c.h.b16 %v177
    %v2108 = vunpack.c.l.b16 %v178
    %v2109 = vunpack.c.h.b16 %v178
    %v2110 = vunpack.c.l.b16 %v179
    %v2111 = vunpack.c.h.b16 %v179
    %v2112 = vunpack.c.l.b16 %v180
    %v2113 = vunpack.c.h.b16 %v180
    %v2114 = vunpack.c.l.b16 %v181
    %v2115 = vunpack.c.h.b16 %v181
    %v2116 = vunpack.c.l.b16 %v182
    %v2117 = vunpack.c.h.b16 %v182
    %v2118 = vunpack.c.l.b16 %v183
    %v2119 = vunpack.c.h.b16 %v183
    %v2120 = vunpack.c.l.b16 %v184
    %v2121 = vunpack.c.h.b16 %v184
    %v2122 = vunpack.c.l.b16 %v185
    %v2123 = vunpack.c.h.b16 %v185
    %v2124 = vunpack.c.l.b16 %v186
    %v2125 = vunpack.c.h.b16 %v186
    %v2126 = vunpack.c.l.b16 %v187
    %v2127 = vunpack.c.h.b16 %v187
    %v2128 = vunpack.c.l.b16 %v188
    %v2129 = vunpack.c.h.b16 %v188
    %v2130 = vunpack.c.l.b16 %v189
    %v2131 = vunpack.c.h.b16 %v189
    %v2132 = vunpack.c.l.b16 %v190
    %v2133 = vunpack.c.h.b16 %v190
    %v2134 = vunpack.c.l.b16 %v191
    %v2135 = vunpack.c.h.b16 %v191
    %v2136 = vunpack.c.l.b16 %v192
    %v2137 = vunpack.c.h.b16 %v192
    %v2138 = vunpack.c.l.b16 %v193
    %v2139 = vunpack.c.h.b16 %v193
    %v2140 = vunpack.c.l.b16 %v194
    %v2141 = vunpack.c.h.b16 %v194
    %v2142 = vunpack.c.l.b16 %v195
    %v2143 = vunpack.c.h.b16 %v195
    %v2144 = vunpack.c.l.b16 %v196
    %v2145 = vunpack.c.h.b16 %v196
    %v2146 = vunpack.c.l.b16 %v197
    %v2147 = vunpack.c.h.b16 %v197
    %v2148 = vunpack.c.l.b16 %v198
    %v2149 = vunpack.c.h.b16 %v198
    %v2150 = vunpack.c.l.b16 %v199
    %v2151 = vunpack.c.h.b16 %v199
    %v2152 = vunpack.c.l.b16 %v200
    %v2153 = vunpack.c.h.b16 %v200
    %v2154 = vunpack.c.l.b16 %v201
    %v2155 = vunpack.c.h.b16 %v201
    %v2156 = vunpack.c.l.b16 %v202
    %v2157 = vunpack.c.h.b16 %v202
    %v2158 = vunpack.c.l.b16 %v203
    %v2159 = vunpack.c.h.b16 %v203
    %v2160 = vunpack.c.l.b16 %v204
    %v2161 = vunpack.c.h.b16 %v204
    %v2162 = vunpack.c.l.b16 %v205
    %v2163 = vunpack.c.h.b16 %v205
    %v2164 = vunpack.c.l.b16 %v206
    %v2165 = vunpack.c.h.b16 %v206
    %v2166 = vunpack.c.l.b16 %v207
    %v2167 = vunpack.c.h.b16 %v207
    %v2168 = vunpack.c.l.b16 %v208
    %v2169 = vunpack.c.h.b16 %v208
    %v2170 = vunpack.c.l.b16 %v209
    %v2171 = vunpack.c.h.b16 %v209
    %v2172 = vunpack.c.l.b16 %v210
    %v2173 = vunpack.c.h.b16 %v210
    %v2174 = vunpack.c.l.b16 %v211
    %v2175 = vunpack.c.h.b16 %v211
    %v2176 = vunpack.c.l.b16 %v212
    %v2177 = vunpack.c.h.b16 %v212
    %v2178 = vunpack.c.l.b16 %v213
    %v2179 = vunpack.c.h.b16 %v213
    %v2180 = vunpack.c.l.b16 %v214
    %v2181 = vunpack.c.h.b16 %v214
    %v2182 = vunpack.c.l.b16 %v215
    %v2183 = vunpack.c.h.b16 %v215
    %v2184 = vunpack.c.l.b16 %v216
    %v2185 = vunpack.c.h.b16 %v216
    %v2186 = vunpack.c.l.b16 %v217
    %v2187 = vunpack.c.h.b16 %v217
    %v2188 = vunpack.c.l.b16 %v218
    %v2189 = vunpack.c.h.b16 %v218
    %v2190 = vunpack.c.l.b16 %v219
    %v2191 = vunpack.c.h.b16 %v219
    %v2192 = vunpack.c.l.b16 %v220
    %v2193 = vunpack.c.h.b16 %v220
    %v2194 = vunpack.c.l.b16 %v221
    %v2195 = vunpack.c.h.b16 %v221
    %v2196 = vunpack.c.l.b16 %v222
    %v2197 = vunpack.c.h.b16 %v222
    %v2198 = vunpack.c.l.b16 %v223
    %v2199 = vunpack.c.h.b16 %v223
    %v2200 = vunpack.c.l.b16 %v224
    %v2201 = vunpack.c.h.b16 %v224
    %v2202 = vunpack.c.l.b16 %v225
    %v2203 = vunpack.c.h.b16 %v225
    %v2204 = vunpack.c.l.b16 %v226
    %v2205 = vunpack.c.h.b16 %v226
    %v2206 = vunpack.c.l.b16 %v227
    %v2207 = vunpack.c.h.b16 %v227
    %v2208 = vunpack.c.l.b16 %v228
    %v2209 = vunpack.c.h.b16 %v228
    %v2210 = vunpack.c.l.b16 %v229
    %v2211 = vunpack.c.h.b16 %v229
    %v2212 = vunpack.c.l.b16 %v230
    %v2213 = vunpack.c.h.b16 %v230
    %v2214 = vunpack.c.l.b16 %v231
    %v2215 = vunpack.c.h.b16 %v231
    %v2216 = vunpack.c.l.b16 %v232
    %v2217 = vunpack.c.h.b16 %v232
    %v2218 = vunpack.c.l.b16 %v233
    %v2219 = vunpack.c.h.b16 %v233
    %v2220 = vunpack.c.l.b16 %v234
    %v2221 = vunpack.c.h.b16 %v234
    %v2222 = vunpack.c.l.b16 %v235
    %v2223 = vunpack.c.h.b16 %v235
    %v2224 = vunpack.c.l.b16 %v236
    %v2225 = vunpack.c.h.b16 %v236
    %v2226 = vunpack.c.l.b16 %v237
    %v2227 = vunpack.c.h.b16 %v237
    %v2228 = vunpack.c.l.b16 %v238
    %v2229 = vunpack.c.h.b16 %v238
    %v2230 = vunpack.c.l.b16 %v239
    %v2231 = vunpack.c.h.b16 %v239
    %v2232 = vunpack.c.l.b16 %v240
    %v2233 = vunpack.c.h.b16 %v240
    %v2234 = vunpack.c.l.b16 %v241
    %v2235 = vunpack.c.h.b16 %v241
    %v2236 = vunpack.c.l.b16 %v242
    %v2237 = vunpack.c.h.b16 %v242
    %v2238 = vunpack.c.l.b16 %v243
    %v2239 = vunpack.c.h.b16 %v243
    %v2240 = vunpack.c.l.b16 %v244
    %v2241 = vunpack.c.h.b16 %v244
    %v2242 = vunpack.c.l.b16 %v245
    %v2243 = vunpack.c.h.b16 %v245
    %v2244 = vunpack.c.l.b16 %v246
    %v2245 = vunpack.c.h.b16 %v246
    %v2246 = vunpack.c.l.b16 %v247
    %v2247 = vunpack.c.h.b16 %v247
    %v2248 = vunpack.c.l.b16 %v248
    %v2249 = vunpack.c.h.b16 %v248
    %v2250 = vunpack.c.l.b16 %v249
    %v2251 = vunpack.c.h.b16 %v249
    %v2252 = vunpack.c.l.b16 %v250
    %v2253 = vunpack.c.h.b16 %v250
    %v2254 = vunpack.c.l.b16 %v251
    %v2255 = vunpack.c.h.b16 %v251
    %v2256 = vunpack.c.l.b16 %v252
    %v2257 = vunpack.c.h.b16 %v252
    %v2258 = vunpack.c.l.b16 %v253
    %v2259 = vunpack.c.h.b16 %v253
    %v2260 = vunpack.c.l.b16 %v254
    %v2261 = vunpack.c.h.b16 %v254
    %v2262 = vunpack.c.l.b16 %v255
    %v2263 = vunpack.c.h.b16 %v255
    %v2264 = vunpack.c.l.b16 %v256
    %v2265 = vunpack.c.h.b16 %v256
    %v2266 = vunpack.c.l.b16 %v257
    %v2267 = vunpack.c.h.b16 %v257
    %v2268 = vunpack.c.l.b16 %v258
    %v2269 = vunpack.c.h.b16 %v258
    %v2270 = vunpack.c.l.b16 %v259
    %v2271 = vunpack.c.h.b16 %v259
    %v2272 = vunpack.c.l.b16 %v260
    %v2273 = vunpack.c.h.b16 %v260
    %v2274 = vunpack.c.l.b16 %v261
    %v2275 = vunpack.c.h.b16 %v261
    %v2276 = vunpack.c.l.b16 %v262
    %v2277 = vunpack.c.h.b16 %v262
    %v2278 = vunpack.c.l.b16 %v263
    %v2279 = vunpack.c.h.b16 %v263
    %v2280 = vunpack.c.l.b16 %v264
    %v2281 = vunpack.c.h.b16 %v264
    %v2282 = vunpack.c.l.b16 %v265
    %v2283 = vunpack.c.h.b16 %v265
    %v2284 = vunpack.c.l.b16 %v266
    %v2285 = vunpack.c.h.b16 %v266
    %v2286 = vunpack.c.l.b16 %v267
    %v2287 = vunpack.c.h.b16 %v267
    %v2288 = vunpack.c.l.b16 %v268
    %v2289 = vunpack.c.h.b16 %v268
    %v2290 = vunpack.c.l.b16 %v269
    %v2291 = vunpack.c.h.b16 %v269
    %v2292 = vunpack.c.l.b16 %v270
    %v2293 = vunpack.c.h.b16 %v270
    %v2294 = vunpack.c.l.b16 %v271
    %v2295 = vunpack.c.h.b16 %v271
    %v2296 = vunpack.c.l.b16 %v272
    %v2297 = vunpack.c.h.b16 %v272
    %v2298 = vunpack.c.l.b16 %v273
    %v2299 = vunpack.c.h.b16 %v273
    %v2300 = vunpack.c.l.b16 %v274
    %v2301 = vunpack.c.h.b16 %v274
    %v2302 = vunpack.c.l.b16 %v275
    %v2303 = vunpack.c.h.b16 %v275
    %v2304 = vunpack.c.l.b16 %v276
    %v2305 = vunpack.c.h.b16 %v276
    %v2306 = vunpack.c.l.b16 %v277
    %v2307 = vunpack.c.h.b16 %v277
    %v2308 = vunpack.c.l.b16 %v278
    %v2309 = vunpack.c.h.b16 %v278
    %v2310 = vunpack.c.l.b16 %v279
    %v2311 = vunpack.c.h.b16 %v279
    %v2312 = vunpack.c.l.b16 %v280
    %v2313 = vunpack.c.h.b16 %v280
    %v2314 = vunpack.c.l.b16 %v281
    %v2315 = vunpack.c.h.b16 %v281
    %v2316 = vunpack.c.l.b16 %v282
    %v2317 = vunpack.c.h.b16 %v282
    %v2318 = vunpack.c.l.b16 %v283
    %v2319 = vunpack.c.h.b16 %v283
    %v2320 = vunpack.c.l.b16 %v284
    %v2321 = vunpack.c.h.b16 %v284
    %v2322 = vunpack.c.l.b16 %v285
    %v2323 = vunpack.c.h.b16 %v285
    %v2324 = vunpack.c.l.b16 %v286
    %v2325 = vunpack.c.h.b16 %v286
    %v2326 = vunpack.c.l.b16 %v287
    %v2327 = vunpack.c.h.b16 %v287
    %v2328 = vunpack.c.l.b16 %v288
    %v2329 = vunpack.c.h.b16 %v288
    %v2330 = vunpack.c.l.b16 %v289
    %v2331 = vunpack.c.h.b16 %v289
    %v2332 = vunpack.c.l.b16 %v290
    %v2333 = vunpack.c.h.b16 %v290
    %v2334 = vunpack.c.l.b16 %v291
    %v2335 = vunpack.c.h.b16 %v291
    %v2336 = vunpack.c.l.b16 %v292
    %v2337 = vunpack.c.h.b16 %v292
    %v2338 = vunpack.c.l.b16 %v293
    %v2339 = vunpack.c.h.b16 %v293
    %v2340 = vunpack.c.l.b16 %v294
    %v2341 = vunpack.c.h.b16 %v294
    %v2342 = vunpack.c.l.b16 %v295
    %v2343 = vunpack.c.h.b16 %v295
    %v2344 = vunpack.c.l.b16 %v296
    %v2345 = vunpack.c.h.b16 %v296
    %v2346 = vunpack.c.l.b16 %v297
    %v2347 = vunpack.c.h.b16 %v297
    %v2348 = vunpack.c.l.b16 %v298
    %v2349 = vunpack.c.h.b16 %v298
    %v2350 = vunpack.c.l.b16 %v299
    %v2351 = vunpack.c.h.b16 %v299
    %v2352 = vunpack.c.l.b16 %v300
    %v2353 = vunpack.c.h.b16 %v300
    %v2354 = vunpack.c.l.b16 %v301
    %v2355 = vunpack.c.h.b16 %v301
    %v2356 = vunpack.c.l.b16 %v302
    %v2357 = vunpack.c.h.b16 %v302
    %v2358 = vunpack.c.l.b16 %v303
    %v2359 = vunpack.c.h.b16 %v303
    %v2360 = vunpack.c.l.b16 %v304
    %v2361 = vunpack.c.h.b16 %v304
    %v2362 = vunpack.c.l.b16 %v305
    %v2363 = vunpack.c.h.b16 %v305
    %v2364 = vunpack.c.l.b16 %v306
    %v2365 = vunpack.c.h.b16 %v306
    %v2366 = vunpack.c.l.b16 %v307
    %v2367 = vunpack.c.h.b16 %v307
    %v2368 = vunpack.c.l.b16 %v308
    %v2369 = vunpack.c.h.b16 %v308
    %v2370 = vunpack.c.l.b16 %v309
    %v2371 = vunpack.c.h.b16 %v309
    %v2372 = vunpack.c.l.b16 %v310
    %v2373 = vunpack.c.h.b16 %v310
    %v2374 = vunpack.c.l.b16 %v311
    %v2375 = vunpack.c.h.b16 %v311
    %v2376 = vunpack.c.l.b16 %v312
    %v2377 = vunpack.c.h.b16 %v312
    %v2378 = vunpack.c.l.b16 %v313
    %v2379 = vunpack.c.h.b16 %v313
    %v2380 = vunpack.c.l.b16 %v314
    %v2381 = vunpack.c.h.b16 %v314
    %v2382 = vunpack.c.l.b16 %v315
    %v2383 = vunpack.c.h.b16 %v315
    %v2384 = vunpack.c.l.b16 %v316
    %v2385 = vunpack.c.h.b16 %v316
    %v2386 = vunpack.c.l.b16 %v317
    %v2387 = vunpack.c.h.b16 %v317
    %v2388 = vunpack.c.l.b16 %v318
    %v2389 = vunpack.c.h.b16 %v318
    %v2390 = vunpack.c.l.b16 %v319
    %v2391 = vunpack.c.h.b16 %v319
    %v2392 = vunpack.c.l.b16 %v320
    %v2393 = vunpack.c.h.b16 %v320
    %v2394 = vunpack.c.l.b16 %v321
    %v2395 = vunpack.c.h.b16 %v321
    %v2396 = vunpack.c.l.b16 %v322
    %v2397 = vunpack.c.h.b16 %v322
    %v2398 = vunpack.c.l.b16 %v323
    %v2399 = vunpack.c.h.b16 %v323
    %v2400 = vunpack.c.l.b16 %v324
    %v2401 = vunpack.c.h.b16 %v324
    %v2402 = vunpack.c.l.b16 %v325
    %v2403 = vunpack.c.h.b16 %v325
    %v2404 = vunpack.c.l.b16 %v326
    %v2405 = vunpack.c.h.b16 %v326
    %v2406 = vunpack.c.l.b16 %v327
    %v2407 = vunpack.c.h.b16 %v327
    %v2408 = vunpack.c.l.b16 %v328
    %v2409 = vunpack.c.h.b16 %v328
    %v2410 = vunpack.c.l.b16 %v329
    %v2411 = vunpack.c.h.b16 %v329
    %v2412 = vunpack.c.l.b16 %v330
    %v2413 = vunpack.c.h.b16 %v330
    %v2414 = vunpack.c.l.b16 %v331
    %v2415 = vunpack.c.h.b16 %v331
    %v2416 = vunpack.c.l.b16 %v332
    %v2417 = vunpack.c.h.b16 %v332
    %v2418 = vunpack.c.l.b16 %v333
    %v2419 = vunpack.c.h.b16 %v333
    %v2420 = vunpack.c.l.b16 %v334
    %v2421 = vunpack.c.h.b16 %v334
    %v2422 = vunpack.c.l.b16 %v335
    %v2423 = vunpack.c.h.b16 %v335
    %v2424 = vunpack.c.l.b16 %v336
    %v2425 = vunpack.c.h.b16 %v336
    %v2426 = vunpack.c.l.b16 %v337
    %v2427 = vunpack.c.h.b16 %v337
    %v2428 = vunpack.c.l.b16 %v338
    %v2429 = vunpack.c.h.b16 %v338
    %v2430 = vunpack.c.l.b16 %v339
    %v2431 = vunpack.c.h.b16 %v339
    %v2432 = vunpack.c.l.b16 %v340
    %v2433 = vunpack.c.h.b16 %v340
    %v2434 = vunpack.c.l.b16 %v341
    %v2435 = vunpack.c.h.b16 %v341
    %v2436 = vunpack.c.l.b16 %v342
    %v2437 = vunpack.c.h.b16 %v342
    %v2438 = vunpack.c.l.b16 %v343
    %v2439 = vunpack.c.h.b16 %v343
    %v2440 = vunpack.c.l.b16 %v344
    %v2441 = vunpack.c.h.b16 %v344
    %v2442 = vunpack.c.l.b16 %v345
    %v2443 = vunpack.c.h.b16 %v345
    %v2444 = vunpack.c.l.b16 %v346
    %v2445 = vunpack.c.h.b16 %v346
    %v2446 = vunpack.c.l.b16 %v347
    %v2447 = vunpack.c.h.b16 %v347
    %v2448 = vunpack.c.l.b16 %v348
    %v2449 = vunpack.c.h.b16 %v348
    %v2450 = vunpack.c.l.b16 %v349
    %v2451 = vunpack.c.h.b16 %v349
    %v2452 = vunpack.c.l.b16 %v350
    %v2453 = vunpack.c.h.b16 %v350
    %v2454 = vunpack.c.l.b16 %v351
    %v2455 = vunpack.c.h.b16 %v351
    %v2456 = vunpack.c.l.b16 %v352
    %v2457 = vunpack.c.h.b16 %v352
    %v2458 = vunpack.c.l.b16 %v353
    %v2459 = vunpack.c.h.b16 %v353
    %v2460 = vunpack.c.l.b16 %v354
    %v2461 = vunpack.c.h.b16 %v354
    %v2462 = vunpack.c.l.b16 %v355
    %v2463 = vunpack.c.h.b16 %v355
    %v2464 = vunpack.c.l.b16 %v356
    %v2465 = vunpack.c.h.b16 %v356
    %v2466 = vunpack.c.l.b16 %v357
    %v2467 = vunpack.c.h.b16 %v357
    %v2468 = vunpack.c.l.b16 %v358
    %v2469 = vunpack.c.h.b16 %v358
    %v2470 = vunpack.c.l.b16 %v359
    %v2471 = vunpack.c.h.b16 %v359
    %v2472 = vunpack.c.l.b16 %v360
    %v2473 = vunpack.c.h.b16 %v360
    %v2474 = vunpack.c.l.b16 %v361
    %v2475 = vunpack.c.h.b16 %v361
    %v2476 = vunpack.c.l.b16 %v362
    %v2477 = vunpack.c.h.b16 %v362
    %v2478 = vunpack.c.l.b16 %v363
    %v2479 = vunpack.c.h.b16 %v363
    %v2480 = vunpack.c.l.b16 %v364
    %v2481 = vunpack.c.h.b16 %v364
    %v2482 = vunpack.c.l.b16 %v365
    %v2483 = vunpack.c.h.b16 %v365
    %v2484 = vunpack.c.l.b16 %v366
    %v2485 = vunpack.c.h.b16 %v366
    %v2486 = vunpack.c.l.b16 %v367
    %v2487 = vunpack.c.h.b16 %v367
    %v2488 = vunpack.c.l.b16 %v368
    %v2489 = vunpack.c.h.b16 %v368
    %v2490 = vunpack.c.l.b16 %v369
    %v2491 = vunpack.c.h.b16 %v369
    %v2492 = vunpack.c.l.b16 %v370
    %v2493 = vunpack.c.h.b16 %v370
    %v2494 = vunpack.c.l.b16 %v371
    %v2495 = vunpack.c.h.b16 %v371
    %v2496 = vunpack.c.l.b16 %v372
    %v2497 = vunpack.c.h.b16 %v372
    %v2498 = vunpack.c.l.b16 %v373
    %v2499 = vunpack.c.h.b16 %v373
    %v2500 = vunpack.c.l.b16 %v374
    %v2501 = vunpack.c.h.b16 %v374
    %v2502 = vunpack.c.l.b16 %v375
    %v2503 = vunpack.c.h.b16 %v375
    %v2504 = vunpack.c.l.b16 %v376
    %v2505 = vunpack.c.h.b16 %v376
    %v2506 = vunpack.c.l.b16 %v377
    %v2507 = vunpack.c.h.b16 %v377
    %v2508 = vunpack.c.l.b16 %v378
    %v2509 = vunpack.c.h.b16 %v378
    %v2510 = vunpack.c.l.b16 %v379
    %v2511 = vunpack.c.h.b16 %v379
    %v2512 = vunpack.c.l.b16 %v380
    %v2513 = vunpack.c.h.b16 %v380
    %v2514 = vunpack.c.l.b16 %v381
    %v2515 = vunpack.c.h.b16 %v381
    %v2516 = vunpack.c.l.b16 %v382
    %v2517 = vunpack.c.h.b16 %v382
    %v2518 = vunpack.c.l.b16 %v383
    %v2519 = vunpack.c.h.b16 %v383
    %v2520 = vunpack.c.l.b16 %v384
    %v2521 = vunpack.c.h.b16 %v384
    %v2522 = vunpack.c.l.b16 %v385
    %v2523 = vunpack.c.h.b16 %v385
    %v2524 = vunpack.c.l.b16 %v386
    %v2525 = vunpack.c.h.b16 %v386
    %v2526 = vunpack.c.l.b16 %v387
    %v2527 = vunpack.c.h.b16 %v387
    %v2528 = vunpack.c.l.b16 %v388
    %v2529 = vunpack.c.h.b16 %v388
    %v2530 = vunpack.c.l.b16 %v389
    %v2531 = vunpack.c.h.b16 %v389
    %v2532 = vunpack.c.l.b16 %v390
    %v2533 = vunpack.c.h.b16 %v390
    %v2534 = vunpack.c.l.b16 %v391
    %v2535 = vunpack.c.h.b16 %v391
    %v2536 = vunpack.c.l.b16 %v392
    %v2537 = vunpack.c.h.b16 %v392
    %v2538 = vunpack.c.l.b16 %v393
    %v2539 = vunpack.c.h.b16 %v393
    %v2540 = vunpack.c.l.b16 %v394
    %v2541 = vunpack.c.h.b16 %v394
    %v2542 = vunpack.c.l.b16 %v395
    %v2543 = vunpack.c.h.b16 %v395
    %v2544 = vunpack.c.l.b16 %v396
    %v2545 = vunpack.c.h.b16 %v396
    %v2546 = vunpack.c.l.b16 %v397
    %v2547 = vunpack.c.h.b16 %v397
    %v2548 = vunpack.c.l.b16 %v398
    %v2549 = vunpack.c.h.b16 %v398
    %v2550 = vunpack.c.l.b16 %v399
    %v2551 = vunpack.c.h.b16 %v399
    %v2552 = vunpack.c.l.b16 %v400
    %v2553 = vunpack.c.h.b16 %v400
    %v2554 = vunpack.c.l.b16 %v401
    %v2555 = vunpack.c.h.b16 %v401
    %v2556 = vunpack.c.l.b16 %v402
    %v2557 = vunpack.c.h.b16 %v402
    %v2558 = vunpack.c.l.b16 %v403
    %v2559 = vunpack.c.h.b16 %v403
    %v2560 = vunpack.c.l.b16 %v404
    %v2561 = vunpack.c.h.b16 %v404
    %v2562 = vunpack.c.l.b16 %v405
    %v2563 = vunpack.c.h.b16 %v405
    %v2564 = vunpack.c.l.b16 %v406
    %v2565 = vunpack.c.h.b16 %v406
    %v2566 = vunpack.c.l.b16 %v407
    %v2567 = vunpack.c.h.b16 %v407
    %v2568 = vunpack.c.l.b16 %v408
    %v2569 = vunpack.c.h.b16 %v408
    %v2570 = vunpack.c.l.b16 %v409
    %v2571 = vunpack.c.h.b16 %v409
    %v2572 = vunpack.c.l.b16 %v410
    %v2573 = vunpack.c.h.b16 %v410
    %v2574 = vunpack.c.l.b16 %v411
    %v2575 = vunpack.c.h.b16 %v411
    %v2576 = vunpack.c.l.b16 %v412
    %v2577 = vunpack.c.h.b16 %v412
    %v2578 = vunpack.c.l.b16 %v413
    %v2579 = vunpack.c.h.b16 %v413
    %v2580 = vunpack.c.l.b16 %v414
    %v2581 = vunpack.c.h.b16 %v414
    %v2582 = vunpack.c.l.b16 %v415
    %v2583 = vunpack.c.h.b16 %v415
    %v2584 = vunpack.c.l.b16 %v416
    %v2585 = vunpack.c.h.b16 %v416
    %v2586 = vunpack.c.l.b16 %v417
    %v2587 = vunpack.c.h.b16 %v417
    %v2588 = vunpack.c.l.b16 %v418
    %v2589 = vunpack.c.h.b16 %v418
    %v2590 = vunpack.c.l.b16 %v419
    %v2591 = vunpack.c.h.b16 %v419
    %v2592 = vunpack.c.l.b16 %v420
    %v2593 = vunpack.c.h.b16 %v420
    %v2594 = vunpack.c.l.b16 %v421
    %v2595 = vunpack.c.h.b16 %v421
    %v2596 = vunpack.c.l.b16 %v422
    %v2597 = vunpack.c.h.b16 %v422
    %v2598 = vunpack.c.l.b16 %v423
    %v2599 = vunpack.c.h.b16 %v423
    %v2600 = vunpack.c.l.b16 %v424
    %v2601 = vunpack.c.h.b16 %v424
    %v2602 = vunpack.c.l.b16 %v425
    %v2603 = vunpack.c.h.b16 %v425
    %v2604 = vunpack.c.l.b16 %v426
    %v2605 = vunpack.c.h.b16 %v426
    %v2606 = vunpack.c.l.b16 %v427
    %v2607 = vunpack.c.h.b16 %v427
    %v2608 = vunpack.c.l.b16 %v428
    %v2609 = vunpack.c.h.b16 %v428
    %v2610 = vunpack.c.l.b16 %v429
    %v2611 = vunpack.c.h.b16 %v429
    %v2612 = vunpack.c.l.b16 %v430
    %v2613 = vunpack.c.h.b16 %v430
    %v2614 = vunpack.c.l.b16 %v431
    %v2615 = vunpack.c.h.b16 %v431
    %v2616 = vunpack.c.l.b16 %v432
    %v2617 = vunpack.c.h.b16 %v432
    %v2618 = vunpack.c.l.b16 %v433
    %v2619 = vunpack.c.h.b16 %v433
    %v2620 = vunpack.c.l.b16 %v434
    %v2621 = vunpack.c.h.b16 %v434
    %v2622 = vunpack.c.l.b16 %v435
    %v2623 = vunpack.c.h.b16 %v435
    %v2624 = vunpack.c.l.b16 %v436
    %v2625 = vunpack.c.h.b16 %v436
    %v2626 = vunpack.c.l.b16 %v437
    %v2627 = vunpack.c.h.b16 %v437
    %v2628 = vunpack.c.l.b16 %v438
    %v2629 = vunpack.c.h.b16 %v438
    %v2630 = vunpack.c.l.b16 %v439
    %v2631 = vunpack.c.h.b16 %v439
    %v2632 = vunpack.c.l.b16 %v440
    %v2633 = vunpack.c.h.b16 %v440
    %v2634 = vunpack.c.l.b16 %v441
    %v2635 = vunpack.c.h.b16 %v441
    %v2636 = vunpack.c.l.b16 %v442
    %v2637 = vunpack.c.h.b16 %v442
    %v2638 = vunpack.c.l.b16 %v443
    %v2639 = vunpack.c.h.b16 %v443
    %v2640 = vunpack.c.l.b16 %v444
    %v2641 = vunpack.c.h.b16 %v444
    %v2642 = vunpack.c.l.b16 %v445
    %v2643 = vunpack.c.h.b16 %v445
    %v2644 = vunpack.c.l.b16 %v446
    %v2645 = vunpack.c.h.b16 %v446
    %v2646 = vunpack.c.l.b16 %v447
    %v2647 = vunpack.c.h.b16 %v447
    %v2648 = vunpack.c.l.b16 %v448
    %v2649 = vunpack.c.h.b16 %v448
    %v2650 = vunpack.c.l.b16 %v449
    %v2651 = vunpack.c.h.b16 %v449
    %v2652 = vunpack.c.l.b16 %v450
    %v2653 = vunpack.c.h.b16 %v450
    %v2654 = vunpack.c.l.b16 %v451
    %v2655 = vunpack.c.h.b16 %v451
    %v2656 = vunpack.c.l.b16 %v452
    %v2657 = vunpack.c.h.b16 %v452
    %v2658 = vunpack.c.l.b16 %v453
    %v2659 = vunpack.c.h.b16 %v453
    %v2660 = vunpack.c.l.b16 %v454
    %v2661 = vunpack.c.h.b16 %v454
    %v2662 = vunpack.c.l.b16 %v455
    %v2663 = vunpack.c.h.b16 %v455
    %v2664 = vunpack.c.l.b16 %v456
    %v2665 = vunpack.c.h.b16 %v456
    %v2666 = vunpack.c.l.b16 %v457
    %v2667 = vunpack.c.h.b16 %v457
    %v2668 = vunpack.c.l.b16 %v458
    %v2669 = vunpack.c.h.b16 %v458
    %v2670 = vunpack.c.l.b16 %v459
    %v2671 = vunpack.c.h.b16 %v459
    %v2672 = vunpack.c.l.b16 %v460
    %v2673 = vunpack.c.h.b16 %v460
    %v2674 = vunpack.c.l.b16 %v461
    %v2675 = vunpack.c.h.b16 %v461
    %v2676 = vunpack.c.l.b16 %v462
    %v2677 = vunpack.c.h.b16 %v462
    %v2678 = vunpack.c.l.b16 %v463
    %v2679 = vunpack.c.h.b16 %v463
    %v2680 = vunpack.c.l.b16 %v464
    %v2681 = vunpack.c.h.b16 %v464
    %v2682 = vunpack.c.l.b16 %v465
    %v2683 = vunpack.c.h.b16 %v465
    %v2684 = vunpack.c.l.b16 %v466
    %v2685 = vunpack.c.h.b16 %v466
    %v2686 = vunpack.c.l.b16 %v467
    %v2687 = vunpack.c.h.b16 %v467
    %v2688 = vunpack.c.l.b16 %v468
    %v2689 = vunpack.c.h.b16 %v468
    %v2690 = vunpack.c.l.b16 %v469
    %v2691 = vunpack.c.h.b16 %v469
    %v2692 = vunpack.c.l.b16 %v470
    %v2693 = vunpack.c.h.b16 %v470
    %v2694 = vunpack.c.l.b16 %v471
    %v2695 = vunpack.c.h.b16 %v471
    %v2696 = vunpack.c.l.b16 %v472
    %v2697 = vunpack.c.h.b16 %v472
    %v2698 = vunpack.c.l.b16 %v473
    %v2699 = vunpack.c.h.b16 %v473
    %v2700 = vunpack.c.l.b16 %v474
    %v2701 = vunpack.c.h.b16 %v474
    %v2702 = vunpack.c.l.b16 %v475
    %v2703 = vunpack.c.h.b16 %v475
    %v2704 = vunpack.c.l.b16 %v476
    %v2705 = vunpack.c.h.b16 %v476
    %v2706 = vunpack.c.l.b16 %v477
    %v2707 = vunpack.c.h.b16 %v477
    %v2708 = vunpack.c.l.b16 %v478
    %v2709 = vunpack.c.h.b16 %v478
    %v2710 = vunpack.c.l.b16 %v479
    %v2711 = vunpack.c.h.b16 %v479
    %v2712 = vunpack.c.l.b16 %v480
    %v2713 = vunpack.c.h.b16 %v480
    %v2714 = vunpack.c.l.b16 %v481
    %v2715 = vunpack.c.h.b16 %v481
    %v2716 = vunpack.c.l.b16 %v482
    %v2717 = vunpack.c.h.b16 %v482
    %v2718 = vunpack.c.l.b16 %v483
    %v2719 = vunpack.c.h.b16 %v483
    %v2720 = vunpack.c.l.b16 %v484
    %v2721 = vunpack.c.h.b16 %v484
    %v2722 = vunpack.c.l.b16 %v485
    %v2723 = vunpack.c.h.b16 %v485
    %v2724 = vunpack.c.l.b16 %v486
    %v2725 = vunpack.c.h.b16 %v486
    %v2726 = vunpack.c.l.b16 %v487
    %v2727 = vunpack.c.h.b16 %v487
    %v2728 = vunpack.c.l.b16 %v488
    %v2729 = vunpack.c.h.b16 %v488
    %v2730 = vunpack.c.l.b16 %v489
    %v2731 = vunpack.c.h.b16 %v489
    %v2732 = vunpack.c.l.b16 %v490
    %v2733 = vunpack.c.h.b16 %v490
    %v2734 = vunpack.c.l.b16 %v491
    %v2735 = vunpack.c.h.b16 %v491
    %v2736 = vunpack.c.l.b16 %v492
    %v2737 = vunpack.c.h.b16 %v492
    %v2738 = vunpack.c.l.b16 %v493
    %v2739 = vunpack.c.h.b16 %v493
    %v2740 = vunpack.c.l.b16 %v494
    %v2741 = vunpack.c.h.b16 %v494
    %v2742 = vunpack.c.l.b16 %v495
    %v2743 = vunpack.c.h.b16 %v495
    %v2744 = vunpack.c.l.b16 %v496
    %v2745 = vunpack.c.h.b16 %v496
    %v2746 = vunpack.c.l.b16 %v497
    %v2747 = vunpack.c.h.b16 %v497
    %v2748 = vunpack.c.l.b16 %v498
    %v2749 = vunpack.c.h.b16 %v498
    %v2750 = vunpack.c.l.b16 %v499
    %v2751 = vunpack.c.h.b16 %v499
    %v2752 = vunpack.c.l.b16 %v500
    %v2753 = vunpack.c.h.b16 %v500
    %v2754 = vunpack.c.l.b16 %v501
    %v2755 = vunpack.c.h.b16 %v501
    %v2756 = vunpack.c.l.b16 %v502
    %v2757 = vunpack.c.h.b16 %v502
    %v2758 = vunpack.c.l.b16 %v503
    %v2759 = vunpack.c.h.b16 %v503
    %v2760 = vunpack.c.l.b16 %v504
    %v2761 = vunpack.c.h.b16 %v504
    %v2762 = vunpack.c.l.b16 %v505
    %v2763 = vunpack.c.h.b16 %v505
    %v2764 = vunpack.c.l.b16 %v506
    %v2765 = vunpack.c.h.b16 %v506
    %v2766 = vunpack.c.l.b16 %v507
    %v2767 = vunpack.c.h.b16 %v507
    %v2768 = vunpack.c.l.b16 %v508
    %v2769 = vunpack.c.h.b16 %v508
    %v2770 = vunpack.c.l.b16 %v509
    %v2771 = vunpack.c.h.b16 %v509
    %v2772 = vunpack.c.l.b16 %v510
    %v2773 = vunpack.c.h.b16 %v510
    %v2774 = vunpack.c.l.b16 %v511
    %v2775 = vunpack.c.h.b16 %v511
    %v2776 = vunpack.c.l.b16 %v512
    %v2777 = vunpack.c.h.b16 %v512
    %v2778 = vunpack.c.l.b16 %v513
    %v2779 = vunpack.c.h.b16 %v513
    %v2780 = vunpack.c.l.b16 %v514
    %v2781 = vunpack.c.h.b16 %v514
    %v2782 = vunpack.c.l.b16 %v515
    %v2783 = vunpack.c.h.b16 %v515
    %v2784 = vunpack.c.l.b16 %v516
    %v2785 = vunpack.c.h.b16 %v516
    %v2786 = vunpack.c.l.b16 %v517
    %v2787 = vunpack.c.h.b16 %v517
    %v2788 = vunpack.c.l.b16 %v518
    %v2789 = vunpack.c.h.b16 %v518
    %v2790 = vunpack.c.l.b16 %v519
    %v2791 = vunpack.c.h.b16 %v519
    %v2792 = vunpack.c.l.b16 %v520
    %v2793 = vunpack.c.h.b16 %v520
    %v2794 = vunpack.c.l.b16 %v521
    %v2795 = vunpack.c.h.b16 %v521
    %v2796 = vunpack.c.l.b16 %v522
    %v2797 = vunpack.c.h.b16 %v522
    %v2798 = vunpack.c.l.b16 %v523
    %v2799 = vunpack.c.h.b16 %v523
    %v2800 = vunpack.c.l.b16 %v524
    %v2801 = vunpack.c.h.b16 %v524
    %v2802 = vunpack.c.l.b16 %v525
    %v2803 = vunpack.c.h.b16 %v525
    %v2804 = vunpack.c.l.b16 %v526
    %v2805 = vunpack.c.h.b16 %v526
    %v2806 = vunpack.c.l.b16 %v527
    %v2807 = vunpack.c.h.b16 %v527
    %v2808 = vunpack.c.l.b16 %v528
    %v2809 = vunpack.c.h.b16 %v528
    %v2810 = vunpack.c.l.b16 %v529
    %v2811 = vunpack.c.h.b16 %v529
    %v2812 = vunpack.c.l.b16 %v530
    %v2813 = vunpack.c.h.b16 %v530
    %v2814 = vunpack.c.l.b16 %v531
    %v2815 = vunpack.c.h.b16 %v531
    %v2816 = vunpack.c.l.b16 %v532
    %v2817 = vunpack.c.h.b16 %v532
    %v2818 = vunpack.c.l.b16 %v533
    %v2819 = vunpack.c.h.b16 %v533
    %v2820 = vunpack.c.l.b16 %v534
    %v2821 = vunpack.c.h.b16 %v534
    %v2822 = vunpack.c.l.b16 %v535
    %v2823 = vunpack.c.h.b16 %v535
    %v2824 = vunpack.c.l.b16 %v536
    %v2825 = vunpack.c.h.b16 %v536
    %v2826 = vunpack.c.l.b16 %v537
    %v2827 = vunpack.c.h.b16 %v537
    %v2828 = vunpack.c.l.b16 %v538
    %v2829 = vunpack.c.h.b16 %v538
    %v2830 = vunpack.c.l.b16 %v539
    %v2831 = vunpack.c.h.b16 %v539
    %v2832 = vunpack.c.l.b16 %v540
    %v2833 = vunpack.c.h.b16 %v540
    %v2834 = vunpack.c.l.b16 %v541
    %v2835 = vunpack.c.h.b16 %v541
    %v2836 = vunpack.c.l.b16 %v542
    %v2837 = vunpack.c.h.b16 %v542
    %v2838 = vunpack.c.l.b16 %v543
    %v2839 = vunpack.c.h.b16 %v543
    %v2840 = vunpack.c.l.b16 %v544
    %v2841 = vunpack.c.h.b16 %v544
    %v2842 = vunpack.c.l.b16 %v545
    %v2843 = vunpack.c.h.b16 %v545
    %v2844 = vunpack.c.l.b16 %v546
    %v2845 = vunpack.c.h.b16 %v546
    %v2846 = vunpack.c.l.b16 %v547
    %v2847 = vunpack.c.h.b16 %v547
    %v2848 = vunpack.c.l.b16 %v548
    %v2849 = vunpack.c.h.b16 %v548
    %v2850 = vunpack.c.l.b16 %v549
    %v2851 = vunpack.c.h.b16 %v549
    %v2852 = vunpack.c.l.b16 %v550
    %v2853 = vunpack.c.h.b16 %v550
    %v2854 = vunpack.c.l.b16 %v551
    %v2855 = vunpack.c.h.b16 %v551
    %v2856 = vunpack.c.l.b16 %v552
    %v2857 = vunpack.c.h.b16 %v552
    %v2858 = vunpack.c.l.b16 %v553
    %v2859 = vunpack.c.h.b16 %v553
    %v2860 = vunpack.c.l.b16 %v554
    %v2861 = vunpack.c.h.b16 %v554
    %v2862 = vunpack.c.l.b16 %v555
    %v2863 = vunpack.c.h.b16 %v555
    %v2864 = vunpack.c.l.b16 %v556
    %v2865 = vunpack.c.h.b16 %v556
    %v2866 = vunpack.c.l.b16 %v557
    %v2867 = vunpack.c.h.b16 %v557
    %v2868 = vunpack.c.l.b16 %v558
    %v2869 = vunpack.c.h.b16 %v558
    %v2870 = vunpack.c.l.b16 %v559
    %v2871 = vunpack.c.h.b16 %v559
    %v2872 = vunpack.c.l.b16 %v560
    %v2873 = vunpack.c.h.b16 %v560
    %v2874 = vunpack.c.l.b16 %v561
    %v2875 = vunpack.c.h.b16 %v561
    %v2876 = vunpack.c.l.b16 %v562
    %v2877 = vunpack.c.h.b16 %v562
    %v2878 = vunpack.c.l.b16 %v563
    %v2879 = vunpack.c.h.b16 %v563
    %v2880 = vunpack.c.l.b16 %v564
    %v2881 = vunpack.c.h.b16 %v564
    %v2882 = vunpack.c.l.b16 %v565
    %v2883 = vunpack.c.h.b16 %v565
    %v2884 = vunpack.c.l.b16 %v566
    %v2885 = vunpack.c.h.b16 %v566
    %v2886 = vunpack.c.l.b16 %v567
    %v2887 = vunpack.c.h.b16 %v567
    %v2888 = vunpack.c.l.b16 %v568
    %v2889 = vunpack.c.h.b16 %v568
    %v2890 = vunpack.c.l.b16 %v569
    %v2891 = vunpack.c.h.b16 %v569
    %v2892 = vunpack.c.l.b16 %v570
    %v2893 = vunpack.c.h.b16 %v570
    %v2894 = vunpack.c.l.b16 %v571
    %v2895 = vunpack.c.h.b16 %v571
    %v2896 = vunpack.c.l.b16 %v572
    %v2897 = vunpack.c.h.b16 %v572
    %v2898 = vunpack.c.l.b16 %v573
    %v2899 = vunpack.c.h.b16 %v573
    %v2900 = vunpack.c.l.b16 %v574
    %v2901 = vunpack.c.h.b16 %v574
    %v2902 = vunpack.c.l.b16 %v575
    %v2903 = vunpack.c.h.b16 %v575
    %v2904 = vunpack.c.l.b16 %v576
    %v2905 = vunpack.c.h.b16 %v576
    %v2906 = vunpack.c.l.b16 %v577
    %v2907 = vunpack.c.h.b16 %v577
    %v2908 = vunpack.c.l.b16 %v578
    %v2909 = vunpack.c.h.b16 %v578
    %v2910 = vunpack.c.l.b16 %v579
    %v2911 = vunpack.c.h.b16 %v579
    %v2912 = vunpack.c.l.b16 %v580
    %v2913 = vunpack.c.h.b16 %v580
    %v2914 = vunpack.c.l.b16 %v581
    %v2915 = vunpack.c.h.b16 %v581
    %v2916 = vunpack.c.l.b16 %v582
    %v2917 = vunpack.c.h.b16 %v582
    %v2918 = vunpack.c.l.b16 %v583
    %v2919 = vunpack.c.h.b16 %v583
    %v2920 = vunpack.c.l.b16 %v584
    %v2921 = vunpack.c.h.b16 %v584
    %v2922 = vunpack.c.l.b16 %v585
    %v2923 = vunpack.c.h.b16 %v585
    %v2924 = vunpack.c.l.b16 %v586
    %v2925 = vunpack.c.h.b16 %v586
    %v2926 = vunpack.c.l.b16 %v587
    %v2927 = vunpack.c.h.b16 %v587
    %v2928 = vunpack.c.l.b16 %v588
    %v2929 = vunpack.c.h.b16 %v588
    %v2930 = vunpack.c.l.b16 %v589
    %v2931 = vunpack.c.h.b16 %v589
    %v2932 = vunpack.c.l.b16 %v590
    %v2933 = vunpack.c.h.b16 %v590
    %v2934 = vunpack.c.l.b16 %v591
    %v2935 = vunpack.c.h.b16 %v591
    %v2936 = vunpack.c.l.b16 %v592
    %v2937 = vunpack.c.h.b16 %v592
    %v2938 = vunpack.c.l.b16 %v593
    %v2939 = vunpack.c.h.b16 %v593
    %v2940 = vunpack.c.l.b16 %v594
    %v2941 = vunpack.c.h.b16 %v594
    %v2942 = vunpack.c.l.b16 %v595
    %v2943 = vunpack.c.h.b16 %v595
    %v2944 = vunpack.c.l.b16 %v596
    %v2945 = vunpack.c.h.b16 %v596
    %v2946 = vunpack.c.l.b16 %v597
    %v2947 = vunpack.c.h.b16 %v597
    %v2948 = vunpack.c.l.b16 %v598
    %v2949 = vunpack.c.h.b16 %v598
    %v2950 = vunpack.c.l.b16 %v599
    %v2951 = vunpack.c.h.b16 %v599
    %v2952 = vunpack.c.l.b16 %v600
    %v2953 = vunpack.c.h.b16 %v600
    %v2954 = vunpack.c.l.b16 %v601
    %v2955 = vunpack.c.h.b16 %v601
    %v2956 = vunpack.c.l.b16 %v602
    %v2957 = vunpack.c.h.b16 %v602
    %v2958 = vunpack.c.l.b16 %v603
    %v2959 = vunpack.c.h.b16 %v603
    %v2960 = vunpack.c.l.b16 %v604
    %v2961 = vunpack.c.h.b16 %v604
    %v2962 = vunpack.c.l.b16 %v605
    %v2963 = vunpack.c.h.b16 %v605
    %v2964 = vunpack.c.l.b16 %v606
    %v2965 = vunpack.c.h.b16 %v606
    %v2966 = vunpack.c.l.b16 %v607
    %v2967 = vunpack.c.h.b16 %v607
    %v2968 = vunpack.c.l.b16 %v608
    %v2969 = vunpack.c.h.b16 %v608
    %v2970 = vunpack.c.l.b16 %v609
    %v2971 = vunpack.c.h.b16 %v609
    %v2972 = vunpack.c.l.b16 %v610
    %v2973 = vunpack.c.h.b16 %v610
    %v2974 = vunpack.c.l.b16 %v611
    %v2975 = vunpack.c.h.b16 %v611
    %v2976 = vunpack.c.l.b16 %v612
    %v2977 = vunpack.c.h.b16 %v612
    %v2978 = vunpack.c.l.b16 %v613
    %v2979 = vunpack.c.h.b16 %v613
    %v2980 = vunpack.c.l.b16 %v614
    %v2981 = vunpack.c.h.b16 %v614
    %v2982 = vunpack.c.l.b16 %v615
    %v2983 = vunpack.c.h.b16 %v615
    %v2984 = vunpack.c.l.b16 %v616
    %v2985 = vunpack.c.h.b16 %v616
    %v2986 = vunpack.c.l.b16 %v617
    %v2987 = vunpack.c.h.b16 %v617
    %v2988 = vunpack.c.l.b16 %v618
    %v2989 = vunpack.c.h.b16 %v618
    %v2990 = vunpack.c.l.b16 %v619
    %v2991 = vunpack.c.h.b16 %v619
    %v2992 = vunpack.c.l.b16 %v620
    %v2993 = vunpack.c.h.b16 %v620
    %v2994 = vunpack.c.l.b16 %v621
    %v2995 = vunpack.c.h.b16 %v621
    %v2996 = vunpack.c.l.b16 %v622
    %v2997 = vunpack.c.h.b16 %v622
    %v2998 = vunpack.c.l.b16 %v623
    %v2999 = vunpack.c.h.b16 %v623
    %v3000 = vunpack.c.l.b16 %v624
    %v3001 = vunpack.c.h.b16 %v624
    %v3002 = vunpack.c.l.b16 %v625
    %v3003 = vunpack.c.h.b16 %v625
    %v3004 = vunpack.c.l.b16 %v626
    %v3005 = vunpack.c.h.b16 %v626
    %v3006 = vunpack.c.l.b16 %v627
    %v3007 = vunpack.c.h.b16 %v627
    %v3008 = vunpack.c.l.b16 %v628
    %v3009 = vunpack.c.h.b16 %v628
    %v3010 = vunpack.c.l.b16 %v629
    %v3011 = vunpack.c.h.b16 %v629
    %v3012 = vunpack.c.l.b16 %v630
    %v3013 = vunpack.c.h.b16 %v630
    %v3014 = vunpack.c.l.b16 %v631
    %v3015 = vunpack.c.h.b16 %v631
    %v3016 = vunpack.c.l.b16 %v632
    %v3017 = vunpack.c.h.b16 %v632
    %v3018 = vunpack.c.l.b16 %v633
    %v3019 = vunpack.c.h.b16 %v633
    %v3020 = vunpack.c.l.b16 %v634
    %v3021 = vunpack.c.h.b16 %v634
    %v3022 = vunpack.c.l.b16 %v635
    %v3023 = vunpack.c.h.b16 %v635
    %v3024 = vunpack.c.l.b16 %v636
    %v3025 = vunpack.c.h.b16 %v636
    %v3026 = vunpack.c.l.b16 %v637
    %v3027 = vunpack.c.h.b16 %v637
    %v3028 = vunpack.c.l.b16 %v638
    %v3029 = vunpack.c.h.b16 %v638
    %v3030 = vunpack.c.l.b16 %v639
    %v3031 = vunpack.c.h.b16 %v639
    %v3032 = vunpack.c.l.b16 %v640
    %v3033 = vunpack.c.h.b16 %v640
    %v3034 = vunpack.c.l.b16 %v641
    %v3035 = vunpack.c.h.b16 %v641
    %v3036 = vunpack.c.l.b16 %v642
    %v3037 = vunpack.c.h.b16 %v642
    %v3038 = vunpack.c.l.b16 %v643
    %v3039 = vunpack.c.h.b16 %v643
    %v3040 = vunpack.c.l.b16 %v644
    %v3041 = vunpack.c.h.b16 %v644
    %v3042 = vunpack.c.l.b16 %v645
    %v3043 = vunpack.c.h.b16 %v645
    %v3044 = vunpack.c.l.b16 %v646
    %v3045 = vunpack.c.h.b16 %v646
    %v3046 = vunpack.c.l.b16 %v647
    %v3047 = vunpack.c.h.b16 %v647
    %v3048 = vunpack.c.l.b16 %v648
    %v3049 = vunpack.c.h.b16 %v648
    %v3050 = vunpack.c.l.b16 %v649
    %v3051 = vunpack.c.h.b16 %v649
    %v3052 = vunpack.c.l.b16 %v650
    %v3053 = vunpack.c.h.b16 %v650
    %v3054 = vunpack.c.l.b16 %v651
    %v3055 = vunpack.c.h.b16 %v651
    %v3056 = vunpack.c.l.b16 %v652
    %v3057 = vunpack.c.h.b16 %v652
    %v3058 = vunpack.c.l.b16 %v653
    %v3059 = vunpack.c.h.b16 %v653
    %v3060 = vunpack.c.l.b16 %v654
    %v3061 = vunpack.c.h.b16 %v654
    %v3062 = vunpack.c.l.b16 %v655
    %v3063 = vunpack.c.h.b16 %v655
    %v3064 = vunpack.c.l.b16 %v656
    %v3065 = vunpack.c.h.b16 %v656
    %v3066 = vunpack.c.l.b16 %v657
    %v3067 = vunpack.c.h.b16 %v657
    %v3068 = vunpack.c.l.b16 %v658
    %v3069 = vunpack.c.h.b16 %v658
    %v3070 = vunpack.c.l.b16 %v659
    %v3071 = vunpack.c.h.b16 %v659
    %v3072 = vunpack.c.l.b16 %v660
    %v3073 = vunpack.c.h.b16 %v660
    %v3074 = vunpack.c.l.b16 %v661
    %v3075 = vunpack.c.h.b16 %v661
    %v3076 = vunpack.c.l.b16 %v662
    %v3077 = vunpack.c.h.b16 %v662
    %v3078 = vunpack.c.l.b16 %v663
    %v3079 = vunpack.c.h.b16 %v663
    %v3080 = vunpack.c.l.b16 %v664
    %v3081 = vunpack.c.h.b16 %v664
    %v3082 = vunpack.c.l.b16 %v665
    %v3083 = vunpack.c.h.b16 %v665
    %v3084 = vunpack.c.l.b16 %v666
    %v3085 = vunpack.c.h.b16 %v666
    %v3086 = vunpack.c.l.b16 %v667
    %v3087 = vunpack.c.h.b16 %v667
    %v3088 = vunpack.c.l.b16 %v668
    %v3089 = vunpack.c.h.b16 %v668
    %v3090 = vunpack.c.l.b16 %v669
    %v3091 = vunpack.c.h.b16 %v669
    %v3092 = vunpack.c.l.b16 %v670
    %v3093 = vunpack.c.h.b16 %v670
    %v3094 = vunpack.c.l.b16 %v671
    %v3095 = vunpack.c.h.b16 %v671
    %v3096 = vunpack.c.l.b16 %v672
    %v3097 = vunpack.c.h.b16 %v672
    %v3098 = vunpack.c.l.b16 %v673
    %v3099 = vunpack.c.h.b16 %v673
    %v3100 = vunpack.c.l.b16 %v674
    %v3101 = vunpack.c.h.b16 %v674
    %v3102 = vunpack.c.l.b16 %v675
    %v3103 = vunpack.c.h.b16 %v675
    %v3104 = vunpack.c.l.b16 %v676
    %v3105 = vunpack.c.h.b16 %v676
    %v3106 = vunpack.c.l.b16 %v677
    %v3107 = vunpack.c.h.b16 %v677
    %v3108 = vunpack.c.l.b16 %v678
    %v3109 = vunpack.c.h.b16 %v678
    %v3110 = vunpack.c.l.b16 %v679
    %v3111 = vunpack.c.h.b16 %v679
    %v3112 = vunpack.c.l.b16 %v680
    %v3113 = vunpack.c.h.b16 %v680
    %v3114 = vunpack.c.l.b16 %v681
    %v3115 = vunpack.c.h.b16 %v681
    %v3116 = vunpack.c.l.b16 %v682
    %v3117 = vunpack.c.h.b16 %v682
    %v3118 = vunpack.c.l.b16 %v683
    %v3119 = vunpack.c.h.b16 %v683
    %v3120 = vunpack.c.l.b16 %v684
    %v3121 = vunpack.c.h.b16 %v684
    %v3122 = vunpack.c.l.b16 %v685
    %v3123 = vunpack.c.h.b16 %v685
    %v3124 = vunpack.c.l.b16 %v686
    %v3125 = vunpack.c.h.b16 %v686
    %v3126 = vunpack.c.l.b16 %v687
    %v3127 = vunpack.c.h.b16 %v687
    %v3128 = vunpack.c.l.b16 %v688
    %v3129 = vunpack.c.h.b16 %v688
    %v3130 = vunpack.c.l.b16 %v689
    %v3131 = vunpack.c.h.b16 %v689
    %v3132 = vunpack.c.l.b16 %v690
    %v3133 = vunpack.c.h.b16 %v690
    %v3134 = vunpack.c.l.b16 %v691
    %v3135 = vunpack.c.h.b16 %v691
    %v3136 = vunpack.c.l.b16 %v692
    %v3137 = vunpack.c.h.b16 %v692
    %v3138 = vunpack.c.l.b16 %v693
    %v3139 = vunpack.c.h.b16 %v693
    %v3140 = vunpack.c.l.b16 %v694
    %v3141 = vunpack.c.h.b16 %v694
    %v3142 = vunpack.c.l.b16 %v695
    %v3143 = vunpack.c.h.b16 %v695
    %v3144 = vunpack.c.l.b16 %v696
    %v3145 = vunpack.c.h.b16 %v696
    %v3146 = vunpack.c.l.b16 %v697
    %v3147 = vunpack.c.h.b16 %v697
    %v3148 = vunpack.c.l.b16 %v698
    %v3149 = vunpack.c.h.b16 %v698
    %v3150 = vunpack.c.l.b16 %v699
    %v3151 = vunpack.c.h.b16 %v699
    %v3152 = vunpack.c.l.b16 %v700
    %v3153 = vunpack.c.h.b16 %v700
    %v3154 = vunpack.c.l.b16 %v701
    %v3155 = vunpack.c.h.b16 %v701
    %v3156 = vunpack.c.l.b16 %v702
    %v3157 = vunpack.c.h.b16 %v702
    %v3158 = vunpack.c.l.b16 %v703
    %v3159 = vunpack.c.h.b16 %v703
    %v3160 = vunpack.c.l.b16 %v704
    %v3161 = vunpack.c.h.b16 %v704
    %v3162 = vunpack.c.l.b16 %v705
    %v3163 = vunpack.c.h.b16 %v705
    %v3164 = vunpack.c.l.b16 %v706
    %v3165 = vunpack.c.h.b16 %v706
    %v3166 = vunpack.c.l.b16 %v707
    %v3167 = vunpack.c.h.b16 %v707
    %v3168 = vunpack.c.l.b16 %v708
    %v3169 = vunpack.c.h.b16 %v708
    %v3170 = vunpack.c.l.b16 %v709
    %v3171 = vunpack.c.h.b16 %v709
    %v3172 = vunpack.c.l.b16 %v710
    %v3173 = vunpack.c.h.b16 %v710
    %v3174 = vunpack.c.l.b16 %v711
    %v3175 = vunpack.c.h.b16 %v711
    %v3176 = vunpack.c.l.b16 %v712
    %v3177 = vunpack.c.h.b16 %v712
    %v3178 = vunpack.c.l.b16 %v713
    %v3179 = vunpack.c.h.b16 %v713
    %v3180 = vunpack.c.l.b16 %v714
    %v3181 = vunpack.c.h.b16 %v714
    %v3182 = vunpack.c.l.b16 %v715
    %v3183 = vunpack.c.h.b16 %v715
    %v3184 = vunpack.c.l.b16 %v716
    %v3185 = vunpack.c.h.b16 %v716
    %v3186 = vunpack.c.l.b16 %v717
    %v3187 = vunpack.c.h.b16 %v717
    %v3188 = vunpack.c.l.b16 %v718
    %v3189 = vunpack.c.h.b16 %v718
    %v3190 = vunpack.c.l.b16 %v719
    %v3191 = vunpack.c.h.b16 %v719
    %v3192 = vunpack.c.l.b16 %v720
    %v3193 = vunpack.c.h.b16 %v720
    %v3194 = vunpack.c.l.b16 %v721
    %v3195 = vunpack.c.h.b16 %v721
    %v3196 = vunpack.c.l.b16 %v722
    %v3197 = vunpack.c.h.b16 %v722
    %v3198 = vunpack.c.l.b16 %v723
    %v3199 = vunpack.c.h.b16 %v723
    %v3200 = vunpack.c.l.b16 %v724
    %v3201 = vunpack.c.h.b16 %v724
    %v3202 = vunpack.c.l.b16 %v725
    %v3203 = vunpack.c.h.b16 %v725
    %v3204 = vunpack.c.l.b16 %v726
    %v3205 = vunpack.c.h.b16 %v726
    %v3206 = vunpack.c.l.b16 %v727
    %v3207 = vunpack.c.h.b16 %v727
    %v3208 = vunpack.c.l.b16 %v728
    %v3209 = vunpack.c.h.b16 %v728
    %v3210 = vunpack.c.l.b16 %v729
    %v3211 = vunpack.c.h.b16 %v729
    %v3212 = vunpack.c.l.b16 %v730
    %v3213 = vunpack.c.h.b16 %v730
    %v3214 = vunpack.c.l.b16 %v731
    %v3215 = vunpack.c.h.b16 %v731
    %v3216 = vunpack.c.l.b16 %v732
    %v3217 = vunpack.c.h.b16 %v732
    %v3218 = vunpack.c.l.b16 %v733
    %v3219 = vunpack.c.h.b16 %v733
    %v3220 = vunpack.c.l.b16 %v734
    %v3221 = vunpack.c.h.b16 %v734
    %v3222 = vunpack.c.l.b16 %v735
    %v3223 = vunpack.c.h.b16 %v735
    %v3224 = vunpack.c.l.b16 %v736
    %v3225 = vunpack.c.h.b16 %v736
    %v3226 = vunpack.c.l.b16 %v737
    %v3227 = vunpack.c.h.b16 %v737
    %v3228 = vunpack.c.l.b16 %v738
    %v3229 = vunpack.c.h.b16 %v738
    %v3230 = vunpack.c.l.b16 %v739
    %v3231 = vunpack.c.h.b16 %v739
    %v3232 = vunpack.c.l.b16 %v740
    %v3233 = vunpack.c.h.b16 %v740
    %v3234 = vunpack.c.l.b16 %v741
    %v3235 = vunpack.c.h.b16 %v741
    %v3236 = vunpack.c.l.b16 %v742
    %v3237 = vunpack.c.h.b16 %v742
    %v3238 = vunpack.c.l.b16 %v743
    %v3239 = vunpack.c.h.b16 %v743
    %v3240 = vunpack.c.l.b16 %v744
    %v3241 = vunpack.c.h.b16 %v744
    %v3242 = vunpack.c.l.b16 %v745
    %v3243 = vunpack.c.h.b16 %v745
    %v3244 = vunpack.c.l.b16 %v746
    %v3245 = vunpack.c.h.b16 %v746
    %v3246 = vunpack.c.l.b16 %v747
    %v3247 = vunpack.c.h.b16 %v747
    %v3248 = vunpack.c.l.b16 %v748
    %v3249 = vunpack.c.h.b16 %v748
    %v3250 = vunpack.c.l.b16 %v749
    %v3251 = vunpack.c.h.b16 %v749
    %v3252 = vunpack.c.l.b16 %v750
    %v3253 = vunpack.c.h.b16 %v750
    %v3254 = vunpack.c.l.b16 %v751
    %v3255 = vunpack.c.h.b16 %v751
    %v3256 = vunpack.c.l.b16 %v752
    %v3257 = vunpack.c.h.b16 %v752
    %v3258 = vunpack.c.l.b16 %v753
    %v3259 = vunpack.c.h.b16 %v753
    %v3260 = vunpack.c.l.b16 %v754
    %v3261 = vunpack.c.h.b16 %v754
    %v3262 = vunpack.c.l.b16 %v755
    %v3263 = vunpack.c.h.b16 %v755
    %v3264 = vunpack.c.l.b16 %v756
    %v3265 = vunpack.c.h.b16 %v756
    %v3266 = vunpack.c.l.b16 %v757
    %v3267 = vunpack.c.h.b16 %v757
    %v3268 = vunpack.c.l.b16 %v758
    %v3269 = vunpack.c.h.b16 %v758
    %v3270 = vunpack.c.l.b16 %v759
    %v3271 = vunpack.c.h.b16 %v759
    %v3272 = vunpack.c.l.b16 %v760
    %v3273 = vunpack.c.h.b16 %v760
    %v3274 = vunpack.c.l.b16 %v761
    %v3275 = vunpack.c.h.b16 %v761
    %v3276 = vunpack.c.l.b16 %v762
    %v3277 = vunpack.c.h.b16 %v762
    %v3278 = vunpack.c.l.b16 %v763
    %v3279 = vunpack.c.h.b16 %v763
    %v3280 = vunpack.c.l.b16 %v764
    %v3281 = vunpack.c.h.b16 %v764
    %v3282 = vunpack.c.l.b16 %v765
    %v3283 = vunpack.c.h.b16 %v765
    %v3284 = vunpack.c.l.b16 %v766
    %v3285 = vunpack.c.h.b16 %v766
    %v3286 = vunpack.c.l.b16 %v767
    %v3287 = vunpack.c.h.b16 %v767
    %v3288 = vunpack.c.l.b16 %v768
    %v3289 = vunpack.c.h.b16 %v768
    %v3290 = vunpack.c.l.b16 %v769
    %v3291 = vunpack.c.h.b16 %v769
    %v3292 = vunpack.c.l.b16 %v770
    %v3293 = vunpack.c.h.b16 %v770
    %v3294 = vunpack.c.l.b16 %v771
    %v3295 = vunpack.c.h.b16 %v771
    %v3296 = vunpack.c.l.b16 %v772
    %v3297 = vunpack.c.h.b16 %v772
    %v3298 = vunpack.c.l.b16 %v773
    %v3299 = vunpack.c.h.b16 %v773
    %v3300 = vunpack.c.l.b16 %v774
    %v3301 = vunpack.c.h.b16 %v774
    %v3302 = vunpack.c.l.b16 %v775
    %v3303 = vunpack.c.h.b16 %v775
    %v3304 = vunpack.c.l.b16 %v776
    %v3305 = vunpack.c.h.b16 %v776
    %v3306 = vunpack.c.l.b16 %v777
    %v3307 = vunpack.c.h.b16 %v777
    %v3308 = vunpack.c.l.b16 %v778
    %v3309 = vunpack.c.h.b16 %v778
    %v3310 = vunpack.c.l.b16 %v779
    %v3311 = vunpack.c.h.b16 %v779
    %v3312 = vunpack.c.l.b16 %v780
    %v3313 = vunpack.c.h.b16 %v780
    %v3314 = vunpack.c.l.b16 %v781
    %v3315 = vunpack.c.h.b16 %v781
    %v3316 = vunpack.c.l.b16 %v782
    %v3317 = vunpack.c.h.b16 %v782
    %v3318 = vunpack.c.l.b16 %v783
    %v3319 = vunpack.c.h.b16 %v783
    %v3320 = vunpack.c.l.b16 %v784
    %v3321 = vunpack.c.h.b16 %v784
    %v3322 = vunpack.c.l.b16 %v785
    %v3323 = vunpack.c.h.b16 %v785
    %v3324 = vunpack.c.l.b16 %v786
    %v3325 = vunpack.c.h.b16 %v786
    %v3326 = vunpack.c.l.b16 %v787
    %v3327 = vunpack.c.h.b16 %v787
    %v3328 = vunpack.c.l.b16 %v788
    %v3329 = vunpack.c.h.b16 %v788
    %v3330 = vunpack.c.l.b16 %v789
    %v3331 = vunpack.c.h.b16 %v789
    %v3332 = vunpack.c.l.b16 %v790
    %v3333 = vunpack.c.h.b16 %v790
    %v3334 = vunpack.c.l.b16 %v791
    %v3335 = vunpack.c.h.b16 %v791
    %v3336 = vunpack.c.l.b16 %v792
    %v3337 = vunpack.c.h.b16 %v792
    %v3338 = vunpack.c.l.b16 %v793
    %v3339 = vunpack.c.h.b16 %v793
    %v3340 = vunpack.c.l.b16 %v794
    %v3341 = vunpack.c.h.b16 %v794
    %v3342 = vunpack.c.l.b16 %v795
    %v3343 = vunpack.c.h.b16 %v795
    %v3344 = vunpack.c.l.b16 %v796
    %v3345 = vunpack.c.h.b16 %v796
    %v3346 = vunpack.c.l.b16 %v797
    %v3347 = vunpack.c.h.b16 %v797
    %v3348 = vunpack.c.l.b16 %v798
    %v3349 = vunpack.c.h.b16 %v798
    %v3350 = vunpack.c.l.b16 %v799
    %v3351 = vunpack.c.h.b16 %v799
    %v3352 = vunpack.c.l.b16 %v800
    %v3353 = vunpack.c.h.b16 %v800
    %v3354 = vunpack.c.l.b16 %v801
    %v3355 = vunpack.c.h.b16 %v801
    %v3356 = vunpack.c.l.b16 %v802
    %v3357 = vunpack.c.h.b16 %v802
    %v3358 = vunpack.c.l.b16 %v803
    %v3359 = vunpack.c.h.b16 %v803
    %v3360 = vunpack.c.l.b16 %v804
    %v3361 = vunpack.c.h.b16 %v804
    %v3362 = vunpack.c.l.b16 %v805
    %v3363 = vunpack.c.h.b16 %v805
    %v3364 = vunpack.c.l.b16 %v806
    %v3365 = vunpack.c.h.b16 %v806
    %v3366 = vunpack.c.l.b16 %v807
    %v3367 = vunpack.c.h.b16 %v807
    %v3368 = vunpack.c.l.b16 %v808
    %v3369 = vunpack.c.h.b16 %v808
    %v3370 = vunpack.c.l.b16 %v809
    %v3371 = vunpack.c.h.b16 %v809
    %v3372 = vunpack.c.l.b16 %v810
    %v3373 = vunpack.c.h.b16 %v810
    %v3374 = vunpack.c.l.b16 %v811
    %v3375 = vunpack.c.h.b16 %v811
    %v3376 = vunpack.c.l.b16 %v812
    %v3377 = vunpack.c.h.b16 %v812
    %v3378 = vunpack.c.l.b16 %v813
    %v3379 = vunpack.c.h.b16 %v813
    %v3380 = vunpack.c.l.b16 %v814
    %v3381 = vunpack.c.h.b16 %v814
    %v3382 = vunpack.c.l.b16 %v815
    %v3383 = vunpack.c.h.b16 %v815
    %v3384 = vunpack.c.l.b16 %v816
    %v3385 = vunpack.c.h.b16 %v816
    %v3386 = vunpack.c.l.b16 %v817
    %v3387 = vunpack.c.h.b16 %v817
    %v3388 = vunpack.c.l.b16 %v818
    %v3389 = vunpack.c.h.b16 %v818
    %v3390 = vunpack.c.l.b16 %v819
    %v3391 = vunpack.c.h.b16 %v819
    %v3392 = vunpack.c.l.b16 %v820
    %v3393 = vunpack.c.h.b16 %v820
    %v3394 = vunpack.c.l.b16 %v821
    %v3395 = vunpack.c.h.b16 %v821
    %v3396 = vunpack.c.l.b16 %v822
    %v3397 = vunpack.c.h.b16 %v822
    %v3398 = vunpack.c.l.b16 %v823
    %v3399 = vunpack.c.h.b16 %v823
    %v3400 = vunpack.c.l.b16 %v824
    %v3401 = vunpack.c.h.b16 %v824
    %v3402 = vunpack.c.l.b16 %v825
    %v3403 = vunpack.c.h.b16 %v825
    %v3404 = vunpack.c.l.b16 %v826
    %v3405 = vunpack.c.h.b16 %v826
    %v3406 = vunpack.c.l.b16 %v827
    %v3407 = vunpack.c.h.b16 %v827
    %v3408 = vunpack.c.l.b16 %v828
    %v3409 = vunpack.c.h.b16 %v828
    %v3410 = vunpack.c.l.b16 %v829
    %v3411 = vunpack.c.h.b16 %v829
    %v3412 = vunpack.c.l.b16 %v830
    %v3413 = vunpack.c.h.b16 %v830
    %v3414 = vunpack.c.l.b16 %v831
    %v3415 = vunpack.c.h.b16 %v831
    %v3416 = vunpack.c.l.b16 %v832
    %v3417 = vunpack.c.h.b16 %v832
    %v3418 = vunpack.c.l.b16 %v833
    %v3419 = vunpack.c.h.b16 %v833
    %v3420 = vunpack.c.l.b16 %v834
    %v3421 = vunpack.c.h.b16 %v834
    %v3422 = vunpack.c.l.b16 %v835
    %v3423 = vunpack.c.h.b16 %v835
    %v3424 = vunpack.c.l.b16 %v836
    %v3425 = vunpack.c.h.b16 %v836
    %v3426 = vunpack.c.l.b16 %v837
    %v3427 = vunpack.c.h.b16 %v837
    %v3428 = vunpack.c.l.b16 %v838
    %v3429 = vunpack.c.h.b16 %v838
    %v3430 = vunpack.c.l.b16 %v839
    %v3431 = vunpack.c.h.b16 %v839
    %v3432 = vunpack.c.l.b16 %v840
    %v3433 = vunpack.c.h.b16 %v840
    %v3434 = vunpack.c.l.b16 %v841
    %v3435 = vunpack.c.h.b16 %v841
    %v3436 = vunpack.c.l.b16 %v842
    %v3437 = vunpack.c.h.b16 %v842
    %v3438 = vunpack.c.l.b16 %v843
    %v3439 = vunpack.c.h.b16 %v843
    %v3440 = vunpack.c.l.b16 %v844
    %v3441 = vunpack.c.h.b16 %v844
    %v3442 = vunpack.c.l.b16 %v845
    %v3443 = vunpack.c.h.b16 %v845
    %v3444 = vunpack.c.l.b16 %v846
    %v3445 = vunpack.c.h.b16 %v846
    %v3446 = vunpack.c.l.b16 %v847
    %v3447 = vunpack.c.h.b16 %v847
    %v3448 = vunpack.c.l.b16 %v848
    %v3449 = vunpack.c.h.b16 %v848
    %v3450 = vunpack.c.l.b16 %v849
    %v3451 = vunpack.c.h.b16 %v849
    %v3452 = vunpack.c.l.b16 %v850
    %v3453 = vunpack.c.h.b16 %v850
    %v3454 = vunpack.c.l.b16 %v851
    %v3455 = vunpack.c.h.b16 %v851
    %v3456 = vunpack.c.l.b16 %v852
    %v3457 = vunpack.c.h.b16 %v852
    %v3458 = vunpack.c.l.b16 %v853
    %v3459 = vunpack.c.h.b16 %v853
    %v3460 = vunpack.c.l.b16 %v854
    %v3461 = vunpack.c.h.b16 %v854
    %v3462 = vunpack.c.l.b16 %v855
    %v3463 = vunpack.c.h.b16 %v855
    %v3464 = vunpack.c.l.b16 %v856
    %v3465 = vunpack.c.h.b16 %v856
    %v3466 = vunpack.c.l.b16 %v857
    %v3467 = vunpack.c.h.b16 %v857
    %v3468 = vunpack.c.l.b16 %v858
    %v3469 = vunpack.c.h.b16 %v858
    %v3470 = vunpack.c.l.b16 %v859
    %v3471 = vunpack.c.h.b16 %v859
    %v3472 = vunpack.c.l.b16 %v860
    %v3473 = vunpack.c.h.b16 %v860
    %v3474 = vunpack.c.l.b16 %v861
    %v3475 = vunpack.c.h.b16 %v861
    %v3476 = vunpack.c.l.b16 %v862
    %v3477 = vunpack.c.h.b16 %v862
    %v3478 = vunpack.c.l.b16 %v863
    %v3479 = vunpack.c.h.b16 %v863
    %v3480 = vunpack.c.l.b16 %v864
    %v3481 = vunpack.c.h.b16 %v864
    %v3482 = vunpack.c.l.b16 %v865
    %v3483 = vunpack.c.h.b16 %v865
    %v3484 = vunpack.c.l.b16 %v866
    %v3485 = vunpack.c.h.b16 %v866
    %v3486 = vunpack.c.l.b16 %v867
    %v3487 = vunpack.c.h.b16 %v867
    %v3488 = vunpack.c.l.b16 %v868
    %v3489 = vunpack.c.h.b16 %v868
    %v3490 = vunpack.c.l.b16 %v869
    %v3491 = vunpack.c.h.b16 %v869
    %v3492 = vunpack.c.l.b16 %v870
    %v3493 = vunpack.c.h.b16 %v870
    %v3494 = vunpack.c.l.b16 %v871
    %v3495 = vunpack.c.h.b16 %v871
    %v3496 = vunpack.c.l.b16 %v872
    %v3497 = vunpack.c.h.b16 %v872
    %v3498 = vunpack.c.l.b16 %v873
    %v3499 = vunpack.c.h.b16 %v873
    %v3500 = vunpack.c.l.b16 %v874
    %v3501 = vunpack.c.h.b16 %v874
    %v3502 = vunpack.c.l.b16 %v875
    %v3503 = vunpack.c.h.b16 %v875
    %v3504 = vunpack.c.l.b16 %v876
    %v3505 = vunpack.c.h.b16 %v876
    %v3506 = vunpack.c.l.b16 %v877
    %v3507 = vunpack.c.h.b16 %v877
    %v3508 = vunpack.c.l.b16 %v878
    %v3509 = vunpack.c.h.b16 %v878
    %v3510 = vunpack.c.l.b16 %v879
    %v3511 = vunpack.c.h.b16 %v879
    %v3512 = vunpack.c.l.b16 %v880
    %v3513 = vunpack.c.h.b16 %v880
    %v3514 = vunpack.c.l.b16 %v881
    %v3515 = vunpack.c.h.b16 %v881
    %v3516 = vunpack.c.l.b16 %v882
    %v3517 = vunpack.c.h.b16 %v882
    %v3518 = vunpack.c.l.b16 %v883
    %v3519 = vunpack.c.h.b16 %v883
    %v3520 = vunpack.c.l.b16 %v884
    %v3521 = vunpack.c.h.b16 %v884
    %v3522 = vunpack.c.l.b16 %v885
    %v3523 = vunpack.c.h.b16 %v885
    %v3524 = vunpack.c.l.b16 %v886
    %v3525 = vunpack.c.h.b16 %v886
    %v3526 = vunpack.c.l.b16 %v887
    %v3527 = vunpack.c.h.b16 %v887
    %v3528 = vunpack.c.l.b16 %v888
    %v3529 = vunpack.c.h.b16 %v888
    %v3530 = vunpack.c.l.b16 %v889
    %v3531 = vunpack.c.h.b16 %v889
    %v3532 = vunpack.c.l.b16 %v890
    %v3533 = vunpack.c.h.b16 %v890
    %v3534 = vunpack.c.l.b16 %v891
    %v3535 = vunpack.c.h.b16 %v891
    %v3536 = vunpack.c.l.b16 %v892
    %v3537 = vunpack.c.h.b16 %v892
    %v3538 = vunpack.c.l.b16 %v893
    %v3539 = vunpack.c.h.b16 %v893
    %v3540 = vunpack.c.l.b16 %v894
    %v3541 = vunpack.c.h.b16 %v894
    %v3542 = vunpack.c.l.b16 %v895
    %v3543 = vunpack.c.h.b16 %v895
    %v3544 = vunpack.c.l.b16 %v896
    %v3545 = vunpack.c.h.b16 %v896
    %v3546 = vunpack.c.l.b16 %v897
    %v3547 = vunpack.c.h.b16 %v897
    %v3548 = vunpack.c.l.b16 %v898
    %v3549 = vunpack.c.h.b16 %v898
    %v3550 = vunpack.c.l.b16 %v899
    %v3551 = vunpack.c.h.b16 %v899
    %v3552 = vunpack.c.l.b16 %v900
    %v3553 = vunpack.c.h.b16 %v900
    %v3554 = vunpack.c.l.b16 %v901
    %v3555 = vunpack.c.h.b16 %v901
    %v3556 = vunpack.c.l.b16 %v902
    %v3557 = vunpack.c.h.b16 %v902
    %v3558 = vunpack.c.l.b16 %v903
    %v3559 = vunpack.c.h.b16 %v903
    %v3560 = vunpack.c.l.b16 %v904
    %v3561 = vunpack.c.h.b16 %v904
    %v3562 = vunpack.c.l.b16 %v905
    %v3563 = vunpack.c.h.b16 %v905
    %v3564 = vunpack.c.l.b16 %v906
    %v3565 = vunpack.c.h.b16 %v906
    %v3566 = vunpack.c.l.b16 %v907
    %v3567 = vunpack.c.h.b16 %v907
    %v3568 = vunpack.c.l.b16 %v908
    %v3569 = vunpack.c.h.b16 %v908
    %v3570 = vunpack.c.l.b16 %v909
    %v3571 = vunpack.c.h.b16 %v909
    %v3572 = vunpack.c.l.b16 %v910
    %v3573 = vunpack.c.h.b16 %v910
    %v3574 = vunpack.c.l.b16 %v911
    %v3575 = vunpack.c.h.b16 %v911
    %v3576 = vunpack.c.l.b16 %v912
    %v3577 = vunpack.c.h.b16 %v912
    %v3578 = vunpack.c.l.b16 %v913
    %v3579 = vunpack.c.h.b16 %v913
    %v3580 = vunpack.c.l.b16 %v914
    %v3581 = vunpack.c.h.b16 %v914
    %v3582 = vunpack.c.l.b16 %v915
    %v3583 = vunpack.c.h.b16 %v915
    %v3584 = vunpack.c.l.b16 %v916
    %v3585 = vunpack.c.h.b16 %v916
    %v3586 = vunpack.c.l.b16 %v917
    %v3587 = vunpack.c.h.b16 %v917
    %v3588 = vunpack.c.l.b16 %v918
    %v3589 = vunpack.c.h.b16 %v918
    %v3590 = vunpack.c.l.b16 %v919
    %v3591 = vunpack.c.h.b16 %v919
    %v3592 = vunpack.c.l.b16 %v920
    %v3593 = vunpack.c.h.b16 %v920
    %v3594 = vunpack.c.l.b16 %v921
    %v3595 = vunpack.c.h.b16 %v921
    %v3596 = vunpack.c.l.b16 %v922
    %v3597 = vunpack.c.h.b16 %v922
    %v3598 = vunpack.c.l.b16 %v923
    %v3599 = vunpack.c.h.b16 %v923
    %v3600 = vunpack.c.l.b16 %v924
    %v3601 = vunpack.c.h.b16 %v924
    %v3602 = vunpack.c.l.b16 %v925
    %v3603 = vunpack.c.h.b16 %v925
    %v3604 = vunpack.c.l.b16 %v926
    %v3605 = vunpack.c.h.b16 %v926
    %v3606 = vunpack.c.l.b16 %v927
    %v3607 = vunpack.c.h.b16 %v927
    %v3608 = vunpack.c.l.b16 %v928
    %v3609 = vunpack.c.h.b16 %v928
    %v3610 = vunpack.c.l.b16 %v929
    %v3611 = vunpack.c.h.b16 %v929
    %v3612 = vunpack.c.l.b16 %v930
    %v3613 = vunpack.c.h.b16 %v930
    %v3614 = vunpack.c.l.b16 %v931
    %v3615 = vunpack.c.h.b16 %v931
    %v3616 = vunpack.c.l.b16 %v932
    %v3617 = vunpack.c.h.b16 %v932
    %v3618 = vunpack.c.l.b16 %v933
    %v3619 = vunpack.c.h.b16 %v933
    %v3620 = vunpack.c.l.b16 %v934
    %v3621 = vunpack.c.h.b16 %v934
    %v3622 = vunpack.c.l.b16 %v935
    %v3623 = vunpack.c.h.b16 %v935
    %v3624 = vpack.c.b16 %v1914, %v1896
    %v3625 = vpack.c.b16 %v1915, %v1897
    %v3626 = vpack.c.b16 %v1916, %v1898
    %v3627 = vpack.c.b16 %v1917, %v1899
    %v3628 = vpack.c.b16 %v1918, %v1900
    %v3629 = vpack.c.b16 %v1919, %v1901
    %v3630 = vpack.c.b16 %v1920, %v1902
    %v3631 = vpack.c.b16 %v1921, %v1903
    %v3632 = vpack.c.b16 %v1922, %v1904
    %v3633 = vpack.c.b16 %v1923, %v1905
    %v3634 = vpack.c.b16 %v1924, %v1906
    %v3635 = vpack.c.b16 %v1925, %v1907
    %v3636 = vpack.c.b16 %v1926, %v1908
    %v3637 = vpack.c.b16 %v1927, %v1909
    %v3638 = vpack.c.b16 %v1928, %v1910
    %v3639 = vpack.c.b16 %v1929, %v1911
    %v3640 = vpack.c.b16 %v1930, %v1912
    %v3641 = vpack.c.b16 %v1931, %v1913
    %v3642 = vpack.c.b16 %v1950, %v1932
    %v3643 = vpack.c.b16 %v1951, %v1933
    %v3644 = vpack.c.b16 %v1952, %v1934
    %v3645 = vpack.c.b16 %v1953, %v1935
    %v3646 = vpack.c.b16 %v1954, %v1936
    %v3647 = vpack.c.b16 %v1955, %v1937
    %v3648 = vpack.c.b16 %v1956, %v1938
    %v3649 = vpack.c.b16 %v1957, %v1939
    %v3650 = vpack.c.b16 %v1958, %v1940
    %v3651 = vpack.c.b16 %v1959, %v1941
    %v3652 = vpack.c.b16 %v1960, %v1942
    %v3653 = vpack.c.b16 %v1961, %v1943
    %v3654 = vpack.c.b16 %v1962, %v1944
    %v3655 = vpack.c.b16 %v1963, %v1945
    %v3656 = vpack.c.b16 %v1964, %v1946
    %v3657 = vpack.c.b16 %v1965, %v1947
    %v3658 = vpack.c.b16 %v1966, %v1948
    %v3659 = vpack.c.b16 %v1967, %v1949
    %v3660 = vpack.c.b16 %v1986, %v1968
    %v3661 = vpack.c.b16 %v1987, %v1969
    %v3662 = vpack.c.b16 %v1988, %v1970
    %v3663 = vpack.c.b16 %v1989, %v1971
    %v3664 = vpack.c.b16 %v1990, %v1972
    %v3665 = vpack.c.b16 %v1991, %v1973
    %v3666 = vpack.c.b16 %v1992, %v1974
    %v3667 = vpack.c.b16 %v1993, %v1975
    %v3668 = vpack.c.b16 %v1994, %v1976
    %v3669 = vpack.c.b16 %v1995, %v1977
    %v3670 = vpack.c.b16 %v1996, %v1978
    %v3671 = vpack.c.b16 %v1997, %v1979
    %v3672 = vpack.c.b16 %v1998, %v1980
    %v3673 = vpack.c.b16 %v1999, %v1981
    %v3674 = vpack.c.b16 %v2000, %v1982
    %v3675 = vpack.c.b16 %v2001, %v1983
    %v3676 = vpack.c.b16 %v2002, %v1984
    %v3677 = vpack.c.b16 %v2003, %v1985
    %v3678 = vpack.c.b16 %v2022, %v2004
    %v3679 = vpack.c.b16 %v2023, %v2005
    %v3680 = vpack.c.b16 %v2024, %v2006
    %v3681 = vpack.c.b16 %v2025, %v2007
    %v3682 = vpack.c.b16 %v2026, %v2008
    %v3683 = vpack.c.b16 %v2027, %v2009
    %v3684 = vpack.c.b16 %v2028, %v2010
    %v3685 = vpack.c.b16 %v2029, %v2011
    %v3686 = vpack.c.b16 %v2030, %v2012
    %v3687 = vpack.c.b16 %v2031, %v2013
    %v3688 = vpack.c.b16 %v2032, %v2014
    %v3689 = vpack.c.b16 %v2033, %v2015
    %v3690 = vpack.c.b16 %v2034, %v2016
    %v3691 = vpack.c.b16 %v2035, %v2017
    %v3692 = vpack.c.b16 %v2036, %v2018
    %v3693 = vpack.c.b16 %v2037, %v2019
    %v3694 = vpack.c.b16 %v2038, %v2020
    %v3695 = vpack.c.b16 %v2039, %v2021
    %v3696 = vpack.c.b16 %v2058, %v2040
    %v3697 = vpack.c.b16 %v2059, %v2041
    %v3698 = vpack.c.b16 %v2060, %v2042
    %v3699 = vpack.c.b16 %v2061, %v2043
    %v3700 = vpack.c.b16 %v2062, %v2044
    %v3701 = vpack.c.b16 %v2063, %v2045
    %v3702 = vpack.c.b16 %v2064, %v2046
    %v3703 = vpack.c.b16 %v2065, %v2047
    %v3704 = vpack.c.b16 %v2066, %v2048
    %v3705 = vpack.c.b16 %v2067, %v2049
    %v3706 = vpack.c.b16 %v2068, %v2050
    %v3707 = vpack.c.b16 %v2069, %v2051
    %v3708 = vpack.c.b16 %v2070, %v2052
    %v3709 = vpack.c.b16 %v2071, %v2053
    %v3710 = vpack.c.b16 %v2072, %v2054
    %v3711 = vpack.c.b16 %v2073, %v2055
    %v3712 = vpack.c.b16 %v2074, %v2056
    %v3713 = vpack.c.b16 %v2075, %v2057
    %v3714 = vpack.c.b16 %v2094, %v2076
    %v3715 = vpack.c.b16 %v2095, %v2077
    %v3716 = vpack.c.b16 %v2096, %v2078
    %v3717 = vpack.c.b16 %v2097, %v2079
    %v3718 = vpack.c.b16 %v2098, %v2080
    %v3719 = vpack.c.b16 %v2099, %v2081
    %v3720 = vpack.c.b16 %v2100, %v2082
    %v3721 = vpack.c.b16 %v2101, %v2083
    %v3722 = vpack.c.b16 %v2102, %v2084
    %v3723 = vpack.c.b16 %v2103, %v2085
    %v3724 = vpack.c.b16 %v2104, %v2086
    %v3725 = vpack.c.b16 %v2105, %v2087
    %v3726 = vpack.c.b16 %v2106, %v2088
    %v3727 = vpack.c.b16 %v2107, %v2089
    %v3728 = vpack.c.b16 %v2108, %v2090
    %v3729 = vpack.c.b16 %v2109, %v2091
    %v3730 = vpack.c.b16 %v2110, %v2092
    %v3731 = vpack.c.b16 %v2111, %v2093
    %v3732 = vpack.c.b16 %v2130, %v2112
    %v3733 = vpack.c.b16 %v2131, %v2113
    %v3734 = vpack.c.b16 %v2132, %v2114
    %v3735 = vpack.c.b16 %v2133, %v2115
    %v3736 = vpack.c.b16 %v2134, %v2116
    %v3737 = vpack.c.b16 %v2135, %v2117
    %v3738 = vpack.c.b16 %v2136, %v2118
    %v3739 = vpack.c.b16 %v2137, %v2119
    %v3740 = vpack.c.b16 %v2138, %v2120
    %v3741 = vpack.c.b16 %v2139, %v2121
    %v3742 = vpack.c.b16 %v2140, %v2122
    %v3743 = vpack.c.b16 %v2141, %v2123
    %v3744 = vpack.c.b16 %v2142, %v2124
    %v3745 = vpack.c.b16 %v2143, %v2125
    %v3746 = vpack.c.b16 %v2144, %v2126
    %v3747 = vpack.c.b16 %v2145, %v2127
    %v3748 = vpack.c.b16 %v2146, %v2128
    %v3749 = vpack.c.b16 %v2147, %v2129
    %v3750 = vpack.c.b16 %v2166, %v2148
    %v3751 = vpack.c.b16 %v2167, %v2149
    %v3752 = vpack.c.b16 %v2168, %v2150
    %v3753 = vpack.c.b16 %v2169, %v2151
    %v3754 = vpack.c.b16 %v2170, %v2152
    %v3755 = vpack.c.b16 %v2171, %v2153
    %v3756 = vpack.c.b16 %v2172, %v2154
    %v3757 = vpack.c.b16 %v2173, %v2155
    %v3758 = vpack.c.b16 %v2174, %v2156
    %v3759 = vpack.c.b16 %v2175, %v2157
    %v3760 = vpack.c.b16 %v2176, %v2158
    %v3761 = vpack.c.b16 %v2177, %v2159
    %v3762 = vpack.c.b16 %v2178, %v2160
    %v3763 = vpack.c.b16 %v2179, %v2161
    %v3764 = vpack.c.b16 %v2180, %v2162
    %v3765 = vpack.c.b16 %v2181, %v2163
    %v3766 = vpack.c.b16 %v2182, %v2164
    %v3767 = vpack.c.b16 %v2183, %v2165
    %v3768 = vpack.c.b16 %v2202, %v2184
    %v3769 = vpack.c.b16 %v2203, %v2185
    %v3770 = vpack.c.b16 %v2204, %v2186
    %v3771 = vpack.c.b16 %v2205, %v2187
    %v3772 = vpack.c.b16 %v2206, %v2188
    %v3773 = vpack.c.b16 %v2207, %v2189
    %v3774 = vpack.c.b16 %v2208, %v2190
    %v3775 = vpack.c.b16 %v2209, %v2191
    %v3776 = vpack.c.b16 %v2210, %v2192
    %v3777 = vpack.c.b16 %v2211, %v2193
    %v3778 = vpack.c.b16 %v2212, %v2194
    %v3779 = vpack.c.b16 %v2213, %v2195
    %v3780 = vpack.c.b16 %v2214, %v2196
    %v3781 = vpack.c.b16 %v2215, %v2197
    %v3782 = vpack.c.b16 %v2216, %v2198
    %v3783 = vpack.c.b16 %v2217, %v2199
    %v3784 = vpack.c.b16 %v2218, %v2200
    %v3785 = vpack.c.b16 %v2219, %v2201
    %v3786 = vpack.c.b16 %v2238, %v2220
    %v3787 = vpack.c.b16 %v2239, %v2221
    %v3788 = vpack.c.b16 %v2240, %v2222
    %v3789 = vpack.c.b16 %v2241, %v2223
    %v3790 = vpack.c.b16 %v2242, %v2224
    %v3791 = vpack.c.b16 %v2243, %v2225
    %v3792 = vpack.c.b16 %v2244, %v2226
    %v3793 = vpack.c.b16 %v2245, %v2227
    %v3794 = vpack.c.b16 %v2246, %v2228
    %v3795 = vpack.c.b16 %v2247, %v2229
    %v3796 = vpack.c.b16 %v2248, %v2230
    %v3797 = vpack.c.b16 %v2249, %v2231
    %v3798 = vpack.c.b16 %v2250, %v2232
    %v3799 = vpack.c.b16 %v2251, %v2233
    %v3800 = vpack.c.b16 %v2252, %v2234
    %v3801 = vpack.c.b16 %v2253, %v2235
    %v3802 = vpack.c.b16 %v2254, %v2236
    %v3803 = vpack.c.b16 %v2255, %v2237
    %v3804 = vpack.c.b16 %v2274, %v2256
    %v3805 = vpack.c.b16 %v2275, %v2257
    %v3806 = vpack.c.b16 %v2276, %v2258
    %v3807 = vpack.c.b16 %v2277, %v2259
    %v3808 = vpack.c.b16 %v2278, %v2260
    %v3809 = vpack.c.b16 %v2279, %v2261
    %v3810 = vpack.c.b16 %v2280, %v2262
    %v3811 = vpack.c.b16 %v2281, %v2263
    %v3812 = vpack.c.b16 %v2282, %v2264
    %v3813 = vpack.c.b16 %v2283, %v2265
    %v3814 = vpack.c.b16 %v2284, %v2266
    %v3815 = vpack.c.b16 %v2285, %v2267
    %v3816 = vpack.c.b16 %v2286, %v2268
    %v3817 = vpack.c.b16 %v2287, %v2269
    %v3818 = vpack.c.b16 %v2288, %v2270
    %v3819 = vpack.c.b16 %v2289, %v2271
    %v3820 = vpack.c.b16 %v2290, %v2272
    %v3821 = vpack.c.b16 %v2291, %v2273
    %v3822 = vpack.c.b16 %v2310, %v2292
    %v3823 = vpack.c.b16 %v2311, %v2293
    %v3824 = vpack.c.b16 %v2312, %v2294
    %v3825 = vpack.c.b16 %v2313, %v2295
    %v3826 = vpack.c.b16 %v2314, %v2296
    %v3827 = vpack.c.b16 %v2315, %v2297
    %v3828 = vpack.c.b16 %v2316, %v2298
    %v3829 = vpack.c.b16 %v2317, %v2299
    %v3830 = vpack.c.b16 %v2318, %v2300
    %v3831 = vpack.c.b16 %v2319, %v2301
    %v3832 = vpack.c.b16 %v2320, %v2302
    %v3833 = vpack.c.b16 %v2321, %v2303
    %v3834 = vpack.c.b16 %v2322, %v2304
    %v3835 = vpack.c.b16 %v2323, %v2305
    %v3836 = vpack.c.b16 %v2324, %v2306
    %v3837 = vpack.c.b16 %v2325, %v2307
    %v3838 = vpack.c.b16 %v2326, %v2308
    %v3839 = vpack.c.b16 %v2327, %v2309
    %v3840 = vpack.c.b16 %v2346, %v2328
    %v3841 = vpack.c.b16 %v2347, %v2329
    %v3842 = vpack.c.b16 %v2348, %v2330
    %v3843 = vpack.c.b16 %v2349, %v2331
    %v3844 = vpack.c.b16 %v2350, %v2332
    %v3845 = vpack.c.b16 %v2351, %v2333
    %v3846 = vpack.c.b16 %v2352, %v2334
    %v3847 = vpack.c.b16 %v2353, %v2335
    %v3848 = vpack.c.b16 %v2354, %v2336
    %v3849 = vpack.c.b16 %v2355, %v2337
    %v3850 = vpack.c.b16 %v2356, %v2338
    %v3851 = vpack.c.b16 %v2357, %v2339
    %v3852 = vpack.c.b16 %v2358, %v2340
    %v3853 = vpack.c.b16 %v2359, %v2341
    %v3854 = vpack.c.b16 %v2360, %v2342
    %v3855 = vpack.c.b16 %v2361, %v2343
    %v3856 = vpack.c.b16 %v2362, %v2344
    %v3857 = vpack.c.b16 %v2363, %v2345
    %v3858 = vpack.c.b16 %v2382, %v2364
    %v3859 = vpack.c.b16 %v2383, %v2365
    %v3860 = vpack.c.b16 %v2384, %v2366
    %v3861 = vpack.c.b16 %v2385, %v2367
    %v3862 = vpack.c.b16 %v2386, %v2368
    %v3863 = vpack.c.b16 %v2387, %v2369
    %v3864 = vpack.c.b16 %v2388, %v2370
    %v3865 = vpack.c.b16 %v2389, %v2371
    %v3866 = vpack.c.b16 %v2390, %v2372
    %v3867 = vpack.c.b16 %v2391, %v2373
    %v3868 = vpack.c.b16 %v2392, %v2374
    %v3869 = vpack.c.b16 %v2393, %v2375
    %v3870 = vpack.c.b16 %v2394, %v2376
    %v3871 = vpack.c.b16 %v2395, %v2377
    %v3872 = vpack.c.b16 %v2396, %v2378
    %v3873 = vpack.c.b16 %v2397, %v2379
    %v3874 = vpack.c.b16 %v2398, %v2380
    %v3875 = vpack.c.b16 %v2399, %v2381
    %v3876 = vpack.c.b16 %v2418, %v2400
    %v3877 = vpack.c.b16 %v2419, %v2401
    %v3878 = vpack.c.b16 %v2420, %v2402
    %v3879 = vpack.c.b16 %v2421, %v2403
    %v3880 = vpack.c.b16 %v2422, %v2404
    %v3881 = vpack.c.b16 %v2423, %v2405
    %v3882 = vpack.c.b16 %v2424, %v2406
    %v3883 = vpack.c.b16 %v2425, %v2407
    %v3884 = vpack.c.b16 %v2426, %v2408
    %v3885 = vpack.c.b16 %v2427, %v2409
    %v3886 = vpack.c.b16 %v2428, %v2410
    %v3887 = vpack.c.b16 %v2429, %v2411
    %v3888 = vpack.c.b16 %v2430, %v2412
    %v3889 = vpack.c.b16 %v2431, %v2413
    %v3890 = vpack.c.b16 %v2432, %v2414
    %v3891 = vpack.c.b16 %v2433, %v2415
    %v3892 = vpack.c.b16 %v2434, %v2416
    %v3893 = vpack.c.b16 %v2435, %v2417
    %v3894 = vpack.c.b16 %v2454, %v2436
    %v3895 = vpack.c.b16 %v2455, %v2437
    %v3896 = vpack.c.b16 %v2456, %v2438
    %v3897 = vpack.c.b16 %v2457, %v2439
    %v3898 = vpack.c.b16 %v2458, %v2440
    %v3899 = vpack.c.b16 %v2459, %v2441
    %v3900 = vpack.c.b16 %v2460, %v2442
    %v3901 = vpack.c.b16 %v2461, %v2443
    %v3902 = vpack.c.b16 %v2462, %v2444
    %v3903 = vpack.c.b16 %v2463, %v2445
    %v3904 = vpack.c.b16 %v2464, %v2446
    %v3905 = vpack.c.b16 %v2465, %v2447
    %v3906 = vpack.c.b16 %v2466, %v2448
    %v3907 = vpack.c.b16 %v2467, %v2449
    %v3908 = vpack.c.b16 %v2468, %v2450
    %v3909 = vpack.c.b16 %v2469, %v2451
    %v3910 = vpack.c.b16 %v2470, %v2452
    %v3911 = vpack.c.b16 %v2471, %v2453
    %v3912 = vpack.c.b16 %v2490, %v2472
    %v3913 = vpack.c.b16 %v2491, %v2473
    %v3914 = vpack.c.b16 %v2492, %v2474
    %v3915 = vpack.c.b16 %v2493, %v2475
    %v3916 = vpack.c.b16 %v2494, %v2476
    %v3917 = vpack.c.b16 %v2495, %v2477
    %v3918 = vpack.c.b16 %v2496, %v2478
    %v3919 = vpack.c.b16 %v2497, %v2479
    %v3920 = vpack.c.b16 %v2498, %v2480
    %v3921 = vpack.c.b16 %v2499, %v2481
    %v3922 = vpack.c.b16 %v2500, %v2482
    %v3923 = vpack.c.b16 %v2501, %v2483
    %v3924 = vpack.c.b16 %v2502, %v2484
    %v3925 = vpack.c.b16 %v2503, %v2485
    %v3926 = vpack.c.b16 %v2504, %v2486
    %v3927 = vpack.c.b16 %v2505, %v2487
    %v3928 = vpack.c.b16 %v2506, %v2488
    %v3929 = vpack.c.b16 %v2507, %v2489
    %v3930 = vpack.c.b16 %v2526, %v2508
    %v3931 = vpack.c.b16 %v2527, %v2509
    %v3932 = vpack.c.b16 %v2528, %v2510
    %v3933 = vpack.c.b16 %v2529, %v2511
    %v3934 = vpack.c.b16 %v2530, %v2512
    %v3935 = vpack.c.b16 %v2531, %v2513
    %v3936 = vpack.c.b16 %v2532, %v2514
    %v3937 = vpack.c.b16 %v2533, %v2515
    %v3938 = vpack.c.b16 %v2534, %v2516
    %v3939 = vpack.c.b16 %v2535, %v2517
    %v3940 = vpack.c.b16 %v2536, %v2518
    %v3941 = vpack.c.b16 %v2537, %v2519
    %v3942 = vpack.c.b16 %v2538, %v2520
    %v3943 = vpack.c.b16 %v2539, %v2521
    %v3944 = vpack.c.b16 %v2540, %v2522
    %v3945 = vpack.c.b16 %v2541, %v2523
    %v3946 = vpack.c.b16 %v2542, %v2524
    %v3947 = vpack.c.b16 %v2543, %v2525
    %v3948 = vpack.c.b16 %v2562, %v2544
    %v3949 = vpack.c.b16 %v2563, %v2545
    %v3950 = vpack.c.b16 %v2564, %v2546
    %v3951 = vpack.c.b16 %v2565, %v2547
    %v3952 = vpack.c.b16 %v2566, %v2548
    %v3953 = vpack.c.b16 %v2567, %v2549
    %v3954 = vpack.c.b16 %v2568, %v2550
    %v3955 = vpack.c.b16 %v2569, %v2551
    %v3956 = vpack.c.b16 %v2570, %v2552
    %v3957 = vpack.c.b16 %v2571, %v2553
    %v3958 = vpack.c.b16 %v2572, %v2554
    %v3959 = vpack.c.b16 %v2573, %v2555
    %v3960 = vpack.c.b16 %v2574, %v2556
    %v3961 = vpack.c.b16 %v2575, %v2557
    %v3962 = vpack.c.b16 %v2576, %v2558
    %v3963 = vpack.c.b16 %v2577, %v2559
    %v3964 = vpack.c.b16 %v2578, %v2560
    %v3965 = vpack.c.b16 %v2579, %v2561
    %v3966 = vpack.c.b16 %v2598, %v2580
    %v3967 = vpack.c.b16 %v2599, %v2581
    %v3968 = vpack.c.b16 %v2600, %v2582
    %v3969 = vpack.c.b16 %v2601, %v2583
    %v3970 = vpack.c.b16 %v2602, %v2584
    %v3971 = vpack.c.b16 %v2603, %v2585
    %v3972 = vpack.c.b16 %v2604, %v2586
    %v3973 = vpack.c.b16 %v2605, %v2587
    %v3974 = vpack.c.b16 %v2606, %v2588
    %v3975 = vpack.c.b16 %v2607, %v2589
    %v3976 = vpack.c.b16 %v2608, %v2590
    %v3977 = vpack.c.b16 %v2609, %v2591
    %v3978 = vpack.c.b16 %v2610, %v2592
    %v3979 = vpack.c.b16 %v2611, %v2593
    %v3980 = vpack.c.b16 %v2612, %v2594
    %v3981 = vpack.c.b16 %v2613, %v2595
    %v3982 = vpack.c.b16 %v2614, %v2596
    %v3983 = vpack.c.b16 %v2615, %v2597
    %v3984 = vpack.c.b16 %v2634, %v2616
    %v3985 = vpack.c.b16 %v2635, %v2617
    %v3986 = vpack.c.b16 %v2636, %v2618
    %v3987 = vpack.c.b16 %v2637, %v2619
    %v3988 = vpack.c.b16 %v2638, %v2620
    %v3989 = vpack.c.b16 %v2639, %v2621
    %v3990 = vpack.c.b16 %v2640, %v2622
    %v3991 = vpack.c.b16 %v2641, %v2623
    %v3992 = vpack.c.b16 %v2642, %v2624
    %v3993 = vpack.c.b16 %v2643, %v2625
    %v3994 = vpack.c.b16 %v2644, %v2626
    %v3995 = vpack.c.b16 %v2645, %v2627
    %v3996 = vpack.c.b16 %v2646, %v2628
    %v3997 = vpack.c.b16 %v2647, %v2629
    %v3998 = vpack.c.b16 %v2648, %v2630
    %v3999 = vpack.c.b16 %v2649, %v2631
    %v4000 = vpack.c.b16 %v2650, %v2632
    %v4001 = vpack.c.b16 %v2651, %v2633
    %v4002 = vpack.c.b16 %v2670, %v2652
    %v4003 = vpack.c.b16 %v2671, %v2653
    %v4004 = vpack.c.b16 %v2672, %v2654
    %v4005 = vpack.c.b16 %v2673, %v2655
    %v4006 = vpack.c.b16 %v2674, %v2656
    %v4007 = vpack.c.b16 %v2675, %v2657
    %v4008 = vpack.c.b16 %v2676, %v2658
    %v4009 = vpack.c.b16 %v2677, %v2659
    %v4010 = vpack.c.b16 %v2678, %v2660
    %v4011 = vpack.c.b16 %v2679, %v2661
    %v4012 = vpack.c.b16 %v2680, %v2662
    %v4013 = vpack.c.b16 %v2681, %v2663
    %v4014 = vpack.c.b16 %v2682, %v2664
    %v4015 = vpack.c.b16 %v2683, %v2665
    %v4016 = vpack.c.b16 %v2684, %v2666
    %v4017 = vpack.c.b16 %v2685, %v2667
    %v4018 = vpack.c.b16 %v2686, %v2668
    %v4019 = vpack.c.b16 %v2687, %v2669
    %v4020 = vpack.c.b16 %v2706, %v2688
    %v4021 = vpack.c.b16 %v2707, %v2689
    %v4022 = vpack.c.b16 %v2708, %v2690
    %v4023 = vpack.c.b16 %v2709, %v2691
    %v4024 = vpack.c.b16 %v2710, %v2692
    %v4025 = vpack.c.b16 %v2711, %v2693
    %v4026 = vpack.c.b16 %v2712, %v2694
    %v4027 = vpack.c.b16 %v2713, %v2695
    %v4028 = vpack.c.b16 %v2714, %v2696
    %v4029 = vpack.c.b16 %v2715, %v2697
    %v4030 = vpack.c.b16 %v2716, %v2698
    %v4031 = vpack.c.b16 %v2717, %v2699
    %v4032 = vpack.c.b16 %v2718, %v2700
    %v4033 = vpack.c.b16 %v2719, %v2701
    %v4034 = vpack.c.b16 %v2720, %v2702
    %v4035 = vpack.c.b16 %v2721, %v2703
    %v4036 = vpack.c.b16 %v2722, %v2704
    %v4037 = vpack.c.b16 %v2723, %v2705
    %v4038 = vpack.c.b16 %v2742, %v2724
    %v4039 = vpack.c.b16 %v2743, %v2725
    %v4040 = vpack.c.b16 %v2744, %v2726
    %v4041 = vpack.c.b16 %v2745, %v2727
    %v4042 = vpack.c.b16 %v2746, %v2728
    %v4043 = vpack.c.b16 %v2747, %v2729
    %v4044 = vpack.c.b16 %v2748, %v2730
    %v4045 = vpack.c.b16 %v2749, %v2731
    %v4046 = vpack.c.b16 %v2750, %v2732
    %v4047 = vpack.c.b16 %v2751, %v2733
    %v4048 = vpack.c.b16 %v2752, %v2734
    %v4049 = vpack.c.b16 %v2753, %v2735
    %v4050 = vpack.c.b16 %v2754, %v2736
    %v4051 = vpack.c.b16 %v2755, %v2737
    %v4052 = vpack.c.b16 %v2756, %v2738
    %v4053 = vpack.c.b16 %v2757, %v2739
    %v4054 = vpack.c.b16 %v2758, %v2740
    %v4055 = vpack.c.b16 %v2759, %v2741
    %v4056 = vpack.c.b16 %v2778, %v2760
    %v4057 = vpack.c.b16 %v2779, %v2761
    %v4058 = vpack.c.b16 %v2780, %v2762
    %v4059 = vpack.c.b16 %v2781, %v2763
    %v4060 = vpack.c.b16 %v2782, %v2764
    %v4061 = vpack.c.b16 %v2783, %v2765
    %v4062 = vpack.c.b16 %v2784, %v2766
    %v4063 = vpack.c.b16 %v2785, %v2767
    %v4064 = vpack.c.b16 %v2786, %v2768
    %v4065 = vpack.c.b16 %v2787, %v2769
    %v4066 = vpack.c.b16 %v2788, %v2770
    %v4067 = vpack.c.b16 %v2789, %v2771
    %v4068 = vpack.c.b16 %v2790, %v2772
    %v4069 = vpack.c.b16 %v2791, %v2773
    %v4070 = vpack.c.b16 %v2792, %v2774
    %v4071 = vpack.c.b16 %v2793, %v2775
    %v4072 = vpack.c.b16 %v2794, %v2776
    %v4073 = vpack.c.b16 %v2795, %v2777
    %v4074 = vpack.c.b16 %v2814, %v2796
    %v4075 = vpack.c.b16 %v2815, %v2797
    %v4076 = vpack.c.b16 %v2816, %v2798
    %v4077 = vpack.c.b16 %v2817, %v2799
    %v4078 = vpack.c.b16 %v2818, %v2800
    %v4079 = vpack.c.b16 %v2819, %v2801
    %v4080 = vpack.c.b16 %v2820, %v2802
    %v4081 = vpack.c.b16 %v2821, %v2803
    %v4082 = vpack.c.b16 %v2822, %v2804
    %v4083 = vpack.c.b16 %v2823, %v2805
    %v4084 = vpack.c.b16 %v2824, %v2806
    %v4085 = vpack.c.b16 %v2825, %v2807
    %v4086 = vpack.c.b16 %v2826, %v2808
    %v4087 = vpack.c.b16 %v2827, %v2809
    %v4088 = vpack.c.b16 %v2828, %v2810
    %v4089 = vpack.c.b16 %v2829, %v2811
    %v4090 = vpack.c.b16 %v2830, %v2812
    %v4091 = vpack.c.b16 %v2831, %v2813
    %v4092 = vpack.c.b16 %v2850, %v2832
    %v4093 = vpack.c.b16 %v2851, %v2833
    %v4094 = vpack.c.b16 %v2852, %v2834
    %v4095 = vpack.c.b16 %v2853, %v2835
    %v4096 = vpack.c.b16 %v2854, %v2836
    %v4097 = vpack.c.b16 %v2855, %v2837
    %v4098 = vpack.c.b16 %v2856, %v2838
    %v4099 = vpack.c.b16 %v2857, %v2839
    %v4100 = vpack.c.b16 %v2858, %v2840
    %v4101 = vpack.c.b16 %v2859, %v2841
    %v4102 = vpack.c.b16 %v2860, %v2842
    %v4103 = vpack.c.b16 %v2861, %v2843
    %v4104 = vpack.c.b16 %v2862, %v2844
    %v4105 = vpack.c.b16 %v2863, %v2845
    %v4106 = vpack.c.b16 %v2864, %v2846
    %v4107 = vpack.c.b16 %v2865, %v2847
    %v4108 = vpack.c.b16 %v2866, %v2848
    %v4109 = vpack.c.b16 %v2867, %v2849
    %v4110 = vpack.c.b16 %v2886, %v2868
    %v4111 = vpack.c.b16 %v2887, %v2869
    %v4112 = vpack.c.b16 %v2888, %v2870
    %v4113 = vpack.c.b16 %v2889, %v2871
    %v4114 = vpack.c.b16 %v2890, %v2872
    %v4115 = vpack.c.b16 %v2891, %v2873
    %v4116 = vpack.c.b16 %v2892, %v2874
    %v4117 = vpack.c.b16 %v2893, %v2875
    %v4118 = vpack.c.b16 %v2894, %v2876
    %v4119 = vpack.c.b16 %v2895, %v2877
    %v4120 = vpack.c.b16 %v2896, %v2878
    %v4121 = vpack.c.b16 %v2897, %v2879
    %v4122 = vpack.c.b16 %v2898, %v2880
    %v4123 = vpack.c.b16 %v2899, %v2881
    %v4124 = vpack.c.b16 %v2900, %v2882
    %v4125 = vpack.c.b16 %v2901, %v2883
    %v4126 = vpack.c.b16 %v2902, %v2884
    %v4127 = vpack.c.b16 %v2903, %v2885
    %v4128 = vpack.c.b16 %v2922, %v2904
    %v4129 = vpack.c.b16 %v2923, %v2905
    %v4130 = vpack.c.b16 %v2924, %v2906
    %v4131 = vpack.c.b16 %v2925, %v2907
    %v4132 = vpack.c.b16 %v2926, %v2908
    %v4133 = vpack.c.b16 %v2927, %v2909
    %v4134 = vpack.c.b16 %v2928, %v2910
    %v4135 = vpack.c.b16 %v2929, %v2911
    %v4136 = vpack.c.b16 %v2930, %v2912
    %v4137 = vpack.c.b16 %v2931, %v2913
    %v4138 = vpack.c.b16 %v2932, %v2914
    %v4139 = vpack.c.b16 %v2933, %v2915
    %v4140 = vpack.c.b16 %v2934, %v2916
    %v4141 = vpack.c.b16 %v2935, %v2917
    %v4142 = vpack.c.b16 %v2936, %v2918
    %v4143 = vpack.c.b16 %v2937, %v2919
    %v4144 = vpack.c.b16 %v2938, %v2920
    %v4145 = vpack.c.b16 %v2939, %v2921
    %v4146 = vpack.c.b16 %v2958, %v2940
    %v4147 = vpack.c.b16 %v2959, %v2941
    %v4148 = vpack.c.b16 %v2960, %v2942
    %v4149 = vpack.c.b16 %v2961, %v2943
    %v4150 = vpack.c.b16 %v2962, %v2944
    %v4151 = vpack.c.b16 %v2963, %v2945
    %v4152 = vpack.c.b16 %v2964, %v2946
    %v4153 = vpack.c.b16 %v2965, %v2947
    %v4154 = vpack.c.b16 %v2966, %v2948
    %v4155 = vpack.c.b16 %v2967, %v2949
    %v4156 = vpack.c.b16 %v2968, %v2950
    %v4157 = vpack.c.b16 %v2969, %v2951
    %v4158 = vpack.c.b16 %v2970, %v2952
    %v4159 = vpack.c.b16 %v2971, %v2953
    %v4160 = vpack.c.b16 %v2972, %v2954
    %v4161 = vpack.c.b16 %v2973, %v2955
    %v4162 = vpack.c.b16 %v2974, %v2956
    %v4163 = vpack.c.b16 %v2975, %v2957
    %v4164 = vpack.c.b16 %v2994, %v2976
    %v4165 = vpack.c.b16 %v2995, %v2977
    %v4166 = vpack.c.b16 %v2996, %v2978
    %v4167 = vpack.c.b16 %v2997, %v2979
    %v4168 = vpack.c.b16 %v2998, %v2980
    %v4169 = vpack.c.b16 %v2999, %v2981
    %v4170 = vpack.c.b16 %v3000, %v2982
    %v4171 = vpack.c.b16 %v3001, %v2983
    %v4172 = vpack.c.b16 %v3002, %v2984
    %v4173 = vpack.c.b16 %v3003, %v2985
    %v4174 = vpack.c.b16 %v3004, %v2986
    %v4175 = vpack.c.b16 %v3005, %v2987
    %v4176 = vpack.c.b16 %v3006, %v2988
    %v4177 = vpack.c.b16 %v3007, %v2989
    %v4178 = vpack.c.b16 %v3008, %v2990
    %v4179 = vpack.c.b16 %v3009, %v2991
    %v4180 = vpack.c.b16 %v3010, %v2992
    %v4181 = vpack.c.b16 %v3011, %v2993
    %v4182 = vpack.c.b16 %v3030, %v3012
    %v4183 = vpack.c.b16 %v3031, %v3013
    %v4184 = vpack.c.b16 %v3032, %v3014
    %v4185 = vpack.c.b16 %v3033, %v3015
    %v4186 = vpack.c.b16 %v3034, %v3016
    %v4187 = vpack.c.b16 %v3035, %v3017
    %v4188 = vpack.c.b16 %v3036, %v3018
    %v4189 = vpack.c.b16 %v3037, %v3019
    %v4190 = vpack.c.b16 %v3038, %v3020
    %v4191 = vpack.c.b16 %v3039, %v3021
    %v4192 = vpack.c.b16 %v3040, %v3022
    %v4193 = vpack.c.b16 %v3041, %v3023
    %v4194 = vpack.c.b16 %v3042, %v3024
    %v4195 = vpack.c.b16 %v3043, %v3025
    %v4196 = vpack.c.b16 %v3044, %v3026
    %v4197 = vpack.c.b16 %v3045, %v3027
    %v4198 = vpack.c.b16 %v3046, %v3028
    %v4199 = vpack.c.b16 %v3047, %v3029
    %v4200 = vpack.c.b16 %v3066, %v3048
    %v4201 = vpack.c.b16 %v3067, %v3049
    %v4202 = vpack.c.b16 %v3068, %v3050
    %v4203 = vpack.c.b16 %v3069, %v3051
    %v4204 = vpack.c.b16 %v3070, %v3052
    %v4205 = vpack.c.b16 %v3071, %v3053
    %v4206 = vpack.c.b16 %v3072, %v3054
    %v4207 = vpack.c.b16 %v3073, %v3055
    %v4208 = vpack.c.b16 %v3074, %v3056
    %v4209 = vpack.c.b16 %v3075, %v3057
    %v4210 = vpack.c.b16 %v3076, %v3058
    %v4211 = vpack.c.b16 %v3077, %v3059
    %v4212 = vpack.c.b16 %v3078, %v3060
    %v4213 = vpack.c.b16 %v3079, %v3061
    %v4214 = vpack.c.b16 %v3080, %v3062
    %v4215 = vpack.c.b16 %v3081, %v3063
    %v4216 = vpack.c.b16 %v3082, %v3064
    %v4217 = vpack.c.b16 %v3083, %v3065
    %v4218 = vpack.c.b16 %v3102, %v3084
    %v4219 = vpack.c.b16 %v3103, %v3085
    %v4220 = vpack.c.b16 %v3104, %v3086
    %v4221 = vpack.c.b16 %v3105, %v3087
    %v4222 = vpack.c.b16 %v3106, %v3088
    %v4223 = vpack.c.b16 %v3107, %v3089
    %v4224 = vpack.c.b16 %v3108, %v3090
    %v4225 = vpack.c.b16 %v3109, %v3091
    %v4226 = vpack.c.b16 %v3110, %v3092
    %v4227 = vpack.c.b16 %v3111, %v3093
    %v4228 = vpack.c.b16 %v3112, %v3094
    %v4229 = vpack.c.b16 %v3113, %v3095
    %v4230 = vpack.c.b16 %v3114, %v3096
    %v4231 = vpack.c.b16 %v3115, %v3097
    %v4232 = vpack.c.b16 %v3116, %v3098
    %v4233 = vpack.c.b16 %v3117, %v3099
    %v4234 = vpack.c.b16 %v3118, %v3100
    %v4235 = vpack.c.b16 %v3119, %v3101
    %v4236 = vpack.c.b16 %v3138, %v3120
    %v4237 = vpack.c.b16 %v3139, %v3121
    %v4238 = vpack.c.b16 %v3140, %v3122
    %v4239 = vpack.c.b16 %v3141, %v3123
    %v4240 = vpack.c.b16 %v3142, %v3124
    %v4241 = vpack.c.b16 %v3143, %v3125
    %v4242 = vpack.c.b16 %v3144, %v3126
    %v4243 = vpack.c.b16 %v3145, %v3127
    %v4244 = vpack.c.b16 %v3146, %v3128
    %v4245 = vpack.c.b16 %v3147, %v3129
    %v4246 = vpack.c.b16 %v3148, %v3130
    %v4247 = vpack.c.b16 %v3149, %v3131
    %v4248 = vpack.c.b16 %v3150, %v3132
    %v4249 = vpack.c.b16 %v3151, %v3133
    %v4250 = vpack.c.b16 %v3152, %v3134
    %v4251 = vpack.c.b16 %v3153, %v3135
    %v4252 = vpack.c.b16 %v3154, %v3136
    %v4253 = vpack.c.b16 %v3155, %v3137
    %v4254 = vpack.c.b16 %v3174, %v3156
    %v4255 = vpack.c.b16 %v3175, %v3157
    %v4256 = vpack.c.b16 %v3176, %v3158
    %v4257 = vpack.c.b16 %v3177, %v3159
    %v4258 = vpack.c.b16 %v3178, %v3160
    %v4259 = vpack.c.b16 %v3179, %v3161
    %v4260 = vpack.c.b16 %v3180, %v3162
    %v4261 = vpack.c.b16 %v3181, %v3163
    %v4262 = vpack.c.b16 %v3182, %v3164
    %v4263 = vpack.c.b16 %v3183, %v3165
    %v4264 = vpack.c.b16 %v3184, %v3166
    %v4265 = vpack.c.b16 %v3185, %v3167
    %v4266 = vpack.c.b16 %v3186, %v3168
    %v4267 = vpack.c.b16 %v3187, %v3169
    %v4268 = vpack.c.b16 %v3188, %v3170
    %v4269 = vpack.c.b16 %v3189, %v3171
    %v4270 = vpack.c.b16 %v3190, %v3172
    %v4271 = vpack.c.b16 %v3191, %v3173
    %v4272 = vpack.c.b16 %v3210, %v3192
    %v4273 = vpack.c.b16 %v3211, %v3193
    %v4274 = vpack.c.b16 %v3212, %v3194
    %v4275 = vpack.c.b16 %v3213, %v3195
    %v4276 = vpack.c.b16 %v3214, %v3196
    %v4277 = vpack.c.b16 %v3215, %v3197
    %v4278 = vpack.c.b16 %v3216, %v3198
    %v4279 = vpack.c.b16 %v3217, %v3199
    %v4280 = vpack.c.b16 %v3218, %v3200
    %v4281 = vpack.c.b16 %v3219, %v3201
    %v4282 = vpack.c.b16 %v3220, %v3202
    %v4283 = vpack.c.b16 %v3221, %v3203
    %v4284 = vpack.c.b16 %v3222, %v3204
    %v4285 = vpack.c.b16 %v3223, %v3205
    %v4286 = vpack.c.b16 %v3224, %v3206
    %v4287 = vpack.c.b16 %v3225, %v3207
    %v4288 = vpack.c.b16 %v3226, %v3208
    %v4289 = vpack.c.b16 %v3227, %v3209
    %v4290 = vpack.c.b16 %v3246, %v3228
    %v4291 = vpack.c.b16 %v3247, %v3229
    %v4292 = vpack.c.b16 %v3248, %v3230
    %v4293 = vpack.c.b16 %v3249, %v3231
    %v4294 = vpack.c.b16 %v3250, %v3232
    %v4295 = vpack.c.b16 %v3251, %v3233
    %v4296 = vpack.c.b16 %v3252, %v3234
    %v4297 = vpack.c.b16 %v3253, %v3235
    %v4298 = vpack.c.b16 %v3254, %v3236
    %v4299 = vpack.c.b16 %v3255, %v3237
    %v4300 = vpack.c.b16 %v3256, %v3238
    %v4301 = vpack.c.b16 %v3257, %v3239
    %v4302 = vpack.c.b16 %v3258, %v3240
    %v4303 = vpack.c.b16 %v3259, %v3241
    %v4304 = vpack.c.b16 %v3260, %v3242
    %v4305 = vpack.c.b16 %v3261, %v3243
    %v4306 = vpack.c.b16 %v3262, %v3244
    %v4307 = vpack.c.b16 %v3263, %v3245
    %v4308 = vpack.c.b16 %v3282, %v3264
    %v4309 = vpack.c.b16 %v3283, %v3265
    %v4310 = vpack.c.b16 %v3284, %v3266
    %v4311 = vpack.c.b16 %v3285, %v3267
    %v4312 = vpack.c.b16 %v3286, %v3268
    %v4313 = vpack.c.b16 %v3287, %v3269
    %v4314 = vpack.c.b16 %v3288, %v3270
    %v4315 = vpack.c.b16 %v3289, %v3271
    %v4316 = vpack.c.b16 %v3290, %v3272
    %v4317 = vpack.c.b16 %v3291, %v3273
    %v4318 = vpack.c.b16 %v3292, %v3274
    %v4319 = vpack.c.b16 %v3293, %v3275
    %v4320 = vpack.c.b16 %v3294, %v3276
    %v4321 = vpack.c.b16 %v3295, %v3277
    %v4322 = vpack.c.b16 %v3296, %v3278
    %v4323 = vpack.c.b16 %v3297, %v3279
    %v4324 = vpack.c.b16 %v3298, %v3280
    %v4325 = vpack.c.b16 %v3299, %v3281
    %v4326 = vpack.c.b16 %v3318, %v3300
    %v4327 = vpack.c.b16 %v3319, %v3301
    %v4328 = vpack.c.b16 %v3320, %v3302
    %v4329 = vpack.c.b16 %v3321, %v3303
    %v4330 = vpack.c.b16 %v3322, %v3304
    %v4331 = vpack.c.b16 %v3323, %v3305
    %v4332 = vpack.c.b16 %v3324, %v3306
    %v4333 = vpack.c.b16 %v3325, %v3307
    %v4334 = vpack.c.b16 %v3326, %v3308
    %v4335 = vpack.c.b16 %v3327, %v3309
    %v4336 = vpack.c.b16 %v3328, %v3310
    %v4337 = vpack.c.b16 %v3329, %v3311
    %v4338 = vpack.c.b16 %v3330, %v3312
    %v4339 = vpack.c.b16 %v3331, %v3313
    %v4340 = vpack.c.b16 %v3332, %v3314
    %v4341 = vpack.c.b16 %v3333, %v3315
    %v4342 = vpack.c.b16 %v3334, %v3316
    %v4343 = vpack.c.b16 %v3335, %v3317
    %v4344 = vpack.c.b16 %v3354, %v3336
    %v4345 = vpack.c.b16 %v3355, %v3337
    %v4346 = vpack.c.b16 %v3356, %v3338
    %v4347 = vpack.c.b16 %v3357, %v3339
    %v4348 = vpack.c.b16 %v3358, %v3340
    %v4349 = vpack.c.b16 %v3359, %v3341
    %v4350 = vpack.c.b16 %v3360, %v3342
    %v4351 = vpack.c.b16 %v3361, %v3343
    %v4352 = vpack.c.b16 %v3362, %v3344
    %v4353 = vpack.c.b16 %v3363, %v3345
    %v4354 = vpack.c.b16 %v3364, %v3346
    %v4355 = vpack.c.b16 %v3365, %v3347
    %v4356 = vpack.c.b16 %v3366, %v3348
    %v4357 = vpack.c.b16 %v3367, %v3349
    %v4358 = vpack.c.b16 %v3368, %v3350
    %v4359 = vpack.c.b16 %v3369, %v3351
    %v4360 = vpack.c.b16 %v3370, %v3352
    %v4361 = vpack.c.b16 %v3371, %v3353
    %v4362 = vpack.c.b16 %v3390, %v3372
    %v4363 = vpack.c.b16 %v3391, %v3373
    %v4364 = vpack.c.b16 %v3392, %v3374
    %v4365 = vpack.c.b16 %v3393, %v3375
    %v4366 = vpack.c.b16 %v3394, %v3376
    %v4367 = vpack.c.b16 %v3395, %v3377
    %v4368 = vpack.c.b16 %v3396, %v3378
    %v4369 = vpack.c.b16 %v3397, %v3379
    %v4370 = vpack.c.b16 %v3398, %v3380
    %v4371 = vpack.c.b16 %v3399, %v3381
    %v4372 = vpack.c.b16 %v3400, %v3382
    %v4373 = vpack.c.b16 %v3401, %v3383
    %v4374 = vpack.c.b16 %v3402, %v3384
    %v4375 = vpack.c.b16 %v3403, %v3385
    %v4376 = vpack.c.b16 %v3404, %v3386
    %v4377 = vpack.c.b16 %v3405, %v3387
    %v4378 = vpack.c.b16 %v3406, %v3388
    %v4379 = vpack.c.b16 %v3407, %v3389
    %v4380 = vpack.c.b16 %v3426, %v3408
    %v4381 = vpack.c.b16 %v3427, %v3409
    %v4382 = vpack.c.b16 %v3428, %v3410
    %v4383 = vpack.c.b16 %v3429, %v3411
    %v4384 = vpack.c.b16 %v3430, %v3412
    %v4385 = vpack.c.b16 %v3431, %v3413
    %v4386 = vpack.c.b16 %v3432, %v3414
    %v4387 = vpack.c.b16 %v3433, %v3415
    %v4388 = vpack.c.b16 %v3434, %v3416
    %v4389 = vpack.c.b16 %v3435, %v3417
    %v4390 = vpack.c.b16 %v3436, %v3418
    %v4391 = vpack.c.b16 %v3437, %v3419
    %v4392 = vpack.c.b16 %v3438, %v3420
    %v4393 = vpack.c.b16 %v3439, %v3421
    %v4394 = vpack.c.b16 %v3440, %v3422
    %v4395 = vpack.c.b16 %v3441, %v3423
    %v4396 = vpack.c.b16 %v3442, %v3424
    %v4397 = vpack.c.b16 %v3443, %v3425
    %v4398 = vpack.c.b16 %v3462, %v3444
    %v4399 = vpack.c.b16 %v3463, %v3445
    %v4400 = vpack.c.b16 %v3464, %v3446
    %v4401 = vpack.c.b16 %v3465, %v3447
    %v4402 = vpack.c.b16 %v3466, %v3448
    %v4403 = vpack.c.b16 %v3467, %v3449
    %v4404 = vpack.c.b16 %v3468, %v3450
    %v4405 = vpack.c.b16 %v3469, %v3451
    %v4406 = vpack.c.b16 %v3470, %v3452
    %v4407 = vpack.c.b16 %v3471, %v3453
    %v4408 = vpack.c.b16 %v3472, %v3454
    %v4409 = vpack.c.b16 %v3473, %v3455
    %v4410 = vpack.c.b16 %v3474, %v3456
    %v4411 = vpack.c.b16 %v3475, %v3457
    %v4412 = vpack.c.b16 %v3476, %v3458
    %v4413 = vpack.c.b16 %v3477, %v3459
    %v4414 = vpack.c.b16 %v3478, %v3460
    %v4415 = vpack.c.b16 %v3479, %v3461
    %v4416 = vpack.c.b16 %v3498, %v3480
    %v4417 = vpack.c.b16 %v3499, %v3481
    %v4418 = vpack.c.b16 %v3500, %v3482
    %v4419 = vpack.c.b16 %v3501, %v3483
    %v4420 = vpack.c.b16 %v3502, %v3484
    %v4421 = vpack.c.b16 %v3503, %v3485
    %v4422 = vpack.c.b16 %v3504, %v3486
    %v4423 = vpack.c.b16 %v3505, %v3487
    %v4424 = vpack.c.b16 %v3506, %v3488
    %v4425 = vpack.c.b16 %v3507, %v3489
    %v4426 = vpack.c.b16 %v3508, %v3490
    %v4427 = vpack.c.b16 %v3509, %v3491
    %v4428 = vpack.c.b16 %v3510, %v3492
    %v4429 = vpack.c.b16 %v3511, %v3493
    %v4430 = vpack.c.b16 %v3512, %v3494
    %v4431 = vpack.c.b16 %v3513, %v3495
    %v4432 = vpack.c.b16 %v3514, %v3496
    %v4433 = vpack.c.b16 %v3515, %v3497
    %v4434 = vpack.c.b16 %v3534, %v3516
    %v4435 = vpack.c.b16 %v3535, %v3517
    %v4436 = vpack.c.b16 %v3536, %v3518
    %v4437 = vpack.c.b16 %v3537, %v3519
    %v4438 = vpack.c.b16 %v3538, %v3520
    %v4439 = vpack.c.b16 %v3539, %v3521
    %v4440 = vpack.c.b16 %v3540, %v3522
    %v4441 = vpack.c.b16 %v3541, %v3523
    %v4442 = vpack.c.b16 %v3542, %v3524
    %v4443 = vpack.c.b16 %v3543, %v3525
    %v4444 = vpack.c.b16 %v3544, %v3526
    %v4445 = vpack.c.b16 %v3545, %v3527
    %v4446 = vpack.c.b16 %v3546, %v3528
    %v4447 = vpack.c.b16 %v3547, %v3529
    %v4448 = vpack.c.b16 %v3548, %v3530
    %v4449 = vpack.c.b16 %v3549, %v3531
    %v4450 = vpack.c.b16 %v3550, %v3532
    %v4451 = vpack.c.b16 %v3551, %v3533
    %v4452 = vpack.c.b16 %v3570, %v3552
    %v4453 = vpack.c.b16 %v3571, %v3553
    %v4454 = vpack.c.b16 %v3572, %v3554
    %v4455 = vpack.c.b16 %v3573, %v3555
    %v4456 = vpack.c.b16 %v3574, %v3556
    %v4457 = vpack.c.b16 %v3575, %v3557
    %v4458 = vpack.c.b16 %v3576, %v3558
    %v4459 = vpack.c.b16 %v3577, %v3559
    %v4460 = vpack.c.b16 %v3578, %v3560
    %v4461 = vpack.c.b16 %v3579, %v3561
    %v4462 = vpack.c.b16 %v3580, %v3562
    %v4463 = vpack.c.b16 %v3581, %v3563
    %v4464 = vpack.c.b16 %v3582, %v3564
    %v4465 = vpack.c.b16 %v3583, %v3565
    %v4466 = vpack.c.b16 %v3584, %v3566
    %v4467 = vpack.c.b16 %v3585, %v3567
    %v4468 = vpack.c.b16 %v3586, %v3568
    %v4469 = vpack.c.b16 %v3587, %v3569
    %v4470 = vpack.c.b16 %v3606, %v3588
    %v4471 = vpack.c.b16 %v3607, %v3589
    %v4472 = vpack.c.b16 %v3608, %v3590
    %v4473 = vpack.c.b16 %v3609, %v3591
    %v4474 = vpack.c.b16 %v3610, %v3592
    %v4475 = vpack.c.b16 %v3611, %v3593
    %v4476 = vpack.c.b16 %v3612, %v3594
    %v4477 = vpack.c.b16 %v3613, %v3595
    %v4478 = vpack.c.b16 %v3614, %v3596
    %v4479 = vpack.c.b16 %v3615, %v3597
    %v4480 = vpack.c.b16 %v3616, %v3598
    %v4481 = vpack.c.b16 %v3617, %v3599
    %v4482 = vpack.c.b16 %v3618, %v3600
    %v4483 = vpack.c.b16 %v3619, %v3601
    %v4484 = vpack.c.b16 %v3620, %v3602
    %v4485 = vpack.c.b16 %v3621, %v3603
    %v4486 = vpack.c.b16 %v3622, %v3604
    %v4487 = vpack.c.b16 %v3623, %v3605
    %5352 = vmatprep.subr.bf16.mxu0 %v3751
    %5353 = vmatpush1.bf16.msra.mxu0 %v3750
    %5354 = vmatprep.subr.bf16.mxu0 %v3733
    %5355 = vmatpush1.bf16.msra.mxu0 %v3732
    %5356 = vmatprep.subr.bf16.mxu0 %v3715
    %5357 = vmatpush1.bf16.msra.mxu0 %v3714
    %5358 = vmatprep.subr.bf16.mxu0 %v3697
    %5359 = vmatpush1.bf16.msra.mxu0 %v3696
    %5360 = vmatprep.subr.bf16.mxu0 %v3679
    %5361 = vmatpush1.bf16.msra.mxu0 %v3678
    %5362 = vmatprep.subr.bf16.mxu0 %v3661
    %5363 = vmatpush1.bf16.msra.mxu0 %v3660
    %5364 = vmatprep.subr.bf16.mxu0 %v3643
    %5365 = vmatpush1.bf16.msra.mxu0 %v3642
    %5366 = vmatprep.subr.bf16.mxu0 %v3625
    %5367 = vmatpush1.bf16.msra.mxu0 %v3624
    %5368 = vmatprep.subr.bf16.mxu0 %v3895
    %5369 = vmatpush2.bf16.msra.mxu0 %v3894
    %5370 = vmatprep.subr.bf16.mxu0 %v3877
    %5371 = vmatpush2.bf16.msra.mxu0 %v3876
    %5372 = vmatprep.subr.bf16.mxu0 %v3859
    %5373 = vmatpush2.bf16.msra.mxu0 %v3858
    %5374 = vmatprep.subr.bf16.mxu0 %v3841
    %5375 = vmatpush2.bf16.msra.mxu0 %v3840
    %5376 = vmatprep.subr.bf16.mxu0 %v3823
    %5377 = vmatpush2.bf16.msra.mxu0 %v3822
    %5378 = vmatprep.subr.bf16.mxu0 %v3805
    %5379 = vmatpush2.bf16.msra.mxu0 %v3804
    %5380 = vmatprep.subr.bf16.mxu0 %v3787
    %5381 = vmatpush2.bf16.msra.mxu0 %v3786
    %5382 = vmatprep.subr.bf16.mxu0 %v3769
    %5383 = vmatpush2.bf16.msra.mxu0 %v3768
    %5384 = vmatprep.mubr.bf16.mxu0 %v67
    %5385 = vmatmul.mubr.bf16.gmra.mxu0 %v66
    %v5386 = vpop.f32.mrf.mxu0
    %v5387 = vadd.f32 %v945, %v5386
    %v5388 = vpop.f32.mrf.mxu0
    %v5389 = vadd.f32 %v949, %v5388
    %v5390 = vpop.f32.mrf.mxu0
    %v5391 = vadd.f32 %v945, %v5390
    %v5392 = vpop.f32.mrf.mxu0
    %v5393 = vadd.f32 %v949, %v5392
    %5394 = vdwg.mxu0
    %5395 = vmatprep.subr.bf16.mxu0 %v4039
    %5396 = vmatpush1.bf16.msra.mxu0 %v4038
    %5397 = vmatprep.subr.bf16.mxu0 %v4021
    %5398 = vmatpush1.bf16.msra.mxu0 %v4020
    %5399 = vmatprep.subr.bf16.mxu0 %v4003
    %5400 = vmatpush1.bf16.msra.mxu0 %v4002
    %5401 = vmatprep.subr.bf16.mxu0 %v3985
    %5402 = vmatpush1.bf16.msra.mxu0 %v3984
    %5403 = vmatprep.subr.bf16.mxu0 %v3967
    %5404 = vmatpush1.bf16.msra.mxu0 %v3966
    %5405 = vmatprep.subr.bf16.mxu0 %v3949
    %5406 = vmatpush1.bf16.msra.mxu0 %v3948
    %5407 = vmatprep.subr.bf16.mxu0 %v3931
    %5408 = vmatpush1.bf16.msra.mxu0 %v3930
    %5409 = vmatprep.subr.bf16.mxu0 %v3913
    %5410 = vmatpush1.bf16.msra.mxu0 %v3912
    %5411 = vmatprep.subr.bf16.mxu0 %v4183
    %5412 = vmatpush2.bf16.msra.mxu0 %v4182
    %5413 = vmatprep.subr.bf16.mxu0 %v4165
    %5414 = vmatpush2.bf16.msra.mxu0 %v4164
    %5415 = vmatprep.subr.bf16.mxu0 %v4147
    %5416 = vmatpush2.bf16.msra.mxu0 %v4146
    %5417 = vmatprep.subr.bf16.mxu0 %v4129
    %5418 = vmatpush2.bf16.msra.mxu0 %v4128
    %5419 = vmatprep.subr.bf16.mxu0 %v4111
    %5420 = vmatpush2.bf16.msra.mxu0 %v4110
    %5421 = vmatprep.subr.bf16.mxu0 %v4093
    %5422 = vmatpush2.bf16.msra.mxu0 %v4092
    %5423 = vmatprep.subr.bf16.mxu0 %v4075
    %5424 = vmatpush2.bf16.msra.mxu0 %v4074
    %5425 = vmatprep.subr.bf16.mxu0 %v4057
    %5426 = vmatpush2.bf16.msra.mxu0 %v4056
    %5427 = vmatprep.mubr.bf16.mxu0 %v69
    %5428 = vmatmul.mubr.bf16.gmra.mxu0 %v68
    %v5429 = vpop.f32.mrf.mxu0
    %v5430 = vadd.f32 %v5387, %v5429
    %v5431 = vpop.f32.mrf.mxu0
    %v5432 = vadd.f32 %v5389, %v5431
    %v5433 = vpop.f32.mrf.mxu0
    %v5434 = vadd.f32 %v5391, %v5433
    %v5435 = vpop.f32.mrf.mxu0
    %v5436 = vadd.f32 %v5393, %v5435
    %5437 = vdwg.mxu0
    %5438 = vmatprep.subr.bf16.mxu0 %v4327
    %5439 = vmatpush1.bf16.msra.mxu0 %v4326
    %5440 = vmatprep.subr.bf16.mxu0 %v4309
    %5441 = vmatpush1.bf16.msra.mxu0 %v4308
    %5442 = vmatprep.subr.bf16.mxu0 %v4291
    %5443 = vmatpush1.bf16.msra.mxu0 %v4290
    %5444 = vmatprep.subr.bf16.mxu0 %v4273
    %5445 = vmatpush1.bf16.msra.mxu0 %v4272
    %5446 = vmatprep.subr.bf16.mxu0 %v4255
    %5447 = vmatpush1.bf16.msra.mxu0 %v4254
    %5448 = vmatprep.subr.bf16.mxu0 %v4237
    %5449 = vmatpush1.bf16.msra.mxu0 %v4236
    %5450 = vmatprep.subr.bf16.mxu0 %v4219
    %5451 = vmatpush1.bf16.msra.mxu0 %v4218
    %5452 = vmatprep.subr.bf16.mxu0 %v4201
    %5453 = vmatpush1.bf16.msra.mxu0 %v4200
    %5454 = vmatprep.subr.bf16.mxu0 %v4471
    %5455 = vmatpush2.bf16.msra.mxu0 %v4470
    %5456 = vmatprep.subr.bf16.mxu0 %v4453
    %5457 = vmatpush2.bf16.msra.mxu0 %v4452
    %5458 = vmatprep.subr.bf16.mxu0 %v4435
    %5459 = vmatpush2.bf16.msra.mxu0 %v4434
    %5460 = vmatprep.subr.bf16.mxu0 %v4417
    %5461 = vmatpush2.bf16.msra.mxu0 %v4416
    %5462 = vmatprep.subr.bf16.mxu0 %v4399
    %5463 = vmatpush2.bf16.msra.mxu0 %v4398
    %5464 = vmatprep.subr.bf16.mxu0 %v4381
    %5465 = vmatpush2.bf16.msra.mxu0 %v4380
    %5466 = vmatprep.subr.bf16.mxu0 %v4363
    %5467 = vmatpush2.bf16.msra.mxu0 %v4362
    %5468 = vmatprep.subr.bf16.mxu0 %v4345
    %5469 = vmatpush2.bf16.msra.mxu0 %v4344
    %5470 = vmatprep.mubr.bf16.mxu0 %v71
    %5471 = vmatmul.mubr.bf16.gmra.mxu0 %v70
    %v5472 = vpop.f32.mrf.mxu0
    %v5473 = vadd.f32 %v5430, %v5472
    %v5474 = vpop.f32.mrf.mxu0
    %v5475 = vadd.f32 %v5432, %v5474
    %v5476 = vpop.f32.mrf.mxu0
    %v5477 = vadd.f32 %v5434, %v5476
    %v5478 = vpop.f32.mrf.mxu0
    %v5479 = vadd.f32 %v5436, %v5478
    %5480 = vdwg.mxu0
    %5481 = vmatprep.subr.bf16.mxu0 %v3753
    %5482 = vmatpush1.bf16.msra.mxu0 %v3752
    %5483 = vmatprep.subr.bf16.mxu0 %v3735
    %5484 = vmatpush1.bf16.msra.mxu0 %v3734
    %5485 = vmatprep.subr.bf16.mxu0 %v3717
    %5486 = vmatpush1.bf16.msra.mxu0 %v3716
    %5487 = vmatprep.subr.bf16.mxu0 %v3699
    %5488 = vmatpush1.bf16.msra.mxu0 %v3698
    %5489 = vmatprep.subr.bf16.mxu0 %v3681
    %5490 = vmatpush1.bf16.msra.mxu0 %v3680
    %5491 = vmatprep.subr.bf16.mxu0 %v3663
    %5492 = vmatpush1.bf16.msra.mxu0 %v3662
    %5493 = vmatprep.subr.bf16.mxu0 %v3645
    %5494 = vmatpush1.bf16.msra.mxu0 %v3644
    %5495 = vmatprep.subr.bf16.mxu0 %v3627
    %5496 = vmatpush1.bf16.msra.mxu0 %v3626
    %5497 = vmatprep.subr.bf16.mxu0 %v3897
    %5498 = vmatpush2.bf16.msra.mxu0 %v3896
    %5499 = vmatprep.subr.bf16.mxu0 %v3879
    %5500 = vmatpush2.bf16.msra.mxu0 %v3878
    %5501 = vmatprep.subr.bf16.mxu0 %v3861
    %5502 = vmatpush2.bf16.msra.mxu0 %v3860
    %5503 = vmatprep.subr.bf16.mxu0 %v3843
    %5504 = vmatpush2.bf16.msra.mxu0 %v3842
    %5505 = vmatprep.subr.bf16.mxu0 %v3825
    %5506 = vmatpush2.bf16.msra.mxu0 %v3824
    %5507 = vmatprep.subr.bf16.mxu0 %v3807
    %5508 = vmatpush2.bf16.msra.mxu0 %v3806
    %5509 = vmatprep.subr.bf16.mxu0 %v3789
    %5510 = vmatpush2.bf16.msra.mxu0 %v3788
    %5511 = vmatprep.subr.bf16.mxu0 %v3771
    %5512 = vmatpush2.bf16.msra.mxu0 %v3770
    %5513 = vmatprep.mubr.bf16.mxu0 %v67
    %5514 = vmatmul.mubr.bf16.gmra.mxu0 %v66
    %v5515 = vpop.f32.mrf.mxu0
    %v5516 = vadd.f32 %v953, %v5515
    %v5517 = vpop.f32.mrf.mxu0
    %v5518 = vadd.f32 %v957, %v5517
    %v5519 = vpop.f32.mrf.mxu0
    %v5520 = vadd.f32 %v953, %v5519
    %v5521 = vpop.f32.mrf.mxu0
    %v5522 = vadd.f32 %v957, %v5521
    %5523 = vdwg.mxu0
    %5524 = vmatprep.subr.bf16.mxu0 %v4041
    %5525 = vmatpush1.bf16.msra.mxu0 %v4040
    %5526 = vmatprep.subr.bf16.mxu0 %v4023
    %5527 = vmatpush1.bf16.msra.mxu0 %v4022
    %5528 = vmatprep.subr.bf16.mxu0 %v4005
    %5529 = vmatpush1.bf16.msra.mxu0 %v4004
    %5530 = vmatprep.subr.bf16.mxu0 %v3987
    %5531 = vmatpush1.bf16.msra.mxu0 %v3986
    %5532 = vmatprep.subr.bf16.mxu0 %v3969
    %5533 = vmatpush1.bf16.msra.mxu0 %v3968
    %5534 = vmatprep.subr.bf16.mxu0 %v3951
    %5535 = vmatpush1.bf16.msra.mxu0 %v3950
    %5536 = vmatprep.subr.bf16.mxu0 %v3933
    %5537 = vmatpush1.bf16.msra.mxu0 %v3932
    %5538 = vmatprep.subr.bf16.mxu0 %v3915
    %5539 = vmatpush1.bf16.msra.mxu0 %v3914
    %5540 = vmatprep.subr.bf16.mxu0 %v4185
    %5541 = vmatpush2.bf16.msra.mxu0 %v4184
    %5542 = vmatprep.subr.bf16.mxu0 %v4167
    %5543 = vmatpush2.bf16.msra.mxu0 %v4166
    %5544 = vmatprep.subr.bf16.mxu0 %v4149
    %5545 = vmatpush2.bf16.msra.mxu0 %v4148
    %5546 = vmatprep.subr.bf16.mxu0 %v4131
    %5547 = vmatpush2.bf16.msra.mxu0 %v4130
    %5548 = vmatprep.subr.bf16.mxu0 %v4113
    %5549 = vmatpush2.bf16.msra.mxu0 %v4112
    %5550 = vmatprep.subr.bf16.mxu0 %v4095
    %5551 = vmatpush2.bf16.msra.mxu0 %v4094
    %5552 = vmatprep.subr.bf16.mxu0 %v4077
    %5553 = vmatpush2.bf16.msra.mxu0 %v4076
    %5554 = vmatprep.subr.bf16.mxu0 %v4059
    %5555 = vmatpush2.bf16.msra.mxu0 %v4058
    %5556 = vmatprep.mubr.bf16.mxu0 %v69
    %5557 = vmatmul.mubr.bf16.gmra.mxu0 %v68
    %v5558 = vpop.f32.mrf.mxu0
    %v5559 = vadd.f32 %v5516, %v5558
    %v5560 = vpop.f32.mrf.mxu0
    %v5561 = vadd.f32 %v5518, %v5560
    %v5562 = vpop.f32.mrf.mxu0
    %v5563 = vadd.f32 %v5520, %v5562
    %v5564 = vpop.f32.mrf.mxu0
    %v5565 = vadd.f32 %v5522, %v5564
    %5566 = vdwg.mxu0
    %5567 = vmatprep.subr.bf16.mxu0 %v4329
    %5568 = vmatpush1.bf16.msra.mxu0 %v4328
    %5569 = vmatprep.subr.bf16.mxu0 %v4311
    %5570 = vmatpush1.bf16.msra.mxu0 %v4310
    %5571 = vmatprep.subr.bf16.mxu0 %v4293
    %5572 = vmatpush1.bf16.msra.mxu0 %v4292
    %5573 = vmatprep.subr.bf16.mxu0 %v4275
    %5574 = vmatpush1.bf16.msra.mxu0 %v4274
    %5575 = vmatprep.subr.bf16.mxu0 %v4257
    %5576 = vmatpush1.bf16.msra.mxu0 %v4256
    %5577 = vmatprep.subr.bf16.mxu0 %v4239
    %5578 = vmatpush1.bf16.msra.mxu0 %v4238
    %5579 = vmatprep.subr.bf16.mxu0 %v4221
    %5580 = vmatpush1.bf16.msra.mxu0 %v4220
    %5581 = vmatprep.subr.bf16.mxu0 %v4203
    %5582 = vmatpush1.bf16.msra.mxu0 %v4202
    %5583 = vmatprep.subr.bf16.mxu0 %v4473
    %5584 = vmatpush2.bf16.msra.mxu0 %v4472
    %5585 = vmatprep.subr.bf16.mxu0 %v4455
    %5586 = vmatpush2.bf16.msra.mxu0 %v4454
    %5587 = vmatprep.subr.bf16.mxu0 %v4437
    %5588 = vmatpush2.bf16.msra.mxu0 %v4436
    %5589 = vmatprep.subr.bf16.mxu0 %v4419
    %5590 = vmatpush2.bf16.msra.mxu0 %v4418
    %5591 = vmatprep.subr.bf16.mxu0 %v4401
    %5592 = vmatpush2.bf16.msra.mxu0 %v4400
    %5593 = vmatprep.subr.bf16.mxu0 %v4383
    %5594 = vmatpush2.bf16.msra.mxu0 %v4382
    %5595 = vmatprep.subr.bf16.mxu0 %v4365
    %5596 = vmatpush2.bf16.msra.mxu0 %v4364
    %5597 = vmatprep.subr.bf16.mxu0 %v4347
    %5598 = vmatpush2.bf16.msra.mxu0 %v4346
    %5599 = vmatprep.mubr.bf16.mxu0 %v71
    %5600 = vmatmul.mubr.bf16.gmra.mxu0 %v70
    %v5601 = vpop.f32.mrf.mxu0
    %v5602 = vadd.f32 %v5559, %v5601
    %v5603 = vpop.f32.mrf.mxu0
    %v5604 = vadd.f32 %v5561, %v5603
    %v5605 = vpop.f32.mrf.mxu0
    %v5606 = vadd.f32 %v5563, %v5605
    %v5607 = vpop.f32.mrf.mxu0
    %v5608 = vadd.f32 %v5565, %v5607
    %5609 = vdwg.mxu0
    %5610 = vmatprep.subr.bf16.mxu0 %v3755
    %5611 = vmatpush1.bf16.msra.mxu0 %v3754
    %5612 = vmatprep.subr.bf16.mxu0 %v3737
    %5613 = vmatpush1.bf16.msra.mxu0 %v3736
    %5614 = vmatprep.subr.bf16.mxu0 %v3719
    %5615 = vmatpush1.bf16.msra.mxu0 %v3718
    %5616 = vmatprep.subr.bf16.mxu0 %v3701
    %5617 = vmatpush1.bf16.msra.mxu0 %v3700
    %5618 = vmatprep.subr.bf16.mxu0 %v3683
    %5619 = vmatpush1.bf16.msra.mxu0 %v3682
    %5620 = vmatprep.subr.bf16.mxu0 %v3665
    %5621 = vmatpush1.bf16.msra.mxu0 %v3664
    %5622 = vmatprep.subr.bf16.mxu0 %v3647
    %5623 = vmatpush1.bf16.msra.mxu0 %v3646
    %5624 = vmatprep.subr.bf16.mxu0 %v3629
    %5625 = vmatpush1.bf16.msra.mxu0 %v3628
    %5626 = vmatprep.subr.bf16.mxu0 %v3899
    %5627 = vmatpush2.bf16.msra.mxu0 %v3898
    %5628 = vmatprep.subr.bf16.mxu0 %v3881
    %5629 = vmatpush2.bf16.msra.mxu0 %v3880
    %5630 = vmatprep.subr.bf16.mxu0 %v3863
    %5631 = vmatpush2.bf16.msra.mxu0 %v3862
    %5632 = vmatprep.subr.bf16.mxu0 %v3845
    %5633 = vmatpush2.bf16.msra.mxu0 %v3844
    %5634 = vmatprep.subr.bf16.mxu0 %v3827
    %5635 = vmatpush2.bf16.msra.mxu0 %v3826
    %5636 = vmatprep.subr.bf16.mxu0 %v3809
    %5637 = vmatpush2.bf16.msra.mxu0 %v3808
    %5638 = vmatprep.subr.bf16.mxu0 %v3791
    %5639 = vmatpush2.bf16.msra.mxu0 %v3790
    %5640 = vmatprep.subr.bf16.mxu0 %v3773
    %5641 = vmatpush2.bf16.msra.mxu0 %v3772
    %5642 = vmatprep.mubr.bf16.mxu0 %v67
    %5643 = vmatmul.mubr.bf16.gmra.mxu0 %v66
    %v5644 = vpop.f32.mrf.mxu0
    %v5645 = vadd.f32 %v961, %v5644
    %v5646 = vpop.f32.mrf.mxu0
    %v5647 = vadd.f32 %v965, %v5646
    %v5648 = vpop.f32.mrf.mxu0
    %v5649 = vadd.f32 %v961, %v5648
    %v5650 = vpop.f32.mrf.mxu0
    %v5651 = vadd.f32 %v965, %v5650
    %5652 = vdwg.mxu0
    %5653 = vmatprep.subr.bf16.mxu0 %v4043
    %5654 = vmatpush1.bf16.msra.mxu0 %v4042
    %5655 = vmatprep.subr.bf16.mxu0 %v4025
    %5656 = vmatpush1.bf16.msra.mxu0 %v4024
    %5657 = vmatprep.subr.bf16.mxu0 %v4007
    %5658 = vmatpush1.bf16.msra.mxu0 %v4006
    %5659 = vmatprep.subr.bf16.mxu0 %v3989
    %5660 = vmatpush1.bf16.msra.mxu0 %v3988
    %5661 = vmatprep.subr.bf16.mxu0 %v3971
    %5662 = vmatpush1.bf16.msra.mxu0 %v3970
    %5663 = vmatprep.subr.bf16.mxu0 %v3953
    %5664 = vmatpush1.bf16.msra.mxu0 %v3952
    %5665 = vmatprep.subr.bf16.mxu0 %v3935
    %5666 = vmatpush1.bf16.msra.mxu0 %v3934
    %5667 = vmatprep.subr.bf16.mxu0 %v3917
    %5668 = vmatpush1.bf16.msra.mxu0 %v3916
    %5669 = vmatprep.subr.bf16.mxu0 %v4187
    %5670 = vmatpush2.bf16.msra.mxu0 %v4186
    %5671 = vmatprep.subr.bf16.mxu0 %v4169
    %5672 = vmatpush2.bf16.msra.mxu0 %v4168
    %5673 = vmatprep.subr.bf16.mxu0 %v4151
    %5674 = vmatpush2.bf16.msra.mxu0 %v4150
    %5675 = vmatprep.subr.bf16.mxu0 %v4133
    %5676 = vmatpush2.bf16.msra.mxu0 %v4132
    %5677 = vmatprep.subr.bf16.mxu0 %v4115
    %5678 = vmatpush2.bf16.msra.mxu0 %v4114
    %5679 = vmatprep.subr.bf16.mxu0 %v4097
    %5680 = vmatpush2.bf16.msra.mxu0 %v4096
    %5681 = vmatprep.subr.bf16.mxu0 %v4079
    %5682 = vmatpush2.bf16.msra.mxu0 %v4078
    %5683 = vmatprep.subr.bf16.mxu0 %v4061
    %5684 = vmatpush2.bf16.msra.mxu0 %v4060
    %5685 = vmatprep.mubr.bf16.mxu0 %v69
    %5686 = vmatmul.mubr.bf16.gmra.mxu0 %v68
    %v5687 = vpop.f32.mrf.mxu0
    %v5688 = vadd.f32 %v5645, %v5687
    %v5689 = vpop.f32.mrf.mxu0
    %v5690 = vadd.f32 %v5647, %v5689
    %v5691 = vpop.f32.mrf.mxu0
    %v5692 = vadd.f32 %v5649, %v5691
    %v5693 = vpop.f32.mrf.mxu0
    %v5694 = vadd.f32 %v5651, %v5693
    %5695 = vdwg.mxu0
    %5696 = vmatprep.subr.bf16.mxu0 %v4331
    %5697 = vmatpush1.bf16.msra.mxu0 %v4330
    %5698 = vmatprep.subr.bf16.mxu0 %v4313
    %5699 = vmatpush1.bf16.msra.mxu0 %v4312
    %5700 = vmatprep.subr.bf16.mxu0 %v4295
    %5701 = vmatpush1.bf16.msra.mxu0 %v4294
    %5702 = vmatprep.subr.bf16.mxu0 %v4277
    %5703 = vmatpush1.bf16.msra.mxu0 %v4276
    %5704 = vmatprep.subr.bf16.mxu0 %v4259
    %5705 = vmatpush1.bf16.msra.mxu0 %v4258
    %5706 = vmatprep.subr.bf16.mxu0 %v4241
    %5707 = vmatpush1.bf16.msra.mxu0 %v4240
    %5708 = vmatprep.subr.bf16.mxu0 %v4223
    %5709 = vmatpush1.bf16.msra.mxu0 %v4222
    %5710 = vmatprep.subr.bf16.mxu0 %v4205
    %5711 = vmatpush1.bf16.msra.mxu0 %v4204
    %5712 = vmatprep.subr.bf16.mxu0 %v4475
    %5713 = vmatpush2.bf16.msra.mxu0 %v4474
    %5714 = vmatprep.subr.bf16.mxu0 %v4457
    %5715 = vmatpush2.bf16.msra.mxu0 %v4456
    %5716 = vmatprep.subr.bf16.mxu0 %v4439
    %5717 = vmatpush2.bf16.msra.mxu0 %v4438
    %5718 = vmatprep.subr.bf16.mxu0 %v4421
    %5719 = vmatpush2.bf16.msra.mxu0 %v4420
    %5720 = vmatprep.subr.bf16.mxu0 %v4403
    %5721 = vmatpush2.bf16.msra.mxu0 %v4402
    %5722 = vmatprep.subr.bf16.mxu0 %v4385
    %5723 = vmatpush2.bf16.msra.mxu0 %v4384
    %5724 = vmatprep.subr.bf16.mxu0 %v4367
    %5725 = vmatpush2.bf16.msra.mxu0 %v4366
    %5726 = vmatprep.subr.bf16.mxu0 %v4349
    %5727 = vmatpush2.bf16.msra.mxu0 %v4348
    %5728 = vmatprep.mubr.bf16.mxu0 %v71
    %5729 = vmatmul.mubr.bf16.gmra.mxu0 %v70
    %v5730 = vpop.f32.mrf.mxu0
    %v5731 = vadd.f32 %v5688, %v5730
    %v5732 = vpop.f32.mrf.mxu0
    %v5733 = vadd.f32 %v5690, %v5732
    %v5734 = vpop.f32.mrf.mxu0
    %v5735 = vadd.f32 %v5692, %v5734
    %v5736 = vpop.f32.mrf.mxu0
    %v5737 = vadd.f32 %v5694, %v5736
    %5738 = vdwg.mxu0
    %5739 = vmatprep.subr.bf16.mxu0 %v3757
    %5740 = vmatpush1.bf16.msra.mxu0 %v3756
    %5741 = vmatprep.subr.bf16.mxu0 %v3739
    %5742 = vmatpush1.bf16.msra.mxu0 %v3738
    %5743 = vmatprep.subr.bf16.mxu0 %v3721
    %5744 = vmatpush1.bf16.msra.mxu0 %v3720
    %5745 = vmatprep.subr.bf16.mxu0 %v3703
    %5746 = vmatpush1.bf16.msra.mxu0 %v3702
    %5747 = vmatprep.subr.bf16.mxu0 %v3685
    %5748 = vmatpush1.bf16.msra.mxu0 %v3684
    %5749 = vmatprep.subr.bf16.mxu0 %v3667
    %5750 = vmatpush1.bf16.msra.mxu0 %v3666
    %5751 = vmatprep.subr.bf16.mxu0 %v3649
    %5752 = vmatpush1.bf16.msra.mxu0 %v3648
    %5753 = vmatprep.subr.bf16.mxu0 %v3631
    %5754 = vmatpush1.bf16.msra.mxu0 %v3630
    %5755 = vmatprep.subr.bf16.mxu0 %v3901
    %5756 = vmatpush2.bf16.msra.mxu0 %v3900
    %5757 = vmatprep.subr.bf16.mxu0 %v3883
    %5758 = vmatpush2.bf16.msra.mxu0 %v3882
    %5759 = vmatprep.subr.bf16.mxu0 %v3865
    %5760 = vmatpush2.bf16.msra.mxu0 %v3864
    %5761 = vmatprep.subr.bf16.mxu0 %v3847
    %5762 = vmatpush2.bf16.msra.mxu0 %v3846
    %5763 = vmatprep.subr.bf16.mxu0 %v3829
    %5764 = vmatpush2.bf16.msra.mxu0 %v3828
    %5765 = vmatprep.subr.bf16.mxu0 %v3811
    %5766 = vmatpush2.bf16.msra.mxu0 %v3810
    %5767 = vmatprep.subr.bf16.mxu0 %v3793
    %5768 = vmatpush2.bf16.msra.mxu0 %v3792
    %5769 = vmatprep.subr.bf16.mxu0 %v3775
    %5770 = vmatpush2.bf16.msra.mxu0 %v3774
    %5771 = vmatprep.mubr.bf16.mxu0 %v67
    %5772 = vmatmul.mubr.bf16.gmra.mxu0 %v66
    %v5773 = vpop.f32.mrf.mxu0
    %v5774 = vadd.f32 %v969, %v5773
    %v5775 = vpop.f32.mrf.mxu0
    %v5776 = vadd.f32 %v973, %v5775
    %v5777 = vpop.f32.mrf.mxu0
    %v5778 = vadd.f32 %v969, %v5777
    %v5779 = vpop.f32.mrf.mxu0
    %v5780 = vadd.f32 %v973, %v5779
    %5781 = vdwg.mxu0
    %5782 = vmatprep.subr.bf16.mxu0 %v4045
    %5783 = vmatpush1.bf16.msra.mxu0 %v4044
    %5784 = vmatprep.subr.bf16.mxu0 %v4027
    %5785 = vmatpush1.bf16.msra.mxu0 %v4026
    %5786 = vmatprep.subr.bf16.mxu0 %v4009
    %5787 = vmatpush1.bf16.msra.mxu0 %v4008
    %5788 = vmatprep.subr.bf16.mxu0 %v3991
    %5789 = vmatpush1.bf16.msra.mxu0 %v3990
    %5790 = vmatprep.subr.bf16.mxu0 %v3973
    %5791 = vmatpush1.bf16.msra.mxu0 %v3972
    %5792 = vmatprep.subr.bf16.mxu0 %v3955
    %5793 = vmatpush1.bf16.msra.mxu0 %v3954
    %5794 = vmatprep.subr.bf16.mxu0 %v3937
    %5795 = vmatpush1.bf16.msra.mxu0 %v3936
    %5796 = vmatprep.subr.bf16.mxu0 %v3919
    %5797 = vmatpush1.bf16.msra.mxu0 %v3918
    %5798 = vmatprep.subr.bf16.mxu0 %v4189
    %5799 = vmatpush2.bf16.msra.mxu0 %v4188
    %5800 = vmatprep.subr.bf16.mxu0 %v4171
    %5801 = vmatpush2.bf16.msra.mxu0 %v4170
    %5802 = vmatprep.subr.bf16.mxu0 %v4153
    %5803 = vmatpush2.bf16.msra.mxu0 %v4152
    %5804 = vmatprep.subr.bf16.mxu0 %v4135
    %5805 = vmatpush2.bf16.msra.mxu0 %v4134
    %5806 = vmatprep.subr.bf16.mxu0 %v4117
    %5807 = vmatpush2.bf16.msra.mxu0 %v4116
    %5808 = vmatprep.subr.bf16.mxu0 %v4099
    %5809 = vmatpush2.bf16.msra.mxu0 %v4098
    %5810 = vmatprep.subr.bf16.mxu0 %v4081
    %5811 = vmatpush2.bf16.msra.mxu0 %v4080
    %5812 = vmatprep.subr.bf16.mxu0 %v4063
    %5813 = vmatpush2.bf16.msra.mxu0 %v4062
    %5814 = vmatprep.mubr.bf16.mxu0 %v69
    %5815 = vmatmul.mubr.bf16.gmra.mxu0 %v68
    %v5816 = vpop.f32.mrf.mxu0
    %v5817 = vadd.f32 %v5774, %v5816
    %v5818 = vpop.f32.mrf.mxu0
    %v5819 = vadd.f32 %v5776, %v5818
    %v5820 = vpop.f32.mrf.mxu0
    %v5821 = vadd.f32 %v5778, %v5820
    %v5822 = vpop.f32.mrf.mxu0
    %v5823 = vadd.f32 %v5780, %v5822
    %5824 = vdwg.mxu0
    %5825 = vmatprep.subr.bf16.mxu0 %v4333
    %5826 = vmatpush1.bf16.msra.mxu0 %v4332
    %5827 = vmatprep.subr.bf16.mxu0 %v4315
    %5828 = vmatpush1.bf16.msra.mxu0 %v4314
    %5829 = vmatprep.subr.bf16.mxu0 %v4297
    %5830 = vmatpush1.bf16.msra.mxu0 %v4296
    %5831 = vmatprep.subr.bf16.mxu0 %v4279
    %5832 = vmatpush1.bf16.msra.mxu0 %v4278
    %5833 = vmatprep.subr.bf16.mxu0 %v4261
    %5834 = vmatpush1.bf16.msra.mxu0 %v4260
    %5835 = vmatprep.subr.bf16.mxu0 %v4243
    %5836 = vmatpush1.bf16.msra.mxu0 %v4242
    %5837 = vmatprep.subr.bf16.mxu0 %v4225
    %5838 = vmatpush1.bf16.msra.mxu0 %v4224
    %5839 = vmatprep.subr.bf16.mxu0 %v4207
    %5840 = vmatpush1.bf16.msra.mxu0 %v4206
    %5841 = vmatprep.subr.bf16.mxu0 %v4477
    %5842 = vmatpush2.bf16.msra.mxu0 %v4476
    %5843 = vmatprep.subr.bf16.mxu0 %v4459
    %5844 = vmatpush2.bf16.msra.mxu0 %v4458
    %5845 = vmatprep.subr.bf16.mxu0 %v4441
    %5846 = vmatpush2.bf16.msra.mxu0 %v4440
    %5847 = vmatprep.subr.bf16.mxu0 %v4423
    %5848 = vmatpush2.bf16.msra.mxu0 %v4422
    %5849 = vmatprep.subr.bf16.mxu0 %v4405
    %5850 = vmatpush2.bf16.msra.mxu0 %v4404
    %5851 = vmatprep.subr.bf16.mxu0 %v4387
    %5852 = vmatpush2.bf16.msra.mxu0 %v4386
    %5853 = vmatprep.subr.bf16.mxu0 %v4369
    %5854 = vmatpush2.bf16.msra.mxu0 %v4368
    %5855 = vmatprep.subr.bf16.mxu0 %v4351
    %5856 = vmatpush2.bf16.msra.mxu0 %v4350
    %5857 = vmatprep.mubr.bf16.mxu0 %v71
    %5858 = vmatmul.mubr.bf16.gmra.mxu0 %v70
    %v5859 = vpop.f32.mrf.mxu0
    %v5860 = vadd.f32 %v5817, %v5859
    %v5861 = vpop.f32.mrf.mxu0
    %v5862 = vadd.f32 %v5819, %v5861
    %v5863 = vpop.f32.mrf.mxu0
    %v5864 = vadd.f32 %v5821, %v5863
    %v5865 = vpop.f32.mrf.mxu0
    %v5866 = vadd.f32 %v5823, %v5865
    %5867 = vdwg.mxu0
    %5868 = vmatprep.subr.bf16.mxu0 %v3759
    %5869 = vmatpush1.bf16.msra.mxu0 %v3758
    %5870 = vmatprep.subr.bf16.mxu0 %v3741
    %5871 = vmatpush1.bf16.msra.mxu0 %v3740
    %5872 = vmatprep.subr.bf16.mxu0 %v3723
    %5873 = vmatpush1.bf16.msra.mxu0 %v3722
    %5874 = vmatprep.subr.bf16.mxu0 %v3705
    %5875 = vmatpush1.bf16.msra.mxu0 %v3704
    %5876 = vmatprep.subr.bf16.mxu0 %v3687
    %5877 = vmatpush1.bf16.msra.mxu0 %v3686
    %5878 = vmatprep.subr.bf16.mxu0 %v3669
    %5879 = vmatpush1.bf16.msra.mxu0 %v3668
    %5880 = vmatprep.subr.bf16.mxu0 %v3651
    %5881 = vmatpush1.bf16.msra.mxu0 %v3650
    %5882 = vmatprep.subr.bf16.mxu0 %v3633
    %5883 = vmatpush1.bf16.msra.mxu0 %v3632
    %5884 = vmatprep.subr.bf16.mxu0 %v3903
    %5885 = vmatpush2.bf16.msra.mxu0 %v3902
    %5886 = vmatprep.subr.bf16.mxu0 %v3885
    %5887 = vmatpush2.bf16.msra.mxu0 %v3884
    %5888 = vmatprep.subr.bf16.mxu0 %v3867
    %5889 = vmatpush2.bf16.msra.mxu0 %v3866
    %5890 = vmatprep.subr.bf16.mxu0 %v3849
    %5891 = vmatpush2.bf16.msra.mxu0 %v3848
    %5892 = vmatprep.subr.bf16.mxu0 %v3831
    %5893 = vmatpush2.bf16.msra.mxu0 %v3830
    %5894 = vmatprep.subr.bf16.mxu0 %v3813
    %5895 = vmatpush2.bf16.msra.mxu0 %v3812
    %5896 = vmatprep.subr.bf16.mxu0 %v3795
    %5897 = vmatpush2.bf16.msra.mxu0 %v3794
    %5898 = vmatprep.subr.bf16.mxu0 %v3777
    %5899 = vmatpush2.bf16.msra.mxu0 %v3776
    %5900 = vmatprep.mubr.bf16.mxu0 %v67
    %5901 = vmatmul.mubr.bf16.gmra.mxu0 %v66
    %v5902 = vpop.f32.mrf.mxu0
    %v5903 = vadd.f32 %v977, %v5902
    %v5904 = vpop.f32.mrf.mxu0
    %v5905 = vadd.f32 %v981, %v5904
    %v5906 = vpop.f32.mrf.mxu0
    %v5907 = vadd.f32 %v977, %v5906
    %v5908 = vpop.f32.mrf.mxu0
    %v5909 = vadd.f32 %v981, %v5908
    %5910 = vdwg.mxu0
    %5911 = vmatprep.subr.bf16.mxu0 %v4047
    %5912 = vmatpush1.bf16.msra.mxu0 %v4046
    %5913 = vmatprep.subr.bf16.mxu0 %v4029
    %5914 = vmatpush1.bf16.msra.mxu0 %v4028
    %5915 = vmatprep.subr.bf16.mxu0 %v4011
    %5916 = vmatpush1.bf16.msra.mxu0 %v4010
    %5917 = vmatprep.subr.bf16.mxu0 %v3993
    %5918 = vmatpush1.bf16.msra.mxu0 %v3992
    %5919 = vmatprep.subr.bf16.mxu0 %v3975
    %5920 = vmatpush1.bf16.msra.mxu0 %v3974
    %5921 = vmatprep.subr.bf16.mxu0 %v3957
    %5922 = vmatpush1.bf16.msra.mxu0 %v3956
    %5923 = vmatprep.subr.bf16.mxu0 %v3939
    %5924 = vmatpush1.bf16.msra.mxu0 %v3938
    %5925 = vmatprep.subr.bf16.mxu0 %v3921
    %5926 = vmatpush1.bf16.msra.mxu0 %v3920
    %5927 = vmatprep.subr.bf16.mxu0 %v4191
    %5928 = vmatpush2.bf16.msra.mxu0 %v4190
    %5929 = vmatprep.subr.bf16.mxu0 %v4173
    %5930 = vmatpush2.bf16.msra.mxu0 %v4172
    %5931 = vmatprep.subr.bf16.mxu0 %v4155
    %5932 = vmatpush2.bf16.msra.mxu0 %v4154
    %5933 = vmatprep.subr.bf16.mxu0 %v4137
    %5934 = vmatpush2.bf16.msra.mxu0 %v4136
    %5935 = vmatprep.subr.bf16.mxu0 %v4119
    %5936 = vmatpush2.bf16.msra.mxu0 %v4118
    %5937 = vmatprep.subr.bf16.mxu0 %v4101
    %5938 = vmatpush2.bf16.msra.mxu0 %v4100
    %5939 = vmatprep.subr.bf16.mxu0 %v4083
    %5940 = vmatpush2.bf16.msra.mxu0 %v4082
    %5941 = vmatprep.subr.bf16.mxu0 %v4065
    %5942 = vmatpush2.bf16.msra.mxu0 %v4064
    %5943 = vmatprep.mubr.bf16.mxu0 %v69
    %5944 = vmatmul.mubr.bf16.gmra.mxu0 %v68
    %v5945 = vpop.f32.mrf.mxu0
    %v5946 = vadd.f32 %v5903, %v5945
    %v5947 = vpop.f32.mrf.mxu0
    %v5948 = vadd.f32 %v5905, %v5947
    %v5949 = vpop.f32.mrf.mxu0
    %v5950 = vadd.f32 %v5907, %v5949
    %v5951 = vpop.f32.mrf.mxu0
    %v5952 = vadd.f32 %v5909, %v5951
    %5953 = vdwg.mxu0
    %5954 = vmatprep.subr.bf16.mxu0 %v4335
    %5955 = vmatpush1.bf16.msra.mxu0 %v4334
    %5956 = vmatprep.subr.bf16.mxu0 %v4317
    %5957 = vmatpush1.bf16.msra.mxu0 %v4316
    %5958 = vmatprep.subr.bf16.mxu0 %v4299
    %5959 = vmatpush1.bf16.msra.mxu0 %v4298
    %5960 = vmatprep.subr.bf16.mxu0 %v4281
    %5961 = vmatpush1.bf16.msra.mxu0 %v4280
    %5962 = vmatprep.subr.bf16.mxu0 %v4263
    %5963 = vmatpush1.bf16.msra.mxu0 %v4262
    %5964 = vmatprep.subr.bf16.mxu0 %v4245
    %5965 = vmatpush1.bf16.msra.mxu0 %v4244
    %5966 = vmatprep.subr.bf16.mxu0 %v4227
    %5967 = vmatpush1.bf16.msra.mxu0 %v4226
    %5968 = vmatprep.subr.bf16.mxu0 %v4209
    %5969 = vmatpush1.bf16.msra.mxu0 %v4208
    %5970 = vmatprep.subr.bf16.mxu0 %v4479
    %5971 = vmatpush2.bf16.msra.mxu0 %v4478
    %5972 = vmatprep.subr.bf16.mxu0 %v4461
    %5973 = vmatpush2.bf16.msra.mxu0 %v4460
    %5974 = vmatprep.subr.bf16.mxu0 %v4443
    %5975 = vmatpush2.bf16.msra.mxu0 %v4442
    %5976 = vmatprep.subr.bf16.mxu0 %v4425
    %5977 = vmatpush2.bf16.msra.mxu0 %v4424
    %5978 = vmatprep.subr.bf16.mxu0 %v4407
    %5979 = vmatpush2.bf16.msra.mxu0 %v4406
    %5980 = vmatprep.subr.bf16.mxu0 %v4389
    %5981 = vmatpush2.bf16.msra.mxu0 %v4388
    %5982 = vmatprep.subr.bf16.mxu0 %v4371
    %5983 = vmatpush2.bf16.msra.mxu0 %v4370
    %5984 = vmatprep.subr.bf16.mxu0 %v4353
    %5985 = vmatpush2.bf16.msra.mxu0 %v4352
    %5986 = vmatprep.mubr.bf16.mxu0 %v71
    %5987 = vmatmul.mubr.bf16.gmra.mxu0 %v70
    %v5988 = vpop.f32.mrf.mxu0
    %v5989 = vadd.f32 %v5946, %v5988
    %v5990 = vpop.f32.mrf.mxu0
    %v5991 = vadd.f32 %v5948, %v5990
    %v5992 = vpop.f32.mrf.mxu0
    %v5993 = vadd.f32 %v5950, %v5992
    %v5994 = vpop.f32.mrf.mxu0
    %v5995 = vadd.f32 %v5952, %v5994
    %5996 = vdwg.mxu0
    %5997 = vmatprep.subr.bf16.mxu0 %v3761
    %5998 = vmatpush1.bf16.msra.mxu0 %v3760
    %5999 = vmatprep.subr.bf16.mxu0 %v3743
    %6000 = vmatpush1.bf16.msra.mxu0 %v3742
    %6001 = vmatprep.subr.bf16.mxu0 %v3725
    %6002 = vmatpush1.bf16.msra.mxu0 %v3724
    %6003 = vmatprep.subr.bf16.mxu0 %v3707
    %6004 = vmatpush1.bf16.msra.mxu0 %v3706
    %6005 = vmatprep.subr.bf16.mxu0 %v3689
    %6006 = vmatpush1.bf16.msra.mxu0 %v3688
    %6007 = vmatprep.subr.bf16.mxu0 %v3671
    %6008 = vmatpush1.bf16.msra.mxu0 %v3670
    %6009 = vmatprep.subr.bf16.mxu0 %v3653
    %6010 = vmatpush1.bf16.msra.mxu0 %v3652
    %6011 = vmatprep.subr.bf16.mxu0 %v3635
    %6012 = vmatpush1.bf16.msra.mxu0 %v3634
    %6013 = vmatprep.subr.bf16.mxu0 %v3905
    %6014 = vmatpush2.bf16.msra.mxu0 %v3904
    %6015 = vmatprep.subr.bf16.mxu0 %v3887
    %6016 = vmatpush2.bf16.msra.mxu0 %v3886
    %6017 = vmatprep.subr.bf16.mxu0 %v3869
    %6018 = vmatpush2.bf16.msra.mxu0 %v3868
    %6019 = vmatprep.subr.bf16.mxu0 %v3851
    %6020 = vmatpush2.bf16.msra.mxu0 %v3850
    %6021 = vmatprep.subr.bf16.mxu0 %v3833
    %6022 = vmatpush2.bf16.msra.mxu0 %v3832
    %6023 = vmatprep.subr.bf16.mxu0 %v3815
    %6024 = vmatpush2.bf16.msra.mxu0 %v3814
    %6025 = vmatprep.subr.bf16.mxu0 %v3797
    %6026 = vmatpush2.bf16.msra.mxu0 %v3796
    %6027 = vmatprep.subr.bf16.mxu0 %v3779
    %6028 = vmatpush2.bf16.msra.mxu0 %v3778
    %6029 = vmatprep.mubr.bf16.mxu0 %v67
    %6030 = vmatmul.mubr.bf16.gmra.mxu0 %v66
    %v6031 = vpop.f32.mrf.mxu0
    %v6032 = vadd.f32 %v985, %v6031
    %v6033 = vpop.f32.mrf.mxu0
    %v6034 = vadd.f32 %v989, %v6033
    %v6035 = vpop.f32.mrf.mxu0
    %v6036 = vadd.f32 %v985, %v6035
    %v6037 = vpop.f32.mrf.mxu0
    %v6038 = vadd.f32 %v989, %v6037
    %6039 = vdwg.mxu0
    %6040 = vmatprep.subr.bf16.mxu0 %v4049
    %6041 = vmatpush1.bf16.msra.mxu0 %v4048
    %6042 = vmatprep.subr.bf16.mxu0 %v4031
    %6043 = vmatpush1.bf16.msra.mxu0 %v4030
    %6044 = vmatprep.subr.bf16.mxu0 %v4013
    %6045 = vmatpush1.bf16.msra.mxu0 %v4012
    %6046 = vmatprep.subr.bf16.mxu0 %v3995
    %6047 = vmatpush1.bf16.msra.mxu0 %v3994
    %6048 = vmatprep.subr.bf16.mxu0 %v3977
    %6049 = vmatpush1.bf16.msra.mxu0 %v3976
    %6050 = vmatprep.subr.bf16.mxu0 %v3959
    %6051 = vmatpush1.bf16.msra.mxu0 %v3958
    %6052 = vmatprep.subr.bf16.mxu0 %v3941
    %6053 = vmatpush1.bf16.msra.mxu0 %v3940
    %6054 = vmatprep.subr.bf16.mxu0 %v3923
    %6055 = vmatpush1.bf16.msra.mxu0 %v3922
    %6056 = vmatprep.subr.bf16.mxu0 %v4193
    %6057 = vmatpush2.bf16.msra.mxu0 %v4192
    %6058 = vmatprep.subr.bf16.mxu0 %v4175
    %6059 = vmatpush2.bf16.msra.mxu0 %v4174
    %6060 = vmatprep.subr.bf16.mxu0 %v4157
    %6061 = vmatpush2.bf16.msra.mxu0 %v4156
    %6062 = vmatprep.subr.bf16.mxu0 %v4139
    %6063 = vmatpush2.bf16.msra.mxu0 %v4138
    %6064 = vmatprep.subr.bf16.mxu0 %v4121
    %6065 = vmatpush2.bf16.msra.mxu0 %v4120
    %6066 = vmatprep.subr.bf16.mxu0 %v4103
    %6067 = vmatpush2.bf16.msra.mxu0 %v4102
    %6068 = vmatprep.subr.bf16.mxu0 %v4085
    %6069 = vmatpush2.bf16.msra.mxu0 %v4084
    %6070 = vmatprep.subr.bf16.mxu0 %v4067
    %6071 = vmatpush2.bf16.msra.mxu0 %v4066
    %6072 = vmatprep.mubr.bf16.mxu0 %v69
    %6073 = vmatmul.mubr.bf16.gmra.mxu0 %v68
    %v6074 = vpop.f32.mrf.mxu0
    %v6075 = vadd.f32 %v6032, %v6074
    %v6076 = vpop.f32.mrf.mxu0
    %v6077 = vadd.f32 %v6034, %v6076
    %v6078 = vpop.f32.mrf.mxu0
    %v6079 = vadd.f32 %v6036, %v6078
    %v6080 = vpop.f32.mrf.mxu0
    %v6081 = vadd.f32 %v6038, %v6080
    %6082 = vdwg.mxu0
    %6083 = vmatprep.subr.bf16.mxu0 %v4337
    %6084 = vmatpush1.bf16.msra.mxu0 %v4336
    %6085 = vmatprep.subr.bf16.mxu0 %v4319
    %6086 = vmatpush1.bf16.msra.mxu0 %v4318
    %6087 = vmatprep.subr.bf16.mxu0 %v4301
    %6088 = vmatpush1.bf16.msra.mxu0 %v4300
    %6089 = vmatprep.subr.bf16.mxu0 %v4283
    %6090 = vmatpush1.bf16.msra.mxu0 %v4282
    %6091 = vmatprep.subr.bf16.mxu0 %v4265
    %6092 = vmatpush1.bf16.msra.mxu0 %v4264
    %6093 = vmatprep.subr.bf16.mxu0 %v4247
    %6094 = vmatpush1.bf16.msra.mxu0 %v4246
    %6095 = vmatprep.subr.bf16.mxu0 %v4229
    %6096 = vmatpush1.bf16.msra.mxu0 %v4228
    %6097 = vmatprep.subr.bf16.mxu0 %v4211
    %6098 = vmatpush1.bf16.msra.mxu0 %v4210
    %6099 = vmatprep.subr.bf16.mxu0 %v4481
    %6100 = vmatpush2.bf16.msra.mxu0 %v4480
    %6101 = vmatprep.subr.bf16.mxu0 %v4463
    %6102 = vmatpush2.bf16.msra.mxu0 %v4462
    %6103 = vmatprep.subr.bf16.mxu0 %v4445
    %6104 = vmatpush2.bf16.msra.mxu0 %v4444
    %6105 = vmatprep.subr.bf16.mxu0 %v4427
    %6106 = vmatpush2.bf16.msra.mxu0 %v4426
    %6107 = vmatprep.subr.bf16.mxu0 %v4409
    %6108 = vmatpush2.bf16.msra.mxu0 %v4408
    %6109 = vmatprep.subr.bf16.mxu0 %v4391
    %6110 = vmatpush2.bf16.msra.mxu0 %v4390
    %6111 = vmatprep.subr.bf16.mxu0 %v4373
    %6112 = vmatpush2.bf16.msra.mxu0 %v4372
    %6113 = vmatprep.subr.bf16.mxu0 %v4355
    %6114 = vmatpush2.bf16.msra.mxu0 %v4354
    %6115 = vmatprep.mubr.bf16.mxu0 %v71
    %6116 = vmatmul.mubr.bf16.gmra.mxu0 %v70
    %v6117 = vpop.f32.mrf.mxu0
    %v6118 = vadd.f32 %v6075, %v6117
    %v6119 = vpop.f32.mrf.mxu0
    %v6120 = vadd.f32 %v6077, %v6119
    %v6121 = vpop.f32.mrf.mxu0
    %v6122 = vadd.f32 %v6079, %v6121
    %v6123 = vpop.f32.mrf.mxu0
    %v6124 = vadd.f32 %v6081, %v6123
    %6125 = vdwg.mxu0
    %6126 = vmatprep.subr.bf16.mxu0 %v3763
    %6127 = vmatpush1.bf16.msra.mxu0 %v3762
    %6128 = vmatprep.subr.bf16.mxu0 %v3745
    %6129 = vmatpush1.bf16.msra.mxu0 %v3744
    %6130 = vmatprep.subr.bf16.mxu0 %v3727
    %6131 = vmatpush1.bf16.msra.mxu0 %v3726
    %6132 = vmatprep.subr.bf16.mxu0 %v3709
    %6133 = vmatpush1.bf16.msra.mxu0 %v3708
    %6134 = vmatprep.subr.bf16.mxu0 %v3691
    %6135 = vmatpush1.bf16.msra.mxu0 %v3690
    %6136 = vmatprep.subr.bf16.mxu0 %v3673
    %6137 = vmatpush1.bf16.msra.mxu0 %v3672
    %6138 = vmatprep.subr.bf16.mxu0 %v3655
    %6139 = vmatpush1.bf16.msra.mxu0 %v3654
    %6140 = vmatprep.subr.bf16.mxu0 %v3637
    %6141 = vmatpush1.bf16.msra.mxu0 %v3636
    %6142 = vmatprep.subr.bf16.mxu0 %v3907
    %6143 = vmatpush2.bf16.msra.mxu0 %v3906
    %6144 = vmatprep.subr.bf16.mxu0 %v3889
    %6145 = vmatpush2.bf16.msra.mxu0 %v3888
    %6146 = vmatprep.subr.bf16.mxu0 %v3871
    %6147 = vmatpush2.bf16.msra.mxu0 %v3870
    %6148 = vmatprep.subr.bf16.mxu0 %v3853
    %6149 = vmatpush2.bf16.msra.mxu0 %v3852
    %6150 = vmatprep.subr.bf16.mxu0 %v3835
    %6151 = vmatpush2.bf16.msra.mxu0 %v3834
    %6152 = vmatprep.subr.bf16.mxu0 %v3817
    %6153 = vmatpush2.bf16.msra.mxu0 %v3816
    %6154 = vmatprep.subr.bf16.mxu0 %v3799
    %6155 = vmatpush2.bf16.msra.mxu0 %v3798
    %6156 = vmatprep.subr.bf16.mxu0 %v3781
    %6157 = vmatpush2.bf16.msra.mxu0 %v3780
    %6158 = vmatprep.mubr.bf16.mxu0 %v67
    %6159 = vmatmul.mubr.bf16.gmra.mxu0 %v66
    %v6160 = vpop.f32.mrf.mxu0
    %v6161 = vadd.f32 %v993, %v6160
    %v6162 = vpop.f32.mrf.mxu0
    %v6163 = vadd.f32 %v997, %v6162
    %v6164 = vpop.f32.mrf.mxu0
    %v6165 = vadd.f32 %v993, %v6164
    %v6166 = vpop.f32.mrf.mxu0
    %v6167 = vadd.f32 %v997, %v6166
    %6168 = vdwg.mxu0
    %6169 = vmatprep.subr.bf16.mxu0 %v4051
    %6170 = vmatpush1.bf16.msra.mxu0 %v4050
    %6171 = vmatprep.subr.bf16.mxu0 %v4033
    %6172 = vmatpush1.bf16.msra.mxu0 %v4032
    %6173 = vmatprep.subr.bf16.mxu0 %v4015
    %6174 = vmatpush1.bf16.msra.mxu0 %v4014
    %6175 = vmatprep.subr.bf16.mxu0 %v3997
    %6176 = vmatpush1.bf16.msra.mxu0 %v3996
    %6177 = vmatprep.subr.bf16.mxu0 %v3979
    %6178 = vmatpush1.bf16.msra.mxu0 %v3978
    %6179 = vmatprep.subr.bf16.mxu0 %v3961
    %6180 = vmatpush1.bf16.msra.mxu0 %v3960
    %6181 = vmatprep.subr.bf16.mxu0 %v3943
    %6182 = vmatpush1.bf16.msra.mxu0 %v3942
    %6183 = vmatprep.subr.bf16.mxu0 %v3925
    %6184 = vmatpush1.bf16.msra.mxu0 %v3924
    %6185 = vmatprep.subr.bf16.mxu0 %v4195
    %6186 = vmatpush2.bf16.msra.mxu0 %v4194
    %6187 = vmatprep.subr.bf16.mxu0 %v4177
    %6188 = vmatpush2.bf16.msra.mxu0 %v4176
    %6189 = vmatprep.subr.bf16.mxu0 %v4159
    %6190 = vmatpush2.bf16.msra.mxu0 %v4158
    %6191 = vmatprep.subr.bf16.mxu0 %v4141
    %6192 = vmatpush2.bf16.msra.mxu0 %v4140
    %6193 = vmatprep.subr.bf16.mxu0 %v4123
    %6194 = vmatpush2.bf16.msra.mxu0 %v4122
    %6195 = vmatprep.subr.bf16.mxu0 %v4105
    %6196 = vmatpush2.bf16.msra.mxu0 %v4104
    %6197 = vmatprep.subr.bf16.mxu0 %v4087
    %6198 = vmatpush2.bf16.msra.mxu0 %v4086
    %6199 = vmatprep.subr.bf16.mxu0 %v4069
    %6200 = vmatpush2.bf16.msra.mxu0 %v4068
    %6201 = vmatprep.mubr.bf16.mxu0 %v69
    %6202 = vmatmul.mubr.bf16.gmra.mxu0 %v68
    %v6203 = vpop.f32.mrf.mxu0
    %v6204 = vadd.f32 %v6161, %v6203
    %v6205 = vpop.f32.mrf.mxu0
    %v6206 = vadd.f32 %v6163, %v6205
    %v6207 = vpop.f32.mrf.mxu0
    %v6208 = vadd.f32 %v6165, %v6207
    %v6209 = vpop.f32.mrf.mxu0
    %v6210 = vadd.f32 %v6167, %v6209
    %6211 = vdwg.mxu0
    %6212 = vmatprep.subr.bf16.mxu0 %v4339
    %6213 = vmatpush1.bf16.msra.mxu0 %v4338
    %6214 = vmatprep.subr.bf16.mxu0 %v4321
    %6215 = vmatpush1.bf16.msra.mxu0 %v4320
    %6216 = vmatprep.subr.bf16.mxu0 %v4303
    %6217 = vmatpush1.bf16.msra.mxu0 %v4302
    %6218 = vmatprep.subr.bf16.mxu0 %v4285
    %6219 = vmatpush1.bf16.msra.mxu0 %v4284
    %6220 = vmatprep.subr.bf16.mxu0 %v4267
    %6221 = vmatpush1.bf16.msra.mxu0 %v4266
    %6222 = vmatprep.subr.bf16.mxu0 %v4249
    %6223 = vmatpush1.bf16.msra.mxu0 %v4248
    %6224 = vmatprep.subr.bf16.mxu0 %v4231
    %6225 = vmatpush1.bf16.msra.mxu0 %v4230
    %6226 = vmatprep.subr.bf16.mxu0 %v4213
    %6227 = vmatpush1.bf16.msra.mxu0 %v4212
    %6228 = vmatprep.subr.bf16.mxu0 %v4483
    %6229 = vmatpush2.bf16.msra.mxu0 %v4482
    %6230 = vmatprep.subr.bf16.mxu0 %v4465
    %6231 = vmatpush2.bf16.msra.mxu0 %v4464
    %6232 = vmatprep.subr.bf16.mxu0 %v4447
    %6233 = vmatpush2.bf16.msra.mxu0 %v4446
    %6234 = vmatprep.subr.bf16.mxu0 %v4429
    %6235 = vmatpush2.bf16.msra.mxu0 %v4428
    %6236 = vmatprep.subr.bf16.mxu0 %v4411
    %6237 = vmatpush2.bf16.msra.mxu0 %v4410
    %6238 = vmatprep.subr.bf16.mxu0 %v4393
    %6239 = vmatpush2.bf16.msra.mxu0 %v4392
    %6240 = vmatprep.subr.bf16.mxu0 %v4375
    %6241 = vmatpush2.bf16.msra.mxu0 %v4374
    %6242 = vmatprep.subr.bf16.mxu0 %v4357
    %6243 = vmatpush2.bf16.msra.mxu0 %v4356
    %6244 = vmatprep.mubr.bf16.mxu0 %v71
    %6245 = vmatmul.mubr.bf16.gmra.mxu0 %v70
    %v6246 = vpop.f32.mrf.mxu0
    %v6247 = vadd.f32 %v6204, %v6246
    %v6248 = vpop.f32.mrf.mxu0
    %v6249 = vadd.f32 %v6206, %v6248
    %v6250 = vpop.f32.mrf.mxu0
    %v6251 = vadd.f32 %v6208, %v6250
    %v6252 = vpop.f32.mrf.mxu0
    %v6253 = vadd.f32 %v6210, %v6252
    %6254 = vdwg.mxu0
    %6255 = vmatprep.subr.bf16.mxu0 %v3765
    %6256 = vmatpush1.bf16.msra.mxu0 %v3764
    %6257 = vmatprep.subr.bf16.mxu0 %v3747
    %6258 = vmatpush1.bf16.msra.mxu0 %v3746
    %6259 = vmatprep.subr.bf16.mxu0 %v3729
    %6260 = vmatpush1.bf16.msra.mxu0 %v3728
    %6261 = vmatprep.subr.bf16.mxu0 %v3711
    %6262 = vmatpush1.bf16.msra.mxu0 %v3710
    %6263 = vmatprep.subr.bf16.mxu0 %v3693
    %6264 = vmatpush1.bf16.msra.mxu0 %v3692
    %6265 = vmatprep.subr.bf16.mxu0 %v3675
    %6266 = vmatpush1.bf16.msra.mxu0 %v3674
    %6267 = vmatprep.subr.bf16.mxu0 %v3657
    %6268 = vmatpush1.bf16.msra.mxu0 %v3656
    %6269 = vmatprep.subr.bf16.mxu0 %v3639
    %6270 = vmatpush1.bf16.msra.mxu0 %v3638
    %6271 = vmatprep.subr.bf16.mxu0 %v3909
    %6272 = vmatpush2.bf16.msra.mxu0 %v3908
    %6273 = vmatprep.subr.bf16.mxu0 %v3891
    %6274 = vmatpush2.bf16.msra.mxu0 %v3890
    %6275 = vmatprep.subr.bf16.mxu0 %v3873
    %6276 = vmatpush2.bf16.msra.mxu0 %v3872
    %6277 = vmatprep.subr.bf16.mxu0 %v3855
    %6278 = vmatpush2.bf16.msra.mxu0 %v3854
    %6279 = vmatprep.subr.bf16.mxu0 %v3837
    %6280 = vmatpush2.bf16.msra.mxu0 %v3836
    %6281 = vmatprep.subr.bf16.mxu0 %v3819
    %6282 = vmatpush2.bf16.msra.mxu0 %v3818
    %6283 = vmatprep.subr.bf16.mxu0 %v3801
    %6284 = vmatpush2.bf16.msra.mxu0 %v3800
    %6285 = vmatprep.subr.bf16.mxu0 %v3783
    %6286 = vmatpush2.bf16.msra.mxu0 %v3782
    %6287 = vmatprep.mubr.bf16.mxu0 %v67
    %6288 = vmatmul.mubr.bf16.gmra.mxu0 %v66
    %v6289 = vpop.f32.mrf.mxu0
    %v6290 = vadd.f32 %v1001, %v6289
    %v6291 = vpop.f32.mrf.mxu0
    %v6292 = vadd.f32 %v1005, %v6291
    %v6293 = vpop.f32.mrf.mxu0
    %v6294 = vadd.f32 %v1001, %v6293
    %v6295 = vpop.f32.mrf.mxu0
    %v6296 = vadd.f32 %v1005, %v6295
    %6297 = vdwg.mxu0
    %6298 = vmatprep.subr.bf16.mxu0 %v4053
    %6299 = vmatpush1.bf16.msra.mxu0 %v4052
    %6300 = vmatprep.subr.bf16.mxu0 %v4035
    %6301 = vmatpush1.bf16.msra.mxu0 %v4034
    %6302 = vmatprep.subr.bf16.mxu0 %v4017
    %6303 = vmatpush1.bf16.msra.mxu0 %v4016
    %6304 = vmatprep.subr.bf16.mxu0 %v3999
    %6305 = vmatpush1.bf16.msra.mxu0 %v3998
    %6306 = vmatprep.subr.bf16.mxu0 %v3981
    %6307 = vmatpush1.bf16.msra.mxu0 %v3980
    %6308 = vmatprep.subr.bf16.mxu0 %v3963
    %6309 = vmatpush1.bf16.msra.mxu0 %v3962
    %6310 = vmatprep.subr.bf16.mxu0 %v3945
    %6311 = vmatpush1.bf16.msra.mxu0 %v3944
    %6312 = vmatprep.subr.bf16.mxu0 %v3927
    %6313 = vmatpush1.bf16.msra.mxu0 %v3926
    %6314 = vmatprep.subr.bf16.mxu0 %v4197
    %6315 = vmatpush2.bf16.msra.mxu0 %v4196
    %6316 = vmatprep.subr.bf16.mxu0 %v4179
    %6317 = vmatpush2.bf16.msra.mxu0 %v4178
    %6318 = vmatprep.subr.bf16.mxu0 %v4161
    %6319 = vmatpush2.bf16.msra.mxu0 %v4160
    %6320 = vmatprep.subr.bf16.mxu0 %v4143
    %6321 = vmatpush2.bf16.msra.mxu0 %v4142
    %6322 = vmatprep.subr.bf16.mxu0 %v4125
    %6323 = vmatpush2.bf16.msra.mxu0 %v4124
    %6324 = vmatprep.subr.bf16.mxu0 %v4107
    %6325 = vmatpush2.bf16.msra.mxu0 %v4106
    %6326 = vmatprep.subr.bf16.mxu0 %v4089
    %6327 = vmatpush2.bf16.msra.mxu0 %v4088
    %6328 = vmatprep.subr.bf16.mxu0 %v4071
    %6329 = vmatpush2.bf16.msra.mxu0 %v4070
    %6330 = vmatprep.mubr.bf16.mxu0 %v69
    %6331 = vmatmul.mubr.bf16.gmra.mxu0 %v68
    %v6332 = vpop.f32.mrf.mxu0
    %v6333 = vadd.f32 %v6290, %v6332
    %v6334 = vpop.f32.mrf.mxu0
    %v6335 = vadd.f32 %v6292, %v6334
    %v6336 = vpop.f32.mrf.mxu0
    %v6337 = vadd.f32 %v6294, %v6336
    %v6338 = vpop.f32.mrf.mxu0
    %v6339 = vadd.f32 %v6296, %v6338
    %6340 = vdwg.mxu0
    %6341 = vmatprep.subr.bf16.mxu0 %v4341
    %6342 = vmatpush1.bf16.msra.mxu0 %v4340
    %6343 = vmatprep.subr.bf16.mxu0 %v4323
    %6344 = vmatpush1.bf16.msra.mxu0 %v4322
    %6345 = vmatprep.subr.bf16.mxu0 %v4305
    %6346 = vmatpush1.bf16.msra.mxu0 %v4304
    %6347 = vmatprep.subr.bf16.mxu0 %v4287
    %6348 = vmatpush1.bf16.msra.mxu0 %v4286
    %6349 = vmatprep.subr.bf16.mxu0 %v4269
    %6350 = vmatpush1.bf16.msra.mxu0 %v4268
    %6351 = vmatprep.subr.bf16.mxu0 %v4251
    %6352 = vmatpush1.bf16.msra.mxu0 %v4250
    %6353 = vmatprep.subr.bf16.mxu0 %v4233
    %6354 = vmatpush1.bf16.msra.mxu0 %v4232
    %6355 = vmatprep.subr.bf16.mxu0 %v4215
    %6356 = vmatpush1.bf16.msra.mxu0 %v4214
    %6357 = vmatprep.subr.bf16.mxu0 %v4485
    %6358 = vmatpush2.bf16.msra.mxu0 %v4484
    %6359 = vmatprep.subr.bf16.mxu0 %v4467
    %6360 = vmatpush2.bf16.msra.mxu0 %v4466
    %6361 = vmatprep.subr.bf16.mxu0 %v4449
    %6362 = vmatpush2.bf16.msra.mxu0 %v4448
    %6363 = vmatprep.subr.bf16.mxu0 %v4431
    %6364 = vmatpush2.bf16.msra.mxu0 %v4430
    %6365 = vmatprep.subr.bf16.mxu0 %v4413
    %6366 = vmatpush2.bf16.msra.mxu0 %v4412
    %6367 = vmatprep.subr.bf16.mxu0 %v4395
    %6368 = vmatpush2.bf16.msra.mxu0 %v4394
    %6369 = vmatprep.subr.bf16.mxu0 %v4377
    %6370 = vmatpush2.bf16.msra.mxu0 %v4376
    %6371 = vmatprep.subr.bf16.mxu0 %v4359
    %6372 = vmatpush2.bf16.msra.mxu0 %v4358
    %6373 = vmatprep.mubr.bf16.mxu0 %v71
    %6374 = vmatmul.mubr.bf16.gmra.mxu0 %v70
    %v6375 = vpop.f32.mrf.mxu0
    %v6376 = vadd.f32 %v6333, %v6375
    %v6377 = vpop.f32.mrf.mxu0
    %v6378 = vadd.f32 %v6335, %v6377
    %v6379 = vpop.f32.mrf.mxu0
    %v6380 = vadd.f32 %v6337, %v6379
    %v6381 = vpop.f32.mrf.mxu0
    %v6382 = vadd.f32 %v6339, %v6381
    %6383 = vdwg.mxu0
    %6384 = vmatprep.subr.bf16.mxu0 %v3767
    %6385 = vmatpush1.bf16.msra.mxu0 %v3766
    %6386 = vmatprep.subr.bf16.mxu0 %v3749
    %6387 = vmatpush1.bf16.msra.mxu0 %v3748
    %6388 = vmatprep.subr.bf16.mxu0 %v3731
    %6389 = vmatpush1.bf16.msra.mxu0 %v3730
    %6390 = vmatprep.subr.bf16.mxu0 %v3713
    %6391 = vmatpush1.bf16.msra.mxu0 %v3712
    %6392 = vmatprep.subr.bf16.mxu0 %v3695
    %6393 = vmatpush1.bf16.msra.mxu0 %v3694
    %6394 = vmatprep.subr.bf16.mxu0 %v3677
    %6395 = vmatpush1.bf16.msra.mxu0 %v3676
    %6396 = vmatprep.subr.bf16.mxu0 %v3659
    %6397 = vmatpush1.bf16.msra.mxu0 %v3658
    %6398 = vmatprep.subr.bf16.mxu0 %v3641
    %6399 = vmatpush1.bf16.msra.mxu0 %v3640
    %6400 = vmatprep.subr.bf16.mxu0 %v3911
    %6401 = vmatpush2.bf16.msra.mxu0 %v3910
    %6402 = vmatprep.subr.bf16.mxu0 %v3893
    %6403 = vmatpush2.bf16.msra.mxu0 %v3892
    %6404 = vmatprep.subr.bf16.mxu0 %v3875
    %6405 = vmatpush2.bf16.msra.mxu0 %v3874
    %6406 = vmatprep.subr.bf16.mxu0 %v3857
    %6407 = vmatpush2.bf16.msra.mxu0 %v3856
    %6408 = vmatprep.subr.bf16.mxu0 %v3839
    %6409 = vmatpush2.bf16.msra.mxu0 %v3838
    %6410 = vmatprep.subr.bf16.mxu0 %v3821
    %6411 = vmatpush2.bf16.msra.mxu0 %v3820
    %6412 = vmatprep.subr.bf16.mxu0 %v3803
    %6413 = vmatpush2.bf16.msra.mxu0 %v3802
    %6414 = vmatprep.subr.bf16.mxu0 %v3785
    %6415 = vmatpush2.bf16.msra.mxu0 %v3784
    %6416 = vmatprep.mubr.bf16.mxu0 %v67
    %6417 = vmatmul.mubr.bf16.gmra.mxu0 %v66
    %v6418 = vpop.f32.mrf.mxu0
    %v6419 = vadd.f32 %v1009, %v6418
    %v6420 = vpop.f32.mrf.mxu0
    %v6421 = vadd.f32 %v1013, %v6420
    %v6422 = vpop.f32.mrf.mxu0
    %v6423 = vadd.f32 %v1009, %v6422
    %v6424 = vpop.f32.mrf.mxu0
    %v6425 = vadd.f32 %v1013, %v6424
    %6426 = vdwg.mxu0
    %6427 = vmatprep.subr.bf16.mxu0 %v4055
    %6428 = vmatpush1.bf16.msra.mxu0 %v4054
    %6429 = vmatprep.subr.bf16.mxu0 %v4037
    %6430 = vmatpush1.bf16.msra.mxu0 %v4036
    %6431 = vmatprep.subr.bf16.mxu0 %v4019
    %6432 = vmatpush1.bf16.msra.mxu0 %v4018
    %6433 = vmatprep.subr.bf16.mxu0 %v4001
    %6434 = vmatpush1.bf16.msra.mxu0 %v4000
    %6435 = vmatprep.subr.bf16.mxu0 %v3983
    %6436 = vmatpush1.bf16.msra.mxu0 %v3982
    %6437 = vmatprep.subr.bf16.mxu0 %v3965
    %6438 = vmatpush1.bf16.msra.mxu0 %v3964
    %6439 = vmatprep.subr.bf16.mxu0 %v3947
    %6440 = vmatpush1.bf16.msra.mxu0 %v3946
    %6441 = vmatprep.subr.bf16.mxu0 %v3929
    %6442 = vmatpush1.bf16.msra.mxu0 %v3928
    %6443 = vmatprep.subr.bf16.mxu0 %v4199
    %6444 = vmatpush2.bf16.msra.mxu0 %v4198
    %6445 = vmatprep.subr.bf16.mxu0 %v4181
    %6446 = vmatpush2.bf16.msra.mxu0 %v4180
    %6447 = vmatprep.subr.bf16.mxu0 %v4163
    %6448 = vmatpush2.bf16.msra.mxu0 %v4162
    %6449 = vmatprep.subr.bf16.mxu0 %v4145
    %6450 = vmatpush2.bf16.msra.mxu0 %v4144
    %6451 = vmatprep.subr.bf16.mxu0 %v4127
    %6452 = vmatpush2.bf16.msra.mxu0 %v4126
    %6453 = vmatprep.subr.bf16.mxu0 %v4109
    %6454 = vmatpush2.bf16.msra.mxu0 %v4108
    %6455 = vmatprep.subr.bf16.mxu0 %v4091
    %6456 = vmatpush2.bf16.msra.mxu0 %v4090
    %6457 = vmatprep.subr.bf16.mxu0 %v4073
    %6458 = vmatpush2.bf16.msra.mxu0 %v4072
    %6459 = vmatprep.mubr.bf16.mxu0 %v69
    %6460 = vmatmul.mubr.bf16.gmra.mxu0 %v68
    %v6461 = vpop.f32.mrf.mxu0
    %v6462 = vadd.f32 %v6419, %v6461
    %v6463 = vpop.f32.mrf.mxu0
    %v6464 = vadd.f32 %v6421, %v6463
    %v6465 = vpop.f32.mrf.mxu0
    %v6466 = vadd.f32 %v6423, %v6465
    %v6467 = vpop.f32.mrf.mxu0
    %v6468 = vadd.f32 %v6425, %v6467
    %6469 = vdwg.mxu0
    %6470 = vmatprep.subr.bf16.mxu0 %v4343
    %6471 = vmatpush1.bf16.msra.mxu0 %v4342
    %6472 = vmatprep.subr.bf16.mxu0 %v4325
    %6473 = vmatpush1.bf16.msra.mxu0 %v4324
    %6474 = vmatprep.subr.bf16.mxu0 %v4307
    %6475 = vmatpush1.bf16.msra.mxu0 %v4306
    %6476 = vmatprep.subr.bf16.mxu0 %v4289
    %6477 = vmatpush1.bf16.msra.mxu0 %v4288
    %6478 = vmatprep.subr.bf16.mxu0 %v4271
    %6479 = vmatpush1.bf16.msra.mxu0 %v4270
    %6480 = vmatprep.subr.bf16.mxu0 %v4253
    %6481 = vmatpush1.bf16.msra.mxu0 %v4252
    %6482 = vmatprep.subr.bf16.mxu0 %v4235
    %6483 = vmatpush1.bf16.msra.mxu0 %v4234
    %6484 = vmatprep.subr.bf16.mxu0 %v4217
    %6485 = vmatpush1.bf16.msra.mxu0 %v4216
    %6486 = vmatprep.subr.bf16.mxu0 %v4487
    %6487 = vmatpush2.bf16.msra.mxu0 %v4486
    %6488 = vmatprep.subr.bf16.mxu0 %v4469
    %6489 = vmatpush2.bf16.msra.mxu0 %v4468
    %6490 = vmatprep.subr.bf16.mxu0 %v4451
    %6491 = vmatpush2.bf16.msra.mxu0 %v4450
    %6492 = vmatprep.subr.bf16.mxu0 %v4433
    %6493 = vmatpush2.bf16.msra.mxu0 %v4432
    %6494 = vmatprep.subr.bf16.mxu0 %v4415
    %6495 = vmatpush2.bf16.msra.mxu0 %v4414
    %6496 = vmatprep.subr.bf16.mxu0 %v4397
    %6497 = vmatpush2.bf16.msra.mxu0 %v4396
    %6498 = vmatprep.subr.bf16.mxu0 %v4379
    %6499 = vmatpush2.bf16.msra.mxu0 %v4378
    %6500 = vmatprep.subr.bf16.mxu0 %v4361
    %6501 = vmatpush2.bf16.msra.mxu0 %v4360
    %6502 = vmatprep.mubr.bf16.mxu0 %v71
    %6503 = vmatmul.mubr.bf16.gmra.mxu0 %v70
    %v6504 = vpop.f32.mrf.mxu0
    %v6505 = vadd.f32 %v6462, %v6504
    %v6506 = vpop.f32.mrf.mxu0
    %v6507 = vadd.f32 %v6464, %v6506
    %v6508 = vpop.f32.mrf.mxu0
    %v6509 = vadd.f32 %v6466, %v6508
    %v6510 = vpop.f32.mrf.mxu0
    %v6511 = vadd.f32 %v6468, %v6510
    %6512 = vdwg.mxu0
    %6513 = vst [vmem:[#allocation8] sm:$0xff] %v5473
    %6514 = vst [vmem:[#allocation8 + $0x8] sm:$0xff] %v5475
    %6515 = vst [vmem:[#allocation8 + $0x10] sm:$0xff] %v5602
    %6516 = vst [vmem:[#allocation8 + $0x18] sm:$0xff] %v5604
    %6517 = vst [vmem:[#allocation8 + $0x20] sm:$0xff] %v5731
    %6518 = vst [vmem:[#allocation8 + $0x28] sm:$0xff] %v5733
    %6519 = vst [vmem:[#allocation8 + $0x30] sm:$0xff] %v5860
    %6520 = vst [vmem:[#allocation8 + $0x38] sm:$0xff] %v5862
    %6521 = vst [vmem:[#allocation8 + $0x40] sm:$0xff] %v5989
    %6522 = vst [vmem:[#allocation8 + $0x48] sm:$0xff] %v5991
    %6523 = vst [vmem:[#allocation8 + $0x50] sm:$0xff] %v6118
    %6524 = vst [vmem:[#allocation8 + $0x58] sm:$0xff] %v6120
    %6525 = vst [vmem:[#allocation8 + $0x60] sm:$0xff] %v6247
    %6526 = vst [vmem:[#allocation8 + $0x68] sm:$0xff] %v6249
    %6527 = vst [vmem:[#allocation8 + $0x70] sm:$0xff] %v6376
    %6528 = vst [vmem:[#allocation8 + $0x78] sm:$0xff] %v6378
    %6529 = vst [vmem:[#allocation8 + $0x80] sm:$0xff] %v6505
    %6530 = vst [vmem:[#allocation8 + $0x88] sm:$0xff] %v6507
    %6531 = vst [vmem:[#allocation8 + $0x90] sm:$0xff] %v5477
    %6532 = vst [vmem:[#allocation8 + $0x98] sm:$0xff] %v5479
    %6533 = vst [vmem:[#allocation8 + $0xa0] sm:$0xff] %v5606
    %6534 = vst [vmem:[#allocation8 + $0xa8] sm:$0xff] %v5608
    %6535 = vst [vmem:[#allocation8 + $0xb0] sm:$0xff] %v5735
    %6536 = vst [vmem:[#allocation8 + $0xb8] sm:$0xff] %v5737
    %6537 = vst [vmem:[#allocation8 + $0xc0] sm:$0xff] %v5864
    %6538 = vst [vmem:[#allocation8 + $0xc8] sm:$0xff] %v5866
    %6539 = vst [vmem:[#allocation8 + $0xd0] sm:$0xff] %v5993
    %6540 = vst [vmem:[#allocation8 + $0xd8] sm:$0xff] %v5995
    %6541 = vst [vmem:[#allocation8 + $0xe0] sm:$0xff] %v6122
    %6542 = vst [vmem:[#allocation8 + $0xe8] sm:$0xff] %v6124
    %6543 = vst [vmem:[#allocation8 + $0xf0] sm:$0xff] %v6251
    %6544 = vst [vmem:[#allocation8 + $0xf8] sm:$0xff] %v6253
    %6545 = vst [vmem:[#allocation8 + $0x100] sm:$0xff] %v6380
    %6546 = vst [vmem:[#allocation8 + $0x108] sm:$0xff] %v6382
    %6547 = vst [vmem:[#allocation8 + $0x110] sm:$0xff] %v6509
    %6548 = vst [vmem:[#allocation8 + $0x118] sm:$0xff] %v6511
    // Predicated region
    $region26: #{tpu_custom_call.1} parent=1 // pred_check
      _
    $region27: #{tpu_custom_call.1} parent=1 // pred_check_branch
      %6550 = sbr.rel (0) target = $region29
    $region28: #{tpu_custom_call.1} parent=1 // pred_region
      %s6552 = ssub.s32 4608, 4608
      %6553 = vsyncadd [#allocation4], %s6552
      %s6554 = sshll.u32 [#allocation8], 4
      %s6555 = int_to_ptr.vmem [resolvable:$true] %s6554
      %6560 = dma.vmem_to_hbm [thread:$0]  %s6555, 4608, %s3, [#allocation4], 2304, 2304, 144
    $region29: #{tpu_custom_call.1} parent=1 // pred_fallthru
      _
    // Predicated region
    $region30: #{tpu_custom_call.1} parent=1 // pred_check
      _
    $region31: #{tpu_custom_call.1} parent=1 // pred_check_branch
      %6562 = sbr.rel (0) target = $region33
    $region32: #{tpu_custom_call.1} parent=1 // pred_region
      %6563 = dma.done [#allocation4], 4608
    $region33: #{tpu_custom_call.1} parent=1 // pred_fallthru
      _
    %6564 = vsyncpa [#allocation3], 1
    %6565 = vsyncpa [#allocation6], 1
    %6566 = vsyncpa [#allocation4], 1

</llo_original>
